<compile_context>
chip_gen: v7x
topology: tpu7x:2x2x1
jax: 0.10.0
libtpu: 0.0.40
codegen_flags: <defaults>
</compile_context>

<pallas_src>
import functools
import math

import jax
import jax.numpy as jnp
from jax.experimental import pallas as pl
from jax.experimental.pallas import tpu as pltpu


def _round_up(x, m):
    return ((x + m - 1) // m) * m


def _stack_cnn_kernel(*refs, n_layers, kernel_size, padding, dims, compute_dtype):
    """Fused StackCNN forward for one batch tile.

    refs = (x_ref, w_0..w_{L-1}, b_0..b_{L-1}, o_ref, pad_0..pad_{L-1})

      x_ref  : (TN, L0, Cin0)         unpadded input activations (NLC)
      w_l    : (K, Cin_l, Cout_l)     per-tap weights (VMEM resident); last
                                      layer's Cout is lane-padded to 128k
      b_l    : (1, Cout_l) f32        biases (last layer lane-padded)
      o_ref  : (TN, Cout_pad)         pooled output block (lane dense)
      pad_l  : (TN, Lin_l+2p, Cin_l)  zero-halo activation scratch, layer l
    """
    x_ref = refs[0]
    w_refs = refs[1:1 + n_layers]
    b_refs = refs[1 + n_layers:1 + 2 * n_layers]
    o_ref = refs[1 + 2 * n_layers]
    pad_refs = refs[2 + 2 * n_layers:]

    K = kernel_size
    p = padding
    tn = x_ref.shape[0]

    if p > 0:
        # Zero only the 2*p halo rows of every layer's scratch (interiors are
        # fully overwritten below), then drop the input into layer 0's
        # interior.  Kept per grid step for megacore-safety (see header note).
        for l in range(n_layers):
            cin_l, lin_l = dims[l][0], dims[l][1]
            z = jnp.zeros((tn, p, cin_l), pad_refs[l].dtype)
            pad_refs[l][:, 0:p, :] = z
            pad_refs[l][:, p + lin_l:lin_l + 2 * p, :] = z
        pad_refs[0][:, p:p + dims[0][1], :] = x_ref[...].astype(compute_dtype)
        h_val = None
    else:
        h_val = x_ref[...].astype(compute_dtype)

    for l in range(n_layers):
        cin, lin, lout, _ = dims[l]
        cout = b_refs[l].shape[-1]             # lane-padded on the last layer
        bias = b_refs[l][...]                  # (1, cout) f32

        # K accumulated MXU dots against per-tap (cin, cout) weight slices.
        # No lane-axis concat / im2col slab; taps are sublane-offset slices.
        acc = None
        for k in range(K):
            if p > 0:
                tap = pad_refs[l][:, k:k + lout, :]
            else:
                tap = h_val[:, k:k + lout, :]
            lhs = tap.reshape(tn * lout, cin).astype(compute_dtype)
            d = jnp.dot(lhs, w_refs[l][k], preferred_element_type=jnp.float32)
            acc = d if acc is None else acc + d
        act = jnp.maximum(acc + bias, 0.0)     # f32 epilogue (v5e-safe)

        if l + 1 < n_layers:
            nxt = act.reshape(tn, lout, cout).astype(compute_dtype)
            if p > 0:
                # Write straight into the next layer's halo-scratch interior:
                # removes one activation store + reload per layer.
                pad_refs[l + 1][:, p:p + lout, :] = nxt
            else:
                h_val = nxt
        else:
            # AdaptiveMaxPool1d(1).squeeze(-1) == max over the length axis.
            o_ref[...] = jnp.max(act.reshape(tn, lout, cout), axis=1).astype(o_ref.dtype)


def _vmem_budget():
    """(tile budget, scoped vmem limit) derived from physical VMEM.
    v5e/v6e (128 MiB) -> (~48, ~96) MiB; v7x (64 MiB) -> (~24, ~48) MiB."""
    try:
        phys = int(pltpu.get_tpu_info().vmem_capacity_bytes)
    except Exception:
        phys = 64 << 20                        # conservative v7x-sized fallback
    return (phys * 3) // 8, (phys * 3) // 4


def _auto_tile_n(N, dims, K, padding, compute_dtype, cout_pad, budget_bytes):
    """Largest batch tile (multiple of 8 dividing N) fitting the VMEM budget.
    Rounds channels up to 128 lanes and rows to the dtype's sublane tile;
    accounts for double-buffered I/O blocks and resident (double-buffered)
    weights.  Keeps >=2 grid steps when the batch allows it (v7x megacore)."""
    cb = jnp.dtype(compute_dtype).itemsize
    sub_tile = 8 * max(1, 4 // cb)             # 8 for f32, 16 for bf16
    lane = lambda c: _round_up(max(c, 1), 128)
    subc = lambda r: _round_up(max(r, 1), sub_tile)
    sub4 = lambda r: _round_up(max(r, 1), 8)

    # Per-batch-row footprint.
    scratch = 0
    if padding > 0:
        for (cin, lin, lout, cout) in dims:
            scratch += subc(lin + 2 * padding) * lane(cin) * cb
    live = 0
    for (cin, lin, lout, cout) in dims:
        live = max(live,
                   subc(lout) * lane(cin) * cb            # one tap lhs
                   + 2 * sub4(lout) * lane(cout) * 4)     # f32 acc + relu copy
    io = (2 * sub4(dims[0][1]) * lane(dims[0][0]) * 4     # dbl-buffered input
          + 2 * lane(cout_pad) * 4)                       # dbl-buffered output
    per_row = scratch + live + io

    # Fixed overhead: resident weights / biases (double-buffered).
    fixed = 0
    for l, (cin, lin, lout, cout) in enumerate(dims):
        co = cout_pad if l == len(dims) - 1 else cout
        fixed += 2 * K * subc(cin) * lane(co) * cb
        fixed += 2 * sub4(1) * lane(co) * 4

    avail = max(budget_bytes - fixed, per_row)
    t = int(max(1, avail // per_row))
    t = min(t, N)

    if N % 8 != 0:
        # Batch block must divide N (or equal it); fall back to one block.
        # TODO(synk): no budget check for this fallback (odd N + huge batch).
        return N
    # Keep >=2 grid steps when possible so both v7x TensorCores get work under
    # dimension_semantics=("parallel",); ~one extra 0.35us step elsewhere.
    if N >= 16 and t > N // 2:
        t = N // 2
    t = max(8, (t // 8) * 8)
    while N % t:
        t -= 8
    return t


def stack_cnn_forward(x_ncl, weights, biases, *, padding,
                      compute_dtype=jnp.bfloat16, tile_n=None):
    """StackCNN.forward.  x_ncl: (N, Cin, L) torch layout -> (N, Cout).

    compute_dtype: MXU input dtype for activations/weights (default bf16 --
    native MXU rate on v5e/v6e/v7x; accumulation and the bias/ReLU/max
    epilogue stay f32).  Pass jnp.float32 for a tight-tolerance path.
    """
    N, cin0, L0 = x_ncl.shape
    n_layers = len(weights)
    K = weights[0].shape[-1]

    # Per-layer (Cin, Lin, Lout, Cout), Conv1d stride=1 arithmetic.
    dims = []
    lin, cin = L0, cin0
    for w in weights:
        cout, wcin, wk = w.shape
        assert wcin == cin and wk == K
        lout = lin + 2 * padding - K + 1
        assert lout >= 1
        dims.append((cin, lin, lout, cout))
        lin, cin = lout, cout
    dims = tuple(dims)
    cout_final = dims[-1][3]
    # Lane-dense output: pad the last layer's Cout to a 128 multiple so the
    # pooled store / HBM DMA is unmasked; padded channels have zero weight and
    # bias -> relu -> max gives exactly 0, sliced off below.
    cout_pad = _round_up(cout_final, 128)

    # NCL -> NLC so channels land on the 128-lane axis.
    x_nlc = jnp.transpose(x_ncl, (0, 2, 1))

    # Per-tap weights: (Cout, Cin, K) -> (K, Cin, Cout); biases (1, Cout) f32.
    w3ds, b2ds = [], []
    for l, (w, b) in enumerate(zip(weights, biases)):
        wt = jnp.transpose(w, (2, 1, 0))
        bt = b.reshape(1, -1).astype(jnp.float32)
        if l == n_layers - 1 and cout_pad != cout_final:
            wt = jnp.pad(wt, ((0, 0), (0, 0), (0, cout_pad - cout_final)))
            bt = jnp.pad(bt, ((0, 0), (0, cout_pad - cout_final)))
        w3ds.append(wt.astype(compute_dtype))
        b2ds.append(bt)

    budget, vmem_limit = _vmem_budget()
    if tile_n is None:
        tile_n = _auto_tile_n(N, dims, K, padding, compute_dtype, cout_pad, budget)
    tile_n = min(tile_n, N)
    assert tile_n == N or (tile_n % 8 == 0 and N % tile_n == 0), \
        f"tile_n={tile_n} must be N or a multiple of 8 dividing N={N}"

    grid = (pl.cdiv(N, tile_n),)

    kernel = functools.partial(
        _stack_cnn_kernel, n_layers=n_layers, kernel_size=K, padding=padding,
        dims=dims, compute_dtype=compute_dtype)

    # Constant index_maps -> weights/biases fetched once, VMEM resident.
    # (They are a few KiB here, so pl.Buffered(1) is intentionally skipped.)
    in_specs = (
        [pl.BlockSpec((tile_n, L0, cin0), lambda i: (i, 0, 0))]
        + [pl.BlockSpec(w.shape, lambda i: (0, 0, 0)) for w in w3ds]
        + [pl.BlockSpec(b.shape, lambda i: (0, 0)) for b in b2ds]
    )
    out_spec = pl.BlockSpec((tile_n, cout_pad), lambda i: (i, 0))

    # One zero-halo scratch per layer (compute dtype); only when padding > 0.
    scratch_shapes = []
    if padding > 0:
        for (c, lin_l, _, _) in dims:
            scratch_shapes.append(
                pltpu.VMEM((tile_n, lin_l + 2 * padding, c), compute_dtype))

    out_padded = pl.pallas_call(
        kernel,
        grid=grid,
        in_specs=in_specs,
        out_specs=out_spec,
        out_shape=jax.ShapeDtypeStruct((N, cout_pad), x_ncl.dtype),
        scratch_shapes=scratch_shapes,
        compiler_params=pltpu.CompilerParams(
            dimension_semantics=("parallel",),       # megacore sharding on v7x
            vmem_limit_bytes=vmem_limit),
    )(x_nlc, *w3ds, *b2ds)

    return out_padded[:, :cout_final]


def init_stack_cnn_params(key, layer_num, in_channels, out_channels, kernel_size):
    """Deterministic init mimicking torch.nn.Conv1d defaults (U(+/- 1/sqrt(fan_in)))."""
    weights, biases = [], []
    cin = in_channels
    for _ in range(layer_num):
        key, kw, kb = jax.random.split(key, 3)
        bound = 1.0 / math.sqrt(cin * kernel_size)
        weights.append(jax.random.uniform(kw, (out_channels, cin, kernel_size),
                                          jnp.float32, -bound, bound))
        biases.append(jax.random.uniform(kb, (out_channels,), jnp.float32,
                                         -bound, bound))
        cin = out_channels
    return weights, biases


def _reference_forward(x_ncl, weights, biases, *, padding):
    """Independent pure-JAX reference (lax conv) for correctness checks."""
    h = x_ncl
    for w, b in zip(weights, biases):
        h = jax.lax.conv_general_dilated(
            h, w, window_strides=(1,), padding=[(padding, padding)],
            dimension_numbers=('NCH', 'OIH', 'NCH'))
        h = jnp.maximum(h + b[None, :, None], 0.0)
    return jnp.max(h, axis=-1)                 # AdaptiveMaxPool1d(1).squeeze(-1)


if __name__ == "__main__":
    # StackCNN(layer_num=3, in_channels=4, out_channels=32, kernel_size=3, padding=1)
    layer_num, in_channels, out_channels, kernel_size, padding = 3, 4, 32, 3, 1
    N, L = 16, 16

    key = jax.random.PRNGKey(0)
    key, kx = jax.random.split(key)
    x = jax.random.normal(kx, (N, in_channels, L), jnp.float32)   # NCL like PyTorch

    weights, biases = init_stack_cnn_params(
        key, layer_num, in_channels, out_channels, kernel_size)

    ref = _reference_forward(x, weights, biases, padding=padding)

    # Default path: bf16 MXU inputs, f32 accumulate + f32 epilogue.
    out = stack_cnn_forward(x, weights, biases, padding=padding)
    out = jax.block_until_ready(out)
    assert out.shape == (N, out_channels), out.shape
    assert jnp.allclose(out, ref, atol=5e-2, rtol=5e-2), \
        float(jnp.max(jnp.abs(out - ref)))

    # f32 path (tight check); tile_n=8 forces a 2-step batch grid and
    # exercises the pipeline + resident-weight index_maps.
    out_f32 = stack_cnn_forward(x, weights, biases, padding=padding,
                                compute_dtype=jnp.float32, tile_n=8)
    out_f32 = jax.block_until_ready(out_f32)
    assert jnp.allclose(out_f32, ref, atol=1e-4, rtol=1e-4), \
        float(jnp.max(jnp.abs(out_f32 - ref)))

    print("KERNEL_OK")
</pallas_src>

<mosaic_0001>
module attributes {stable_mosaic.version = 11 : i64} {
  func.func @_stack_cnn_kernel(%arg0: i32, %arg1: memref<8x16x4xf32, #tpu.memory_space<vmem>>, %arg2: memref<3x4x32xbf16, #tpu.memory_space<vmem>>, %arg3: memref<3x32x32xbf16, #tpu.memory_space<vmem>>, %arg4: memref<3x32x128xbf16, #tpu.memory_space<vmem>>, %arg5: memref<1x32xf32, #tpu.memory_space<vmem>>, %arg6: memref<1x32xf32, #tpu.memory_space<vmem>>, %arg7: memref<1x128xf32, #tpu.memory_space<vmem>>, %arg8: memref<8x128xf32, #tpu.memory_space<vmem>>, %arg9: memref<8x18x4xbf16, #tpu.memory_space<vmem>>, %arg10: memref<8x18x32xbf16, #tpu.memory_space<vmem>>, %arg11: memref<8x18x32xbf16, #tpu.memory_space<vmem>>) attributes {dimension_semantics = [#tpu.dimension_semantics<parallel>], iteration_bounds = array<i64: 2>, scalar_prefetch = 0 : i64, scratch_operands = 3 : i64, tpu.core_type = #tpu.core_type<tc>, window_params = [{transform_indices = @transform_0, window_bounds = array<i64: 8, 16, 4>}, {pipeline_mode = #tpu.pipeline_mode<synchronous>, transform_indices = @transform_1, window_bounds = array<i64: 3, 4, 32>}, {pipeline_mode = #tpu.pipeline_mode<synchronous>, transform_indices = @transform_2, window_bounds = array<i64: 3, 32, 32>}, {pipeline_mode = #tpu.pipeline_mode<synchronous>, transform_indices = @transform_3, window_bounds = array<i64: 3, 32, 128>}, {pipeline_mode = #tpu.pipeline_mode<synchronous>, transform_indices = @transform_4, window_bounds = array<i64: 1, 32>}, {pipeline_mode = #tpu.pipeline_mode<synchronous>, transform_indices = @transform_5, window_bounds = array<i64: 1, 32>}, {pipeline_mode = #tpu.pipeline_mode<synchronous>, transform_indices = @transform_6, window_bounds = array<i64: 1, 128>}, {transform_indices = @transform_7, window_bounds = array<i64: 8, 128>}]} {
    %cst = arith.constant 0.000000e+00 : bf16
    %0 = vector.broadcast %cst : bf16 to vector<8x1x4xbf16>
    %c0 = arith.constant 0 : index
    %c0_0 = arith.constant 0 : index
    %c0_1 = arith.constant 0 : index
    %1 = vector.load %arg9[%c0, %c0_0, %c0_1] : memref<8x18x4xbf16, #tpu.memory_space<vmem>>, vector<8x1x4xbf16>
    tpu.vector_store %arg9[%c0, %c0_0, %c0_1], %0 {strides = array<i32>} : memref<8x18x4xbf16, #tpu.memory_space<vmem>>, vector<8x1x4xbf16>,
    %c0_2 = arith.constant 0 : index
    %c17 = arith.constant 17 : index
    %c0_3 = arith.constant 0 : index
    %2 = vector.load %arg9[%c0_2, %c17, %c0_3] : memref<8x18x4xbf16, #tpu.memory_space<vmem>>, vector<8x1x4xbf16>
    tpu.vector_store %arg9[%c0_2, %c17, %c0_3], %0 {strides = array<i32>} : memref<8x18x4xbf16, #tpu.memory_space<vmem>>, vector<8x1x4xbf16>,
    %cst_4 = arith.constant 0.000000e+00 : bf16
    %3 = vector.broadcast %cst_4 : bf16 to vector<8x1x32xbf16>
    %c0_5 = arith.constant 0 : index
    %c0_6 = arith.constant 0 : index
    %c0_7 = arith.constant 0 : index
    %4 = vector.load %arg10[%c0_5, %c0_6, %c0_7] : memref<8x18x32xbf16, #tpu.memory_space<vmem>>, vector<8x1x32xbf16>
    tpu.vector_store %arg10[%c0_5, %c0_6, %c0_7], %3 {strides = array<i32>} : memref<8x18x32xbf16, #tpu.memory_space<vmem>>, vector<8x1x32xbf16>,
    %c0_8 = arith.constant 0 : index
    %c17_9 = arith.constant 17 : index
    %c0_10 = arith.constant 0 : index
    %5 = vector.load %arg10[%c0_8, %c17_9, %c0_10] : memref<8x18x32xbf16, #tpu.memory_space<vmem>>, vector<8x1x32xbf16>
    tpu.vector_store %arg10[%c0_8, %c17_9, %c0_10], %3 {strides = array<i32>} : memref<8x18x32xbf16, #tpu.memory_space<vmem>>, vector<8x1x32xbf16>,
    %cst_11 = arith.constant 0.000000e+00 : bf16
    %6 = vector.broadcast %cst_11 : bf16 to vector<8x1x32xbf16>
    %c0_12 = arith.constant 0 : index
    %c0_13 = arith.constant 0 : index
    %c0_14 = arith.constant 0 : index
    %7 = vector.load %arg11[%c0_12, %c0_13, %c0_14] : memref<8x18x32xbf16, #tpu.memory_space<vmem>>, vector<8x1x32xbf16>
    tpu.vector_store %arg11[%c0_12, %c0_13, %c0_14], %6 {strides = array<i32>} : memref<8x18x32xbf16, #tpu.memory_space<vmem>>, vector<8x1x32xbf16>,
    %c0_15 = arith.constant 0 : index
    %c17_16 = arith.constant 17 : index
    %c0_17 = arith.constant 0 : index
    %8 = vector.load %arg11[%c0_15, %c17_16, %c0_17] : memref<8x18x32xbf16, #tpu.memory_space<vmem>>, vector<8x1x32xbf16>
    tpu.vector_store %arg11[%c0_15, %c17_16, %c0_17], %6 {strides = array<i32>} : memref<8x18x32xbf16, #tpu.memory_space<vmem>>, vector<8x1x32xbf16>,
    %c0_18 = arith.constant 0 : index
    %c0_19 = arith.constant 0 : index
    %c0_20 = arith.constant 0 : index
    %9 = vector.load %arg1[%c0_18, %c0_19, %c0_20] : memref<8x16x4xf32, #tpu.memory_space<vmem>>, vector<8x16x4xf32>
    %10 = arith.truncf %9 : vector<8x16x4xf32> to vector<8x16x4xbf16>
    %c0_21 = arith.constant 0 : index
    %c1 = arith.constant 1 : index
    %c0_22 = arith.constant 0 : index
    %11 = vector.load %arg9[%c0_21, %c1, %c0_22] : memref<8x18x4xbf16, #tpu.memory_space<vmem>>, vector<8x16x4xbf16>
    tpu.vector_store %arg9[%c0_21, %c1, %c0_22], %10 {strides = array<i32>} : memref<8x18x4xbf16, #tpu.memory_space<vmem>>, vector<8x16x4xbf16>,
    %c0_23 = arith.constant 0 : index
    %c0_24 = arith.constant 0 : index
    %12 = vector.load %arg5[%c0_23, %c0_24] : memref<1x32xf32, #tpu.memory_space<vmem>>, vector<1x32xf32>
    %c0_25 = arith.constant 0 : index
    %c0_26 = arith.constant 0 : index
    %c0_27 = arith.constant 0 : index
    %13 = vector.load %arg9[%c0_25, %c0_26, %c0_27] : memref<8x18x4xbf16, #tpu.memory_space<vmem>>, vector<8x16x4xbf16>
    %14 = vector.shape_cast %13 : vector<8x16x4xbf16> to vector<128x4xbf16>
    %c0_28 = arith.constant 0 : index
    %c0_29 = arith.constant 0 : index
    %c0_30 = arith.constant 0 : index
    %15 = vector.load %arg2[%c0_28, %c0_29, %c0_30] : memref<3x4x32xbf16, #tpu.memory_space<vmem>>, vector<1x4x32xbf16>
    %16 = vector.shape_cast %15 : vector<1x4x32xbf16> to vector<4x32xbf16>
    %cst_31 = arith.constant dense<0.000000e+00> : vector<128x32xf32>
    %17 = tpu.matmul %14, %16, %cst_31 {dimension_numbers = #tpu.dot_dimension_numbers<[1], [0], [0], [1], [0, 0, 1, 1], [], []>} : vector<128x4xbf16>, vector<4x32xbf16>, vector<128x32xf32> -> vector<128x32xf32>
    %c0_32 = arith.constant 0 : index
    %c1_33 = arith.constant 1 : index
    %c0_34 = arith.constant 0 : index
    %18 = vector.load %arg9[%c0_32, %c1_33, %c0_34] : memref<8x18x4xbf16, #tpu.memory_space<vmem>>, vector<8x16x4xbf16>
    %19 = vector.shape_cast %18 : vector<8x16x4xbf16> to vector<128x4xbf16>
    %c1_35 = arith.constant 1 : index
    %c0_36 = arith.constant 0 : index
    %c0_37 = arith.constant 0 : index
    %20 = vector.load %arg2[%c1_35, %c0_36, %c0_37] : memref<3x4x32xbf16, #tpu.memory_space<vmem>>, vector<1x4x32xbf16>
    %21 = vector.shape_cast %20 : vector<1x4x32xbf16> to vector<4x32xbf16>
    %cst_38 = arith.constant dense<0.000000e+00> : vector<128x32xf32>
    %22 = tpu.matmul %19, %21, %cst_38 {dimension_numbers = #tpu.dot_dimension_numbers<[1], [0], [0], [1], [0, 0, 1, 1], [], []>} : vector<128x4xbf16>, vector<4x32xbf16>, vector<128x32xf32> -> vector<128x32xf32>
    %23 = arith.addf %17, %22 : vector<128x32xf32>
    %c0_39 = arith.constant 0 : index
    %c2 = arith.constant 2 : index
    %c0_40 = arith.constant 0 : index
    %24 = vector.load %arg9[%c0_39, %c2, %c0_40] : memref<8x18x4xbf16, #tpu.memory_space<vmem>>, vector<8x16x4xbf16>
    %25 = vector.shape_cast %24 : vector<8x16x4xbf16> to vector<128x4xbf16>
    %c2_41 = arith.constant 2 : index
    %c0_42 = arith.constant 0 : index
    %c0_43 = arith.constant 0 : index
    %26 = vector.load %arg2[%c2_41, %c0_42, %c0_43] : memref<3x4x32xbf16, #tpu.memory_space<vmem>>, vector<1x4x32xbf16>
    %27 = vector.shape_cast %26 : vector<1x4x32xbf16> to vector<4x32xbf16>
    %cst_44 = arith.constant dense<0.000000e+00> : vector<128x32xf32>
    %28 = tpu.matmul %25, %27, %cst_44 {dimension_numbers = #tpu.dot_dimension_numbers<[1], [0], [0], [1], [0, 0, 1, 1], [], []>} : vector<128x4xbf16>, vector<4x32xbf16>, vector<128x32xf32> -> vector<128x32xf32>
    %29 = arith.addf %23, %28 : vector<128x32xf32>
    %30 = vector.broadcast %12 : vector<1x32xf32> to vector<128x32xf32>
    %31 = arith.addf %29, %30 : vector<128x32xf32>
    %cst_45 = arith.constant 0.000000e+00 : f32
    %32 = vector.broadcast %cst_45 : f32 to vector<128x32xf32>
    %33 = arith.maximumf %31, %32 : vector<128x32xf32>
    %34 = vector.shape_cast %33 : vector<128x32xf32> to vector<8x16x32xf32>
    %35 = arith.truncf %34 : vector<8x16x32xf32> to vector<8x16x32xbf16>
    %c0_46 = arith.constant 0 : index
    %c1_47 = arith.constant 1 : index
    %c0_48 = arith.constant 0 : index
    %36 = vector.load %arg10[%c0_46, %c1_47, %c0_48] : memref<8x18x32xbf16, #tpu.memory_space<vmem>>, vector<8x16x32xbf16>
    tpu.vector_store %arg10[%c0_46, %c1_47, %c0_48], %35 {strides = array<i32>} : memref<8x18x32xbf16, #tpu.memory_space<vmem>>, vector<8x16x32xbf16>,
    %c0_49 = arith.constant 0 : index
    %c0_50 = arith.constant 0 : index
    %37 = vector.load %arg6[%c0_49, %c0_50] : memref<1x32xf32, #tpu.memory_space<vmem>>, vector<1x32xf32>
    %c0_51 = arith.constant 0 : index
    %c0_52 = arith.constant 0 : index
    %c0_53 = arith.constant 0 : index
    %38 = vector.load %arg10[%c0_51, %c0_52, %c0_53] : memref<8x18x32xbf16, #tpu.memory_space<vmem>>, vector<8x16x32xbf16>
    %39 = vector.shape_cast %38 : vector<8x16x32xbf16> to vector<128x32xbf16>
    %c0_54 = arith.constant 0 : index
    %c0_55 = arith.constant 0 : index
    %c0_56 = arith.constant 0 : index
    %40 = vector.load %arg3[%c0_54, %c0_55, %c0_56] : memref<3x32x32xbf16, #tpu.memory_space<vmem>>, vector<1x32x32xbf16>
    %41 = vector.shape_cast %40 : vector<1x32x32xbf16> to vector<32x32xbf16>
    %cst_57 = arith.constant dense<0.000000e+00> : vector<128x32xf32>
    %42 = tpu.matmul %39, %41, %cst_57 {dimension_numbers = #tpu.dot_dimension_numbers<[1], [0], [0], [1], [0, 0, 1, 1], [], []>} : vector<128x32xbf16>, vector<32x32xbf16>, vector<128x32xf32> -> vector<128x32xf32>
    %c0_58 = arith.constant 0 : index
    %c1_59 = arith.constant 1 : index
    %c0_60 = arith.constant 0 : index
    %43 = vector.load %arg10[%c0_58, %c1_59, %c0_60] : memref<8x18x32xbf16, #tpu.memory_space<vmem>>, vector<8x16x32xbf16>
    %44 = vector.shape_cast %43 : vector<8x16x32xbf16> to vector<128x32xbf16>
    %c1_61 = arith.constant 1 : index
    %c0_62 = arith.constant 0 : index
    %c0_63 = arith.constant 0 : index
    %45 = vector.load %arg3[%c1_61, %c0_62, %c0_63] : memref<3x32x32xbf16, #tpu.memory_space<vmem>>, vector<1x32x32xbf16>
    %46 = vector.shape_cast %45 : vector<1x32x32xbf16> to vector<32x32xbf16>
    %cst_64 = arith.constant dense<0.000000e+00> : vector<128x32xf32>
    %47 = tpu.matmul %44, %46, %cst_64 {dimension_numbers = #tpu.dot_dimension_numbers<[1], [0], [0], [1], [0, 0, 1, 1], [], []>} : vector<128x32xbf16>, vector<32x32xbf16>, vector<128x32xf32> -> vector<128x32xf32>
    %48 = arith.addf %42, %47 : vector<128x32xf32>
    %c0_65 = arith.constant 0 : index
    %c2_66 = arith.constant 2 : index
    %c0_67 = arith.constant 0 : index
    %49 = vector.load %arg10[%c0_65, %c2_66, %c0_67] : memref<8x18x32xbf16, #tpu.memory_space<vmem>>, vector<8x16x32xbf16>
    %50 = vector.shape_cast %49 : vector<8x16x32xbf16> to vector<128x32xbf16>
    %c2_68 = arith.constant 2 : index
    %c0_69 = arith.constant 0 : index
    %c0_70 = arith.constant 0 : index
    %51 = vector.load %arg3[%c2_68, %c0_69, %c0_70] : memref<3x32x32xbf16, #tpu.memory_space<vmem>>, vector<1x32x32xbf16>
    %52 = vector.shape_cast %51 : vector<1x32x32xbf16> to vector<32x32xbf16>
    %cst_71 = arith.constant dense<0.000000e+00> : vector<128x32xf32>
    %53 = tpu.matmul %50, %52, %cst_71 {dimension_numbers = #tpu.dot_dimension_numbers<[1], [0], [0], [1], [0, 0, 1, 1], [], []>} : vector<128x32xbf16>, vector<32x32xbf16>, vector<128x32xf32> -> vector<128x32xf32>
    %54 = arith.addf %48, %53 : vector<128x32xf32>
    %55 = vector.broadcast %37 : vector<1x32xf32> to vector<128x32xf32>
    %56 = arith.addf %54, %55 : vector<128x32xf32>
    %cst_72 = arith.constant 0.000000e+00 : f32
    %57 = vector.broadcast %cst_72 : f32 to vector<128x32xf32>
    %58 = arith.maximumf %56, %57 : vector<128x32xf32>
    %59 = vector.shape_cast %58 : vector<128x32xf32> to vector<8x16x32xf32>
    %60 = arith.truncf %59 : vector<8x16x32xf32> to vector<8x16x32xbf16>
    %c0_73 = arith.constant 0 : index
    %c1_74 = arith.constant 1 : index
    %c0_75 = arith.constant 0 : index
    %61 = vector.load %arg11[%c0_73, %c1_74, %c0_75] : memref<8x18x32xbf16, #tpu.memory_space<vmem>>, vector<8x16x32xbf16>
    tpu.vector_store %arg11[%c0_73, %c1_74, %c0_75], %60 {strides = array<i32>} : memref<8x18x32xbf16, #tpu.memory_space<vmem>>, vector<8x16x32xbf16>,
    %c0_76 = arith.constant 0 : index
    %c0_77 = arith.constant 0 : index
    %62 = vector.load %arg7[%c0_76, %c0_77] : memref<1x128xf32, #tpu.memory_space<vmem>>, vector<1x128xf32>
    %c0_78 = arith.constant 0 : index
    %c0_79 = arith.constant 0 : index
    %c0_80 = arith.constant 0 : index
    %63 = vector.load %arg11[%c0_78, %c0_79, %c0_80] : memref<8x18x32xbf16, #tpu.memory_space<vmem>>, vector<8x16x32xbf16>
    %64 = vector.shape_cast %63 : vector<8x16x32xbf16> to vector<128x32xbf16>
    %c0_81 = arith.constant 0 : index
    %c0_82 = arith.constant 0 : index
    %c0_83 = arith.constant 0 : index
    %65 = vector.load %arg4[%c0_81, %c0_82, %c0_83] : memref<3x32x128xbf16, #tpu.memory_space<vmem>>, vector<1x32x128xbf16>
    %66 = vector.shape_cast %65 : vector<1x32x128xbf16> to vector<32x128xbf16>
    %cst_84 = arith.constant dense<0.000000e+00> : vector<128x128xf32>
    %67 = tpu.matmul %64, %66, %cst_84 {dimension_numbers = #tpu.dot_dimension_numbers<[1], [0], [0], [1], [0, 0, 1, 1], [], []>} : vector<128x32xbf16>, vector<32x128xbf16>, vector<128x128xf32> -> vector<128x128xf32>
    %c0_85 = arith.constant 0 : index
    %c1_86 = arith.constant 1 : index
    %c0_87 = arith.constant 0 : index
    %68 = vector.load %arg11[%c0_85, %c1_86, %c0_87] : memref<8x18x32xbf16, #tpu.memory_space<vmem>>, vector<8x16x32xbf16>
    %69 = vector.shape_cast %68 : vector<8x16x32xbf16> to vector<128x32xbf16>
    %c1_88 = arith.constant 1 : index
    %c0_89 = arith.constant 0 : index
    %c0_90 = arith.constant 0 : index
    %70 = vector.load %arg4[%c1_88, %c0_89, %c0_90] : memref<3x32x128xbf16, #tpu.memory_space<vmem>>, vector<1x32x128xbf16>
    %71 = vector.shape_cast %70 : vector<1x32x128xbf16> to vector<32x128xbf16>
    %cst_91 = arith.constant dense<0.000000e+00> : vector<128x128xf32>
    %72 = tpu.matmul %69, %71, %cst_91 {dimension_numbers = #tpu.dot_dimension_numbers<[1], [0], [0], [1], [0, 0, 1, 1], [], []>} : vector<128x32xbf16>, vector<32x128xbf16>, vector<128x128xf32> -> vector<128x128xf32>
    %73 = arith.addf %67, %72 : vector<128x128xf32>
    %c0_92 = arith.constant 0 : index
    %c2_93 = arith.constant 2 : index
    %c0_94 = arith.constant 0 : index
    %74 = vector.load %arg11[%c0_92, %c2_93, %c0_94] : memref<8x18x32xbf16, #tpu.memory_space<vmem>>, vector<8x16x32xbf16>
    %75 = vector.shape_cast %74 : vector<8x16x32xbf16> to vector<128x32xbf16>
    %c2_95 = arith.constant 2 : index
    %c0_96 = arith.constant 0 : index
    %c0_97 = arith.constant 0 : index
    %76 = vector.load %arg4[%c2_95, %c0_96, %c0_97] : memref<3x32x128xbf16, #tpu.memory_space<vmem>>, vector<1x32x128xbf16>
    %77 = vector.shape_cast %76 : vector<1x32x128xbf16> to vector<32x128xbf16>
    %cst_98 = arith.constant dense<0.000000e+00> : vector<128x128xf32>
    %78 = tpu.matmul %75, %77, %cst_98 {dimension_numbers = #tpu.dot_dimension_numbers<[1], [0], [0], [1], [0, 0, 1, 1], [], []>} : vector<128x32xbf16>, vector<32x128xbf16>, vector<128x128xf32> -> vector<128x128xf32>
    %79 = arith.addf %73, %78 : vector<128x128xf32>
    %80 = vector.broadcast %62 : vector<1x128xf32> to vector<128x128xf32>
    %81 = arith.addf %79, %80 : vector<128x128xf32>
    %cst_99 = arith.constant 0.000000e+00 : f32
    %82 = vector.broadcast %cst_99 : f32 to vector<128x128xf32>
    %83 = arith.maximumf %81, %82 : vector<128x128xf32>
    %84 = vector.shape_cast %83 : vector<128x128xf32> to vector<8x16x128xf32>
    %cst_100 = arith.constant dense<0xFF800000> : vector<8x128xf32>
    %85 = vector.multi_reduction <maximumf>, %84, %cst_100 [1] : vector<8x16x128xf32> to vector<8x128xf32>
    %c0_101 = arith.constant 0 : index
    %c0_102 = arith.constant 0 : index
    %86 = vector.load %arg8[%c0_101, %c0_102] : memref<8x128xf32, #tpu.memory_space<vmem>>, vector<8x128xf32>
    tpu.vector_store %arg8[%c0_101, %c0_102], %85 {strides = array<i32>} : memref<8x128xf32, #tpu.memory_space<vmem>>, vector<8x128xf32>,
    return
  }
  func.func @transform_0(%arg0: i32) -> (i32, i32, i32) {
    %c0_i32 = arith.constant 0 : i32
    %c0_i32_0 = arith.constant 0 : i32
    %c0_i32_1 = arith.constant 0 : i32
    return %arg0, %c0_i32, %c0_i32_0 : i32, i32, i32
  }
  func.func @transform_1(%arg0: i32) -> (i32, i32, i32) {
    %c0_i32 = arith.constant 0 : i32
    %c0_i32_0 = arith.constant 0 : i32
    %c0_i32_1 = arith.constant 0 : i32
    %c0_i32_2 = arith.constant 0 : i32
    return %c0_i32, %c0_i32_0, %c0_i32_1 : i32, i32, i32
  }
  func.func @transform_2(%arg0: i32) -> (i32, i32, i32) {
    %c0_i32 = arith.constant 0 : i32
    %c0_i32_0 = arith.constant 0 : i32
    %c0_i32_1 = arith.constant 0 : i32
    %c0_i32_2 = arith.constant 0 : i32
    return %c0_i32, %c0_i32_0, %c0_i32_1 : i32, i32, i32
  }
  func.func @transform_3(%arg0: i32) -> (i32, i32, i32) {
    %c0_i32 = arith.constant 0 : i32
    %c0_i32_0 = arith.constant 0 : i32
    %c0_i32_1 = arith.constant 0 : i32
    %c0_i32_2 = arith.constant 0 : i32
    return %c0_i32, %c0_i32_0, %c0_i32_1 : i32, i32, i32
  }
  func.func @transform_4(%arg0: i32) -> (i32, i32) {
    %c0_i32 = arith.constant 0 : i32
    %c0_i32_0 = arith.constant 0 : i32
    %c0_i32_1 = arith.constant 0 : i32
    return %c0_i32, %c0_i32_0 : i32, i32
  }
  func.func @transform_5(%arg0: i32) -> (i32, i32) {
    %c0_i32 = arith.constant 0 : i32
    %c0_i32_0 = arith.constant 0 : i32
    %c0_i32_1 = arith.constant 0 : i32
    return %c0_i32, %c0_i32_0 : i32, i32
  }
  func.func @transform_6(%arg0: i32) -> (i32, i32) {
    %c0_i32 = arith.constant 0 : i32
    %c0_i32_0 = arith.constant 0 : i32
    %c0_i32_1 = arith.constant 0 : i32
    return %c0_i32, %c0_i32_0 : i32, i32
  }
  func.func @transform_7(%arg0: i32) -> (i32, i32) {
    %c0_i32 = arith.constant 0 : i32
    %c0_i32_0 = arith.constant 0 : i32
    return %arg0, %c0_i32 : i32, i32
  }
}

</mosaic_0001>

<llo_original>
// kernel: tpu_custom_call.1
$region0: #{tpu_custom_call.1}
  #allocation0 [shape = 'u32[]', space=smem, size = 0x4, offset = 0x4, fixed_abs, tag = 'smem constant byte address 0x4 - core index']
  #allocation1 [shape = 'u32[144,128]{1,0:T(1,128)}', space=vmem, size = 0x12000, scoped, tag = 'internal scratch']
  #allocation2 [shape = 'bf16[8,18,4]{2,1,0:T(8,128)(2,1)}', space=vmem, size = 0xc000, scoped, tag = 'scratch operand']
  #allocation3 [shape = 'bf16[8,18,32]{2,1,0:T(8,128)(2,1)}', space=vmem, size = 0xc000, scoped, tag = 'scratch operand']
  #allocation4 [shape = 'bf16[8,18,32]{2,1,0:T(8,128)(2,1)}', space=vmem, size = 0xc000, scoped, tag = 'scratch operand']
  %s0 = inlined_call_operand.vmem [shape: f32[16,16,4], index: 0, kind: input, shape index: {}]
  %s1 = inlined_call_operand.vmem [shape: bf16[3,4,32], index: 1, kind: input, shape index: {}]
  %s2 = inlined_call_operand.vmem [shape: bf16[3,32,32], index: 2, kind: input, shape index: {}]
  %s3 = inlined_call_operand.vmem [shape: bf16[3,32,128], index: 3, kind: input, shape index: {}]
  %s4 = inlined_call_operand.vmem [shape: f32[1,32], index: 4, kind: input, shape index: {}]
  %s5 = inlined_call_operand.vmem [shape: f32[1,32], index: 5, kind: input, shape index: {}]
  %s6 = inlined_call_operand.vmem [shape: f32[1,128], index: 6, kind: input, shape index: {}]
  %s7 = inlined_call_operand.hbm [shape: f32[16,128], index: 7, kind: output, shape index: {}]
  %s8 = sld [smem:[#allocation0]]
  $region61: #{tpu_custom_call.1} parent=0
    _
  %s10 = ssub.s32 1, %s8
  %s11 = scalar_select 0, %s10, %s8
  $region1: #{tpu_custom_call.1} parent=0
    #allocation5 [shape = 'u8[8192]{0}', space=vmem, size = 0x2000, scoped, tag = 'output window, operand 0']
    #allocation6 [shape = 's32[2]{0}', space=sflag, size = 0x8, scoped, tag = 'scoped memory for tpu_custom_call.1']
    %12 = vsyncpa [#allocation6], 0
    %s13 = scalar_lea.sflag [#allocation6], 1
    %14 = vsyncpa %s13, 0
    loop: start=0, step=1, limit=4
    $region2: #{tpu_custom_call.1} parent=1 // loop_pre_header
      _
    $region3: #{tpu_custom_call.1} parent=1 // loop_header
      %s16 = sphi 0, %s20
      %p17 = scmp.ge.s32.totalorder %s16, 4
      %s26 = sphi 0, %s28
      %s29 = sphi 0, %s26
      %s30 = sphi 0, %s29
      %s46 = sphi 0, %s30
      %s50 = sphi 0, %s50
      %s52 = sphi 0, %s50
      %s53 = sphi 0, %s52
      %s67 = sphi 0, %s53
      %s71 = sphi 0, %s71
      %s73 = sphi 0, %s71
      %s74 = sphi 0, %s73
      %s88 = sphi 0, %s74
      %s92 = sphi 0, %s92
      %s94 = sphi 0, %s92
      %s95 = sphi 0, %s94
      %s109 = sphi 0, %s95
      %s113 = sphi 0, %s113
      %s115 = sphi 0, %s113
      %s116 = sphi 0, %s115
      %s130 = sphi 0, %s116
      %s134 = sphi 0, %s134
      %s136 = sphi 0, %s134
      %s137 = sphi 0, %s136
      %s151 = sphi 0, %s137
      %s155 = sphi 0, %s155
      %s157 = sphi 0, %s155
      %s158 = sphi 0, %s157
      %s172 = sphi 0, %s158
      %s178 = sphi 0, %s180
      %s181 = sphi 0, %s178
      %s182 = sphi 0, %s181
      %s198 = sphi 0, %s182
    $region4: #{tpu_custom_call.1} parent=1 // loop_header_branch
      %19 = sbr.rel (%p17) target = $region8
    $region5: #{tpu_custom_call.1} parent=1 // loop_body
      %s21 = ssub.s32 %s16, 1
      %s22 = ssub.s32 %s16, 2
      %s23 = sadd.s32 %s16, 1
      %s24 = ssub.s32 %s16, %s23
      %p25 = scmp.eq.s32.totalorder %s24, 0
      %s27 = sadd.s32 %s26, 1
      %s28 = scalar_select %p25, %s26, %s27
      %p31 = pneg %p25
      %p32 = scmp.eq.s32.totalorder %s16, 1
      %p33 = por %p31, %p32
      %p34 = scmp.ne.s32.totalorder %s26, %s29
      %p35 = scmp.eq.s32.totalorder %s16, 0
      %p36 = por %p34, %p35
      %p37 = scmp.ne.s32.totalorder %s26, %s29
      %p38 = scmp.eq.s32.totalorder %s21, 1
      %p39 = por %p37, %p38
      %p40 = scmp.ne.s32.totalorder %s29, %s30
      %p41 = scmp.eq.s32.totalorder %s21, 0
      %p42 = por %p40, %p41
      %p43 = scmp.ne.s32.totalorder %s29, %s30
      %p44 = scmp.eq.s32.totalorder %s22, 1
      %p45 = por %p43, %p44
      %p47 = scmp.ne.s32.totalorder %s30, %s46
      %p48 = scmp.eq.s32.totalorder %s22, 0
      %p49 = por %p47, %p48
      %s51 = sadd.s32 %s50, 1
      %p54 = scmp.eq.s32.totalorder %s16, 1
      %p55 = scmp.ne.s32.totalorder %s50, %s52
      %p56 = scmp.eq.s32.totalorder %s16, 0
      %p57 = por %p55, %p56
      %p58 = scmp.ne.s32.totalorder %s50, %s52
      %p59 = scmp.eq.s32.totalorder %s21, 1
      %p60 = por %p58, %p59
      %p61 = scmp.ne.s32.totalorder %s52, %s53
      %p62 = scmp.eq.s32.totalorder %s21, 0
      %p63 = por %p61, %p62
      %p64 = scmp.ne.s32.totalorder %s52, %s53
      %p65 = scmp.eq.s32.totalorder %s22, 1
      %p66 = por %p64, %p65
      %p68 = scmp.ne.s32.totalorder %s53, %s67
      %p69 = scmp.eq.s32.totalorder %s22, 0
      %p70 = por %p68, %p69
      %s72 = sadd.s32 %s71, 1
      %p75 = scmp.eq.s32.totalorder %s16, 1
      %p76 = scmp.ne.s32.totalorder %s71, %s73
      %p77 = scmp.eq.s32.totalorder %s16, 0
      %p78 = por %p76, %p77
      %p79 = scmp.ne.s32.totalorder %s71, %s73
      %p80 = scmp.eq.s32.totalorder %s21, 1
      %p81 = por %p79, %p80
      %p82 = scmp.ne.s32.totalorder %s73, %s74
      %p83 = scmp.eq.s32.totalorder %s21, 0
      %p84 = por %p82, %p83
      %p85 = scmp.ne.s32.totalorder %s73, %s74
      %p86 = scmp.eq.s32.totalorder %s22, 1
      %p87 = por %p85, %p86
      %p89 = scmp.ne.s32.totalorder %s74, %s88
      %p90 = scmp.eq.s32.totalorder %s22, 0
      %p91 = por %p89, %p90
      %s93 = sadd.s32 %s92, 1
      %p96 = scmp.eq.s32.totalorder %s16, 1
      %p97 = scmp.ne.s32.totalorder %s92, %s94
      %p98 = scmp.eq.s32.totalorder %s16, 0
      %p99 = por %p97, %p98
      %p100 = scmp.ne.s32.totalorder %s92, %s94
      %p101 = scmp.eq.s32.totalorder %s21, 1
      %p102 = por %p100, %p101
      %p103 = scmp.ne.s32.totalorder %s94, %s95
      %p104 = scmp.eq.s32.totalorder %s21, 0
      %p105 = por %p103, %p104
      %p106 = scmp.ne.s32.totalorder %s94, %s95
      %p107 = scmp.eq.s32.totalorder %s22, 1
      %p108 = por %p106, %p107
      %p110 = scmp.ne.s32.totalorder %s95, %s109
      %p111 = scmp.eq.s32.totalorder %s22, 0
      %p112 = por %p110, %p111
      %s114 = sadd.s32 %s113, 1
      %p117 = scmp.eq.s32.totalorder %s16, 1
      %p118 = scmp.ne.s32.totalorder %s113, %s115
      %p119 = scmp.eq.s32.totalorder %s16, 0
      %p120 = por %p118, %p119
      %p121 = scmp.ne.s32.totalorder %s113, %s115
      %p122 = scmp.eq.s32.totalorder %s21, 1
      %p123 = por %p121, %p122
      %p124 = scmp.ne.s32.totalorder %s115, %s116
      %p125 = scmp.eq.s32.totalorder %s21, 0
      %p126 = por %p124, %p125
      %p127 = scmp.ne.s32.totalorder %s115, %s116
      %p128 = scmp.eq.s32.totalorder %s22, 1
      %p129 = por %p127, %p128
      %p131 = scmp.ne.s32.totalorder %s116, %s130
      %p132 = scmp.eq.s32.totalorder %s22, 0
      %p133 = por %p131, %p132
      %s135 = sadd.s32 %s134, 1
      %p138 = scmp.eq.s32.totalorder %s16, 1
      %p139 = scmp.ne.s32.totalorder %s134, %s136
      %p140 = scmp.eq.s32.totalorder %s16, 0
      %p141 = por %p139, %p140
      %p142 = scmp.ne.s32.totalorder %s134, %s136
      %p143 = scmp.eq.s32.totalorder %s21, 1
      %p144 = por %p142, %p143
      %p145 = scmp.ne.s32.totalorder %s136, %s137
      %p146 = scmp.eq.s32.totalorder %s21, 0
      %p147 = por %p145, %p146
      %p148 = scmp.ne.s32.totalorder %s136, %s137
      %p149 = scmp.eq.s32.totalorder %s22, 1
      %p150 = por %p148, %p149
      %p152 = scmp.ne.s32.totalorder %s137, %s151
      %p153 = scmp.eq.s32.totalorder %s22, 0
      %p154 = por %p152, %p153
      %s156 = sadd.s32 %s155, 1
      %p159 = scmp.eq.s32.totalorder %s16, 1
      %p160 = scmp.ne.s32.totalorder %s155, %s157
      %p161 = scmp.eq.s32.totalorder %s16, 0
      %p162 = por %p160, %p161
      %p163 = scmp.ne.s32.totalorder %s155, %s157
      %p164 = scmp.eq.s32.totalorder %s21, 1
      %p165 = por %p163, %p164
      %p166 = scmp.ne.s32.totalorder %s157, %s158
      %p167 = scmp.eq.s32.totalorder %s21, 0
      %p168 = por %p166, %p167
      %p169 = scmp.ne.s32.totalorder %s157, %s158
      %p170 = scmp.eq.s32.totalorder %s22, 1
      %p171 = por %p169, %p170
      %p173 = scmp.ne.s32.totalorder %s158, %s172
      %p174 = scmp.eq.s32.totalorder %s22, 0
      %p175 = por %p173, %p174
      %s176 = ssub.s32 %s16, %s23
      %p177 = scmp.eq.s32.totalorder %s176, 0
      %s179 = sadd.s32 %s178, 1
      %s180 = scalar_select %p177, %s178, %s179
      %p183 = pneg %p177
      %p184 = scmp.eq.s32.totalorder %s16, 1
      %p185 = por %p183, %p184
      %p186 = scmp.ne.s32.totalorder %s178, %s181
      %p187 = scmp.eq.s32.totalorder %s16, 0
      %p188 = por %p186, %p187
      %p189 = scmp.ne.s32.totalorder %s178, %s181
      %p190 = scmp.eq.s32.totalorder %s21, 1
      %p191 = por %p189, %p190
      %p192 = scmp.ne.s32.totalorder %s181, %s182
      %p193 = scmp.eq.s32.totalorder %s21, 0
      %p194 = por %p192, %p193
      %p195 = scmp.ne.s32.totalorder %s181, %s182
      %p196 = scmp.eq.s32.totalorder %s22, 1
      %p197 = por %p195, %p196
      %p199 = scmp.ne.s32.totalorder %s182, %s198
      %p200 = scmp.eq.s32.totalorder %s22, 0
      %p201 = por %p199, %p200
      %p202 = scmp.le.s32.totalorder 1, %s16
      %p203 = scmp.lt.s32.totalorder %s16, 3
      %p204 = pnand %p202, %p203
      %p205 = pneg %p204
      // Predicated region
      $region9: #{tpu_custom_call.1} parent=5 // pred_check
        _
      $region10: #{tpu_custom_call.1} parent=5 // pred_check_branch
        %207 = sbr.rel (%p204) target = $region12
      $region11: #{tpu_custom_call.1} parent=5 // pred_region
        %s208 = ssub.s32 %s16, 1
        // Predicated region
        $region13: #{tpu_custom_call.1} parent=11 // pred_check
          %p209 = pneg %p63
        $region14: #{tpu_custom_call.1} parent=11 // pred_check_branch
          %211 = sbr.rel (%p209) target = $region16
        $region15: #{tpu_custom_call.1} parent=11 // pred_region
          _
        $region16: #{tpu_custom_call.1} parent=11 // pred_fallthru
          _
        // Predicated region
        $region17: #{tpu_custom_call.1} parent=11 // pred_check
          %p212 = pneg %p84
        $region18: #{tpu_custom_call.1} parent=11 // pred_check_branch
          %214 = sbr.rel (%p212) target = $region20
        $region19: #{tpu_custom_call.1} parent=11 // pred_region
          _
        $region20: #{tpu_custom_call.1} parent=11 // pred_fallthru
          _
        // Predicated region
        $region21: #{tpu_custom_call.1} parent=11 // pred_check
          %p215 = pneg %p105
        $region22: #{tpu_custom_call.1} parent=11 // pred_check_branch
          %217 = sbr.rel (%p215) target = $region24
        $region23: #{tpu_custom_call.1} parent=11 // pred_region
          _
        $region24: #{tpu_custom_call.1} parent=11 // pred_fallthru
          _
        // Predicated region
        $region25: #{tpu_custom_call.1} parent=11 // pred_check
          %p218 = pneg %p126
        $region26: #{tpu_custom_call.1} parent=11 // pred_check_branch
          %220 = sbr.rel (%p218) target = $region28
        $region27: #{tpu_custom_call.1} parent=11 // pred_region
          _
        $region28: #{tpu_custom_call.1} parent=11 // pred_fallthru
          _
        // Predicated region
        $region29: #{tpu_custom_call.1} parent=11 // pred_check
          %p221 = pneg %p147
        $region30: #{tpu_custom_call.1} parent=11 // pred_check_branch
          %223 = sbr.rel (%p221) target = $region32
        $region31: #{tpu_custom_call.1} parent=11 // pred_region
          _
        $region32: #{tpu_custom_call.1} parent=11 // pred_fallthru
          _
        // Predicated region
        $region33: #{tpu_custom_call.1} parent=11 // pred_check
          %p224 = pneg %p168
        $region34: #{tpu_custom_call.1} parent=11 // pred_check_branch
          %226 = sbr.rel (%p224) target = $region36
        $region35: #{tpu_custom_call.1} parent=11 // pred_region
          _
        $region36: #{tpu_custom_call.1} parent=11 // pred_fallthru
          _
      $region12: #{tpu_custom_call.1} parent=5 // pred_fallthru
        _
      %p227 = scmp.lt.s32.totalorder %s16, 2
      // Predicated region
      $region37: #{tpu_custom_call.1} parent=5 // pred_check
        %p228 = pneg %p227
      $region38: #{tpu_custom_call.1} parent=5 // pred_check_branch
        %230 = sbr.rel (%p228) target = $region40
      $region39: #{tpu_custom_call.1} parent=5 // pred_region
        // Predicated region
        $region41: #{tpu_custom_call.1} parent=39 // pred_check
          %p231 = pneg %p36
        $region42: #{tpu_custom_call.1} parent=39 // pred_check_branch
          %233 = sbr.rel (%p231) target = $region44
        $region43: #{tpu_custom_call.1} parent=39 // pred_region
          %s234 = smul.u32 8, %s16
          %p235 = scmp.lt.s32.totalorder %s234, 15
          %s236 = scalar_select %p235, %s234, 15
          %s237 = smul.addr %s236, 2
          %s238 = smul.addr %s237, 8
          %s239 = scalar_lea.vmem %s0, %s238
          %s240 = smul.u32 8, %s16
        $region44: #{tpu_custom_call.1} parent=39 // pred_fallthru
          _
      $region40: #{tpu_custom_call.1} parent=5 // pred_fallthru
        _
      %p241 = scmp.le.s32.totalorder 1, %s16
      %p242 = scmp.lt.s32.totalorder %s16, 3
      %p243 = pnand %p241, %p242
      %p244 = pneg %p243
      // Predicated region
      $region45: #{tpu_custom_call.1} parent=5 // pred_check
        _
      $region46: #{tpu_custom_call.1} parent=5 // pred_check_branch
        %246 = sbr.rel (%p243) target = $region48
      $region47: #{tpu_custom_call.1} parent=5 // pred_region
        %s247 = ssub.s32 %s16, 1
        %s248 = smul.u32 8, %s21
        %p249 = scmp.lt.s32.totalorder %s248, 15
        %s250 = scalar_select %p249, %s248, 15
        %s251 = smul.addr %s250, 2
        %s252 = smul.addr %s251, 8
        %s253 = scalar_lea.vmem %s0, %s252
        %p254 = pneg %p42
        %p255 = pneg %p39
        %p256 = pneg %p63
        %p257 = pneg %p60
        %p258 = pneg %p84
        %p259 = pneg %p81
        %p260 = pneg %p105
        %p261 = pneg %p102
        %p262 = pneg %p126
        %p263 = pneg %p123
        %p264 = pneg %p147
        %p265 = pneg %p144
        %p266 = pneg %p168
        %p267 = pneg %p165
        %p268 = pneg %p194
        %p269 = pneg %p191
        %s270 = sand.u32 %s181, 1
        %s271 = scalar_lea.sflag [#allocation6], %s270
        %s272 = sand.u32 %s181, 1
        %s273 = smul.addr %s272, 8
        %s274 = scalar_lea.vmem [#allocation5], %s273
        %s275 = smul.u32 8, %s21
        %p276 = scmp.lt.s32.totalorder %s275, 15
        %s277 = scalar_select %p276, %s275, 15
        %s278 = smul.addr %s277, 2
        %s279 = smul.addr %s278, 8
        %s280 = scalar_lea.vmem %s0, %s279
        %s281 = smul.u32 8, %s21
        %vm283 = vcmask 24576
        %vm284 = vsmask.f32 256
        %vm285 = vmand %vm283, %vm284
        %v286 = vld [vmem:[#allocation2] sm:$0x1]
        %v287 = vsel %vm285, 0, %v286
        %288 = vst [vmem:[#allocation2] sm:$0x1] %v287
        %v289 = vld [vmem:[#allocation2 + $0xc] sm:$0x1]
        %v290 = vsel %vm285, 0, %v289
        %291 = vst [vmem:[#allocation2 + $0xc] sm:$0x1] %v290
        %v292 = vld [vmem:[#allocation2 + $0x18] sm:$0x1]
        %v293 = vsel %vm285, 0, %v292
        %294 = vst [vmem:[#allocation2 + $0x18] sm:$0x1] %v293
        %v295 = vld [vmem:[#allocation2 + $0x24] sm:$0x1]
        %v296 = vsel %vm285, 0, %v295
        %297 = vst [vmem:[#allocation2 + $0x24] sm:$0x1] %v296
        %v298 = vld [vmem:[#allocation2 + $0x30] sm:$0x1]
        %v299 = vsel %vm285, 0, %v298
        %300 = vst [vmem:[#allocation2 + $0x30] sm:$0x1] %v299
        %v301 = vld [vmem:[#allocation2 + $0x3c] sm:$0x1]
        %v302 = vsel %vm285, 0, %v301
        %303 = vst [vmem:[#allocation2 + $0x3c] sm:$0x1] %v302
        %v304 = vld [vmem:[#allocation2 + $0x48] sm:$0x1]
        %v305 = vsel %vm285, 0, %v304
        %306 = vst [vmem:[#allocation2 + $0x48] sm:$0x1] %v305
        %v307 = vld [vmem:[#allocation2 + $0x54] sm:$0x1]
        %v308 = vsel %vm285, 0, %v307
        %309 = vst [vmem:[#allocation2 + $0x54] sm:$0x1] %v308
        %vm310 = vsmask.f32 7938
        %vm311 = vmand %vm283, %vm310
        %v312 = vld [vmem:[#allocation2 + $0x8] sm:$0x1]
        %v313 = vsel %vm311, 0, %v312
        %314 = vst [vmem:[#allocation2 + $0x8] sm:$0x1] %v313
        %v315 = vld [vmem:[#allocation2 + $0x14] sm:$0x1]
        %v316 = vsel %vm311, 0, %v315
        %317 = vst [vmem:[#allocation2 + $0x14] sm:$0x1] %v316
        %v318 = vld [vmem:[#allocation2 + $0x20] sm:$0x1]
        %v319 = vsel %vm311, 0, %v318
        %320 = vst [vmem:[#allocation2 + $0x20] sm:$0x1] %v319
        %v321 = vld [vmem:[#allocation2 + $0x2c] sm:$0x1]
        %v322 = vsel %vm311, 0, %v321
        %323 = vst [vmem:[#allocation2 + $0x2c] sm:$0x1] %v322
        %v324 = vld [vmem:[#allocation2 + $0x38] sm:$0x1]
        %v325 = vsel %vm311, 0, %v324
        %326 = vst [vmem:[#allocation2 + $0x38] sm:$0x1] %v325
        %v327 = vld [vmem:[#allocation2 + $0x44] sm:$0x1]
        %v328 = vsel %vm311, 0, %v327
        %329 = vst [vmem:[#allocation2 + $0x44] sm:$0x1] %v328
        %v330 = vld [vmem:[#allocation2 + $0x50] sm:$0x1]
        %v331 = vsel %vm311, 0, %v330
        %332 = vst [vmem:[#allocation2 + $0x50] sm:$0x1] %v331
        %v333 = vld [vmem:[#allocation2 + $0x5c] sm:$0x1]
        %v334 = vsel %vm311, 0, %v333
        %335 = vst [vmem:[#allocation2 + $0x5c] sm:$0x1] %v334
        %vm336 = vcmask 253952
        %vm337 = vmand %vm336, %vm284
        %v338 = vld [vmem:[#allocation3] sm:$0x1]
        %v339 = vsel %vm337, 0, %v338
        %340 = vst [vmem:[#allocation3] sm:$0x1] %v339
        %v341 = vld [vmem:[#allocation3 + $0xc] sm:$0x1]
        %v342 = vsel %vm337, 0, %v341
        %343 = vst [vmem:[#allocation3 + $0xc] sm:$0x1] %v342
        %v344 = vld [vmem:[#allocation3 + $0x18] sm:$0x1]
        %v345 = vsel %vm337, 0, %v344
        %346 = vst [vmem:[#allocation3 + $0x18] sm:$0x1] %v345
        %v347 = vld [vmem:[#allocation3 + $0x24] sm:$0x1]
        %v348 = vsel %vm337, 0, %v347
        %349 = vst [vmem:[#allocation3 + $0x24] sm:$0x1] %v348
        %v350 = vld [vmem:[#allocation3 + $0x30] sm:$0x1]
        %v351 = vsel %vm337, 0, %v350
        %352 = vst [vmem:[#allocation3 + $0x30] sm:$0x1] %v351
        %v353 = vld [vmem:[#allocation3 + $0x3c] sm:$0x1]
        %v354 = vsel %vm337, 0, %v353
        %355 = vst [vmem:[#allocation3 + $0x3c] sm:$0x1] %v354
        %v356 = vld [vmem:[#allocation3 + $0x48] sm:$0x1]
        %v357 = vsel %vm337, 0, %v356
        %358 = vst [vmem:[#allocation3 + $0x48] sm:$0x1] %v357
        %v359 = vld [vmem:[#allocation3 + $0x54] sm:$0x1]
        %v360 = vsel %vm337, 0, %v359
        %361 = vst [vmem:[#allocation3 + $0x54] sm:$0x1] %v360
        %vm362 = vmand %vm336, %vm310
        %v363 = vld [vmem:[#allocation3 + $0x8] sm:$0x1]
        %v364 = vsel %vm362, 0, %v363
        %365 = vst [vmem:[#allocation3 + $0x8] sm:$0x1] %v364
        %v366 = vld [vmem:[#allocation3 + $0x14] sm:$0x1]
        %v367 = vsel %vm362, 0, %v366
        %368 = vst [vmem:[#allocation3 + $0x14] sm:$0x1] %v367
        %v369 = vld [vmem:[#allocation3 + $0x20] sm:$0x1]
        %v370 = vsel %vm362, 0, %v369
        %371 = vst [vmem:[#allocation3 + $0x20] sm:$0x1] %v370
        %v372 = vld [vmem:[#allocation3 + $0x2c] sm:$0x1]
        %v373 = vsel %vm362, 0, %v372
        %374 = vst [vmem:[#allocation3 + $0x2c] sm:$0x1] %v373
        %v375 = vld [vmem:[#allocation3 + $0x38] sm:$0x1]
        %v376 = vsel %vm362, 0, %v375
        %377 = vst [vmem:[#allocation3 + $0x38] sm:$0x1] %v376
        %v378 = vld [vmem:[#allocation3 + $0x44] sm:$0x1]
        %v379 = vsel %vm362, 0, %v378
        %380 = vst [vmem:[#allocation3 + $0x44] sm:$0x1] %v379
        %v381 = vld [vmem:[#allocation3 + $0x50] sm:$0x1]
        %v382 = vsel %vm362, 0, %v381
        %383 = vst [vmem:[#allocation3 + $0x50] sm:$0x1] %v382
        %v384 = vld [vmem:[#allocation3 + $0x5c] sm:$0x1]
        %v385 = vsel %vm362, 0, %v384
        %386 = vst [vmem:[#allocation3 + $0x5c] sm:$0x1] %v385
        %v387 = vld [vmem:[#allocation4] sm:$0x1]
        %v388 = vsel %vm337, 0, %v387
        %389 = vst [vmem:[#allocation4] sm:$0x1] %v388
        %v390 = vld [vmem:[#allocation4 + $0xc] sm:$0x1]
        %v391 = vsel %vm337, 0, %v390
        %392 = vst [vmem:[#allocation4 + $0xc] sm:$0x1] %v391
        %v393 = vld [vmem:[#allocation4 + $0x18] sm:$0x1]
        %v394 = vsel %vm337, 0, %v393
        %395 = vst [vmem:[#allocation4 + $0x18] sm:$0x1] %v394
        %v396 = vld [vmem:[#allocation4 + $0x24] sm:$0x1]
        %v397 = vsel %vm337, 0, %v396
        %398 = vst [vmem:[#allocation4 + $0x24] sm:$0x1] %v397
        %v399 = vld [vmem:[#allocation4 + $0x30] sm:$0x1]
        %v400 = vsel %vm337, 0, %v399
        %401 = vst [vmem:[#allocation4 + $0x30] sm:$0x1] %v400
        %v402 = vld [vmem:[#allocation4 + $0x3c] sm:$0x1]
        %v403 = vsel %vm337, 0, %v402
        %404 = vst [vmem:[#allocation4 + $0x3c] sm:$0x1] %v403
        %v405 = vld [vmem:[#allocation4 + $0x48] sm:$0x1]
        %v406 = vsel %vm337, 0, %v405
        %407 = vst [vmem:[#allocation4 + $0x48] sm:$0x1] %v406
        %v408 = vld [vmem:[#allocation4 + $0x54] sm:$0x1]
        %v409 = vsel %vm337, 0, %v408
        %410 = vst [vmem:[#allocation4 + $0x54] sm:$0x1] %v409
        %v411 = vld [vmem:[#allocation4 + $0x8] sm:$0x1]
        %v412 = vsel %vm362, 0, %v411
        %413 = vst [vmem:[#allocation4 + $0x8] sm:$0x1] %v412
        %v414 = vld [vmem:[#allocation4 + $0x14] sm:$0x1]
        %v415 = vsel %vm362, 0, %v414
        %416 = vst [vmem:[#allocation4 + $0x14] sm:$0x1] %v415
        %v417 = vld [vmem:[#allocation4 + $0x20] sm:$0x1]
        %v418 = vsel %vm362, 0, %v417
        %419 = vst [vmem:[#allocation4 + $0x20] sm:$0x1] %v418
        %v420 = vld [vmem:[#allocation4 + $0x2c] sm:$0x1]
        %v421 = vsel %vm362, 0, %v420
        %422 = vst [vmem:[#allocation4 + $0x2c] sm:$0x1] %v421
        %v423 = vld [vmem:[#allocation4 + $0x38] sm:$0x1]
        %v424 = vsel %vm362, 0, %v423
        %425 = vst [vmem:[#allocation4 + $0x38] sm:$0x1] %v424
        %v426 = vld [vmem:[#allocation4 + $0x44] sm:$0x1]
        %v427 = vsel %vm362, 0, %v426
        %428 = vst [vmem:[#allocation4 + $0x44] sm:$0x1] %v427
        %v429 = vld [vmem:[#allocation4 + $0x50] sm:$0x1]
        %v430 = vsel %vm362, 0, %v429
        %431 = vst [vmem:[#allocation4 + $0x50] sm:$0x1] %v430
        %v432 = vld [vmem:[#allocation4 + $0x5c] sm:$0x1]
        %v433 = vsel %vm362, 0, %v432
        %434 = vst [vmem:[#allocation4 + $0x5c] sm:$0x1] %v433
        %v435 = vld [vmem:[%s280] sm:$0xff]
        %v436 = vld [vmem:[%s280 + $0x8] sm:$0xff]
        %v437 = vld [vmem:[%s280 + $0x10] sm:$0xff]
        %v438 = vld [vmem:[%s280 + $0x18] sm:$0xff]
        %v439 = vld [vmem:[%s280 + $0x20] sm:$0xff]
        %v440 = vld [vmem:[%s280 + $0x28] sm:$0xff]
        %v441 = vld [vmem:[%s280 + $0x30] sm:$0xff]
        %v442 = vld [vmem:[%s280 + $0x38] sm:$0xff]
        %v443 = vld [vmem:[%s280 + $0x40] sm:$0xff]
        %v444 = vld [vmem:[%s280 + $0x48] sm:$0xff]
        %v445 = vld [vmem:[%s280 + $0x50] sm:$0xff]
        %v446 = vld [vmem:[%s280 + $0x58] sm:$0xff]
        %v447 = vld [vmem:[%s280 + $0x60] sm:$0xff]
        %v448 = vld [vmem:[%s280 + $0x68] sm:$0xff]
        %v449 = vld [vmem:[%s280 + $0x70] sm:$0xff]
        %v450 = vld [vmem:[%s280 + $0x78] sm:$0xff]
        %v451 = vpack.c.bf16 %v436, %v435
        %v452 = vpack.c.bf16 %v438, %v437
        %v453 = vpack.c.bf16 %v440, %v439
        %v454 = vpack.c.bf16 %v442, %v441
        %v455 = vpack.c.bf16 %v444, %v443
        %v456 = vpack.c.bf16 %v446, %v445
        %v457 = vpack.c.bf16 %v448, %v447
        %v458 = vpack.c.bf16 %v450, %v449
        %v467 = vunpack.c.l.b16 %v451
        %v468 = vunpack.c.h.b16 %v451
        %v469 = vunpack.c.l.b16 %v452
        %v470 = vunpack.c.h.b16 %v452
        %v471 = vunpack.c.l.b16 %v453
        %v472 = vunpack.c.h.b16 %v453
        %v473 = vunpack.c.l.b16 %v454
        %v474 = vunpack.c.h.b16 %v454
        %v475 = vunpack.c.l.b16 %v455
        %v476 = vunpack.c.h.b16 %v455
        %v477 = vunpack.c.l.b16 %v456
        %v478 = vunpack.c.h.b16 %v456
        %v479 = vunpack.c.l.b16 %v457
        %v480 = vunpack.c.h.b16 %v457
        %v481 = vunpack.c.l.b16 %v458
        %v482 = vunpack.c.h.b16 %v458
        %v483 = vpack.c.b16 %v467, %v467
        %v484 = vpack.c.b16 %v468, %v468
        %v485 = vpack.c.b16 %v469, %v469
        %v486 = vpack.c.b16 %v470, %v470
        %v487 = vpack.c.b16 %v471, %v471
        %v488 = vpack.c.b16 %v472, %v472
        %v489 = vpack.c.b16 %v473, %v473
        %v490 = vpack.c.b16 %v474, %v474
        %v491 = vpack.c.b16 %v475, %v475
        %v492 = vpack.c.b16 %v476, %v476
        %v493 = vpack.c.b16 %v477, %v477
        %v494 = vpack.c.b16 %v478, %v478
        %v495 = vpack.c.b16 %v479, %v479
        %v496 = vpack.c.b16 %v480, %v480
        %v497 = vpack.c.b16 %v481, %v481
        %v498 = vpack.c.b16 %v482, %v482
        %vm499 = vsmask.f32 4368
        %vm500 = vmor %vm284, %vm499
        %v502 = vshrl.u32 %v483, 16
        %v504 = vrot.slane %v502, 7
        %v505 = vshll.u32 %v483, 16
        %v507 = vor.u32 %v504, %v505
        %v508 = vrot.slane %v504, 4
        %v510 = vshrl.u32 %v484, 16
        %v512 = vrot.slane %v510, 7
        %v513 = vshll.u32 %v484, 16
        %v515 = vor.u32 %v512, %v513
        %v516 = vsel %vm500, %v508, %v515
        %v517 = vrot.slane %v512, 4
        %v519 = vshrl.u32 %v485, 16
        %v521 = vrot.slane %v519, 7
        %v522 = vshll.u32 %v485, 16
        %v524 = vor.u32 %v521, %v522
        %v525 = vrot.slane %v521, 4
        %v527 = vshrl.u32 %v486, 16
        %v529 = vrot.slane %v527, 7
        %v530 = vshll.u32 %v486, 16
        %v532 = vor.u32 %v529, %v530
        %v533 = vsel %vm500, %v525, %v532
        %v534 = vrot.slane %v529, 4
        %v536 = vshrl.u32 %v487, 16
        %v538 = vrot.slane %v536, 7
        %v539 = vshll.u32 %v487, 16
        %v541 = vor.u32 %v538, %v539
        %v542 = vrot.slane %v538, 4
        %v544 = vshrl.u32 %v488, 16
        %v546 = vrot.slane %v544, 7
        %v547 = vshll.u32 %v488, 16
        %v549 = vor.u32 %v546, %v547
        %v550 = vsel %vm500, %v542, %v549
        %v551 = vrot.slane %v546, 4
        %v553 = vshrl.u32 %v489, 16
        %v555 = vrot.slane %v553, 7
        %v556 = vshll.u32 %v489, 16
        %v558 = vor.u32 %v555, %v556
        %v559 = vrot.slane %v555, 4
        %v561 = vshrl.u32 %v490, 16
        %v563 = vrot.slane %v561, 7
        %v564 = vshll.u32 %v490, 16
        %v566 = vor.u32 %v563, %v564
        %v567 = vsel %vm500, %v559, %v566
        %v568 = vrot.slane %v563, 4
        %v570 = vshrl.u32 %v491, 16
        %v572 = vrot.slane %v570, 7
        %v573 = vshll.u32 %v491, 16
        %v575 = vor.u32 %v572, %v573
        %v576 = vrot.slane %v572, 4
        %v578 = vshrl.u32 %v492, 16
        %v580 = vrot.slane %v578, 7
        %v581 = vshll.u32 %v492, 16
        %v583 = vor.u32 %v580, %v581
        %v584 = vsel %vm500, %v576, %v583
        %v585 = vrot.slane %v580, 4
        %v587 = vshrl.u32 %v493, 16
        %v589 = vrot.slane %v587, 7
        %v590 = vshll.u32 %v493, 16
        %v592 = vor.u32 %v589, %v590
        %v593 = vrot.slane %v589, 4
        %v595 = vshrl.u32 %v494, 16
        %v597 = vrot.slane %v595, 7
        %v598 = vshll.u32 %v494, 16
        %v600 = vor.u32 %v597, %v598
        %v601 = vsel %vm500, %v593, %v600
        %v602 = vrot.slane %v597, 4
        %v604 = vshrl.u32 %v495, 16
        %v606 = vrot.slane %v604, 7
        %v607 = vshll.u32 %v495, 16
        %v609 = vor.u32 %v606, %v607
        %v610 = vrot.slane %v606, 4
        %v612 = vshrl.u32 %v496, 16
        %v614 = vrot.slane %v612, 7
        %v615 = vshll.u32 %v496, 16
        %v617 = vor.u32 %v614, %v615
        %v618 = vsel %vm500, %v610, %v617
        %v619 = vrot.slane %v614, 4
        %v621 = vshrl.u32 %v497, 16
        %v623 = vrot.slane %v621, 7
        %v624 = vshll.u32 %v497, 16
        %v626 = vor.u32 %v623, %v624
        %v627 = vrot.slane %v623, 4
        %v629 = vshrl.u32 %v498, 16
        %v631 = vrot.slane %v629, 7
        %v632 = vshll.u32 %v498, 16
        %v634 = vor.u32 %v631, %v632
        %v635 = vsel %vm500, %v627, %v634
        %v636 = vrot.slane %v631, 4
        %vm661 = vcmask 27648
        %vm662 = vmand %vm661, %vm310
        %v663 = vld [vmem:[#allocation2] sm:$0xf]
        %v664 = vsel %vm662, %v507, %v663
        %665 = vst [vmem:[#allocation2] sm:$0xf] %v664
        %vm666 = vcmask 27648
        %667 = vst.msk [vmem:[#allocation2 + $0x4] sm:$0xf] %vm666, %v516
        %v668 = vld [vmem:[#allocation2 + $0x8] sm:$0x1]
        %v669 = vsel %vm285, %v517, %v668
        %670 = vst [vmem:[#allocation2 + $0x8] sm:$0x1] %v669
        %v671 = vld [vmem:[#allocation2 + $0xc] sm:$0xf]
        %v672 = vsel %vm662, %v524, %v671
        %673 = vst [vmem:[#allocation2 + $0xc] sm:$0xf] %v672
        %674 = vst.msk [vmem:[#allocation2 + $0x10] sm:$0xf] %vm666, %v533
        %v675 = vld [vmem:[#allocation2 + $0x14] sm:$0x1]
        %v676 = vsel %vm285, %v534, %v675
        %677 = vst [vmem:[#allocation2 + $0x14] sm:$0x1] %v676
        %v678 = vld [vmem:[#allocation2 + $0x18] sm:$0xf]
        %v679 = vsel %vm662, %v541, %v678
        %680 = vst [vmem:[#allocation2 + $0x18] sm:$0xf] %v679
        %681 = vst.msk [vmem:[#allocation2 + $0x1c] sm:$0xf] %vm666, %v550
        %v682 = vld [vmem:[#allocation2 + $0x20] sm:$0x1]
        %v683 = vsel %vm285, %v551, %v682
        %684 = vst [vmem:[#allocation2 + $0x20] sm:$0x1] %v683
        %v685 = vld [vmem:[#allocation2 + $0x24] sm:$0xf]
        %v686 = vsel %vm662, %v558, %v685
        %687 = vst [vmem:[#allocation2 + $0x24] sm:$0xf] %v686
        %688 = vst.msk [vmem:[#allocation2 + $0x28] sm:$0xf] %vm666, %v567
        %v689 = vld [vmem:[#allocation2 + $0x2c] sm:$0x1]
        %v690 = vsel %vm285, %v568, %v689
        %691 = vst [vmem:[#allocation2 + $0x2c] sm:$0x1] %v690
        %v692 = vld [vmem:[#allocation2 + $0x30] sm:$0xf]
        %v693 = vsel %vm662, %v575, %v692
        %694 = vst [vmem:[#allocation2 + $0x30] sm:$0xf] %v693
        %695 = vst.msk [vmem:[#allocation2 + $0x34] sm:$0xf] %vm666, %v584
        %v696 = vld [vmem:[#allocation2 + $0x38] sm:$0x1]
        %v697 = vsel %vm285, %v585, %v696
        %698 = vst [vmem:[#allocation2 + $0x38] sm:$0x1] %v697
        %v699 = vld [vmem:[#allocation2 + $0x3c] sm:$0xf]
        %v700 = vsel %vm662, %v592, %v699
        %701 = vst [vmem:[#allocation2 + $0x3c] sm:$0xf] %v700
        %702 = vst.msk [vmem:[#allocation2 + $0x40] sm:$0xf] %vm666, %v601
        %v703 = vld [vmem:[#allocation2 + $0x44] sm:$0x1]
        %v704 = vsel %vm285, %v602, %v703
        %705 = vst [vmem:[#allocation2 + $0x44] sm:$0x1] %v704
        %v706 = vld [vmem:[#allocation2 + $0x48] sm:$0xf]
        %v707 = vsel %vm662, %v609, %v706
        %708 = vst [vmem:[#allocation2 + $0x48] sm:$0xf] %v707
        %709 = vst.msk [vmem:[#allocation2 + $0x4c] sm:$0xf] %vm666, %v618
        %v710 = vld [vmem:[#allocation2 + $0x50] sm:$0x1]
        %v711 = vsel %vm285, %v619, %v710
        %712 = vst [vmem:[#allocation2 + $0x50] sm:$0x1] %v711
        %v713 = vld [vmem:[#allocation2 + $0x54] sm:$0xf]
        %v714 = vsel %vm662, %v626, %v713
        %715 = vst [vmem:[#allocation2 + $0x54] sm:$0xf] %v714
        %716 = vst.msk [vmem:[#allocation2 + $0x58] sm:$0xf] %vm666, %v635
        %v717 = vld [vmem:[#allocation2 + $0x5c] sm:$0x1]
        %v718 = vsel %vm285, %v636, %v717
        %719 = vst [vmem:[#allocation2 + $0x5c] sm:$0x1] %v718
        %v720 = vld [vmem:[%s4] sm:$0x1]
        %v721 = vld [vmem:[#allocation2] sm:$0xf]
        %v722 = vld [vmem:[#allocation2 + $0x4] sm:$0xf]
        %v723 = vld [vmem:[#allocation2 + $0xc] sm:$0xf]
        %v724 = vld [vmem:[#allocation2 + $0x10] sm:$0xf]
        %v725 = vld [vmem:[#allocation2 + $0x18] sm:$0xf]
        %v726 = vld [vmem:[#allocation2 + $0x1c] sm:$0xf]
        %v727 = vld [vmem:[#allocation2 + $0x24] sm:$0xf]
        %v728 = vld [vmem:[#allocation2 + $0x28] sm:$0xf]
        %v729 = vld [vmem:[#allocation2 + $0x30] sm:$0xf]
        %v730 = vld [vmem:[#allocation2 + $0x34] sm:$0xf]
        %v731 = vld [vmem:[#allocation2 + $0x3c] sm:$0xf]
        %v732 = vld [vmem:[#allocation2 + $0x40] sm:$0xf]
        %v733 = vld [vmem:[#allocation2 + $0x48] sm:$0xf]
        %v734 = vld [vmem:[#allocation2 + $0x4c] sm:$0xf]
        %v735 = vld [vmem:[#allocation2 + $0x54] sm:$0xf]
        %v736 = vld [vmem:[#allocation2 + $0x58] sm:$0xf]
        %v737 = vld [vmem:[%s1] sm:$0x3]
        %v738 = vld [vmem:[#allocation2 + $0x8] sm:$0x1]
        %v739 = vld [vmem:[#allocation2 + $0x14] sm:$0x1]
        %v740 = vld [vmem:[#allocation2 + $0x20] sm:$0x1]
        %v741 = vld [vmem:[#allocation2 + $0x2c] sm:$0x1]
        %v742 = vld [vmem:[#allocation2 + $0x38] sm:$0x1]
        %v743 = vld [vmem:[#allocation2 + $0x44] sm:$0x1]
        %v744 = vld [vmem:[#allocation2 + $0x50] sm:$0x1]
        %v745 = vld [vmem:[#allocation2 + $0x5c] sm:$0x1]
        %vm746 = vsmask.f32 3328
        %vm747 = vsmask.f32 7440
        %vm748 = vmor %vm746, %vm747
        %v750 = vshrl.u32 %v721, 16
        %v752 = vrot.slane %v750, 4
        %v753 = vshll.u32 %v721, 16
        %v755 = vrot.slane %v753, 5
        %v756 = vor.u32 %v752, %v755
        %v757 = vrot.slane %v756, 4
        %v759 = vshll.u32 %v722, 16
        %v761 = vrot.slane %v759, 5
        %v762 = vsel %vm748, %v757, %v761
        %v763 = vshrl.u32 %v722, 16
        %v765 = vrot.slane %v763, 4
        %v766 = vor.u32 %v765, %v761
        %v767 = vrot.slane %v766, 4
        %v769 = vshll.u32 %v738, 16
        %v771 = vrot.slane %v769, 5
        %v772 = vsel %vm748, %v767, %v771
        %v774 = vshrl.u32 %v723, 16
        %v776 = vrot.slane %v774, 4
        %v777 = vshll.u32 %v723, 16
        %v779 = vrot.slane %v777, 5
        %v780 = vor.u32 %v776, %v779
        %v781 = vrot.slane %v780, 4
        %v783 = vshll.u32 %v724, 16
        %v785 = vrot.slane %v783, 5
        %v786 = vsel %vm748, %v781, %v785
        %v787 = vshrl.u32 %v724, 16
        %v789 = vrot.slane %v787, 4
        %v790 = vor.u32 %v789, %v785
        %v791 = vrot.slane %v790, 4
        %v793 = vshll.u32 %v739, 16
        %v795 = vrot.slane %v793, 5
        %v796 = vsel %vm748, %v791, %v795
        %v798 = vshrl.u32 %v725, 16
        %v800 = vrot.slane %v798, 4
        %v801 = vshll.u32 %v725, 16
        %v803 = vrot.slane %v801, 5
        %v804 = vor.u32 %v800, %v803
        %v805 = vrot.slane %v804, 4
        %v807 = vshll.u32 %v726, 16
        %v809 = vrot.slane %v807, 5
        %v810 = vsel %vm748, %v805, %v809
        %v811 = vshrl.u32 %v726, 16
        %v813 = vrot.slane %v811, 4
        %v814 = vor.u32 %v813, %v809
        %v815 = vrot.slane %v814, 4
        %v817 = vshll.u32 %v740, 16
        %v819 = vrot.slane %v817, 5
        %v820 = vsel %vm748, %v815, %v819
        %v822 = vshrl.u32 %v727, 16
        %v824 = vrot.slane %v822, 4
        %v825 = vshll.u32 %v727, 16
        %v827 = vrot.slane %v825, 5
        %v828 = vor.u32 %v824, %v827
        %v829 = vrot.slane %v828, 4
        %v831 = vshll.u32 %v728, 16
        %v833 = vrot.slane %v831, 5
        %v834 = vsel %vm748, %v829, %v833
        %v835 = vshrl.u32 %v728, 16
        %v837 = vrot.slane %v835, 4
        %v838 = vor.u32 %v837, %v833
        %v839 = vrot.slane %v838, 4
        %v841 = vshll.u32 %v741, 16
        %v843 = vrot.slane %v841, 5
        %v844 = vsel %vm748, %v839, %v843
        %v846 = vshrl.u32 %v729, 16
        %v848 = vrot.slane %v846, 4
        %v849 = vshll.u32 %v729, 16
        %v851 = vrot.slane %v849, 5
        %v852 = vor.u32 %v848, %v851
        %v853 = vrot.slane %v852, 4
        %v855 = vshll.u32 %v730, 16
        %v857 = vrot.slane %v855, 5
        %v858 = vsel %vm748, %v853, %v857
        %v859 = vshrl.u32 %v730, 16
        %v861 = vrot.slane %v859, 4
        %v862 = vor.u32 %v861, %v857
        %v863 = vrot.slane %v862, 4
        %v865 = vshll.u32 %v742, 16
        %v867 = vrot.slane %v865, 5
        %v868 = vsel %vm748, %v863, %v867
        %v870 = vshrl.u32 %v731, 16
        %v872 = vrot.slane %v870, 4
        %v873 = vshll.u32 %v731, 16
        %v875 = vrot.slane %v873, 5
        %v876 = vor.u32 %v872, %v875
        %v877 = vrot.slane %v876, 4
        %v879 = vshll.u32 %v732, 16
        %v881 = vrot.slane %v879, 5
        %v882 = vsel %vm748, %v877, %v881
        %v883 = vshrl.u32 %v732, 16
        %v885 = vrot.slane %v883, 4
        %v886 = vor.u32 %v885, %v881
        %v887 = vrot.slane %v886, 4
        %v889 = vshll.u32 %v743, 16
        %v891 = vrot.slane %v889, 5
        %v892 = vsel %vm748, %v887, %v891
        %v894 = vshrl.u32 %v733, 16
        %v896 = vrot.slane %v894, 4
        %v897 = vshll.u32 %v733, 16
        %v899 = vrot.slane %v897, 5
        %v900 = vor.u32 %v896, %v899
        %v901 = vrot.slane %v900, 4
        %v903 = vshll.u32 %v734, 16
        %v905 = vrot.slane %v903, 5
        %v906 = vsel %vm748, %v901, %v905
        %v907 = vshrl.u32 %v734, 16
        %v909 = vrot.slane %v907, 4
        %v910 = vor.u32 %v909, %v905
        %v911 = vrot.slane %v910, 4
        %v913 = vshll.u32 %v744, 16
        %v915 = vrot.slane %v913, 5
        %v916 = vsel %vm748, %v911, %v915
        %v918 = vshrl.u32 %v735, 16
        %v920 = vrot.slane %v918, 4
        %v921 = vshll.u32 %v735, 16
        %v923 = vrot.slane %v921, 5
        %v924 = vor.u32 %v920, %v923
        %v925 = vrot.slane %v924, 4
        %v927 = vshll.u32 %v736, 16
        %v929 = vrot.slane %v927, 5
        %v930 = vsel %vm748, %v925, %v929
        %v931 = vshrl.u32 %v736, 16
        %v933 = vrot.slane %v931, 4
        %v934 = vor.u32 %v933, %v929
        %v935 = vrot.slane %v934, 4
        %v937 = vshll.u32 %v745, 16
        %v939 = vrot.slane %v937, 5
        %v940 = vsel %vm748, %v935, %v939
        %s941 = scalar_lea.vmem %s1, 2
        %v942 = vld [vmem:[%s941] sm:$0x3]
        %v943 = vunpack.c.l.b16 %v762
        %v944 = vunpack.c.l.b16 %v772
        %v945 = vunpack.c.l.b16 %v786
        %v946 = vunpack.c.l.b16 %v796
        %v947 = vunpack.c.l.b16 %v810
        %v948 = vunpack.c.l.b16 %v820
        %v949 = vunpack.c.l.b16 %v834
        %v950 = vunpack.c.l.b16 %v844
        %v951 = vunpack.c.l.b16 %v858
        %v952 = vunpack.c.l.b16 %v868
        %v953 = vunpack.c.l.b16 %v882
        %v954 = vunpack.c.l.b16 %v892
        %v955 = vunpack.c.l.b16 %v906
        %v956 = vunpack.c.l.b16 %v916
        %v957 = vunpack.c.l.b16 %v930
        %v958 = vunpack.c.l.b16 %v940
        %v959 = vpack.c.b16 %v944, %v943
        %v960 = vpack.c.b16 %v946, %v945
        %v961 = vpack.c.b16 %v948, %v947
        %v962 = vpack.c.b16 %v950, %v949
        %v963 = vpack.c.b16 %v952, %v951
        %v964 = vpack.c.b16 %v954, %v953
        %v965 = vpack.c.b16 %v956, %v955
        %v966 = vpack.c.b16 %v958, %v957
        %vm967 = vcmask 31744
        %v969 = vsel %vm967, %v959, 0
        %v972 = vsel %vm967, %v960, 0
        %v975 = vsel %vm967, %v961, 0
        %v978 = vsel %vm967, %v962, 0
        %v981 = vsel %vm967, %v963, 0
        %v984 = vsel %vm967, %v964, 0
        %v987 = vsel %vm967, %v965, 0
        %v990 = vsel %vm967, %v966, 0
        %vm992 = vcmask 1041408
        %v994 = vsel %vm992, %v942, 0
        %996 = vmatprep.subr.bf16.mxu0 0
        %997 = vmatpush1.bf16.msra.mxu0 %v994
        %998 = vmatprep.subr.bf16.mxu0 0
        %999 = vmatpush1.bf16.msra.mxu0 0
        %1000 = vmatprep.subr.bf16.mxu0 0
        %1001 = vmatpush1.bf16.msra.mxu0 0
        %1002 = vmatprep.subr.bf16.mxu0 0
        %1003 = vmatpush1.bf16.msra.mxu0 0
        %1004 = vmatprep.subr.bf16.mxu0 0
        %1005 = vmatpush1.bf16.msra.mxu0 0
        %1006 = vmatprep.subr.bf16.mxu0 0
        %1007 = vmatpush1.bf16.msra.mxu0 0
        %1008 = vmatprep.subr.bf16.mxu0 0
        %1009 = vmatpush1.bf16.msra.mxu0 0
        %1010 = vmatprep.subr.bf16.mxu0 0
        %1011 = vmatpush1.bf16.msra.mxu0 0
        %1012 = vmatprep.subr.bf16.mxu0 0
        %1013 = vmatpush1.bf16.msra.mxu0 0
        %1014 = vmatprep.subr.bf16.mxu0 0
        %1015 = vmatpush1.bf16.msra.mxu0 0
        %1016 = vmatprep.subr.bf16.mxu0 0
        %1017 = vmatpush1.bf16.msra.mxu0 0
        %1018 = vmatprep.subr.bf16.mxu0 0
        %1019 = vmatpush1.bf16.msra.mxu0 0
        %1020 = vmatprep.subr.bf16.mxu0 0
        %1021 = vmatpush1.bf16.msra.mxu0 0
        %1022 = vmatprep.subr.bf16.mxu0 0
        %1023 = vmatpush1.bf16.msra.mxu0 0
        %1024 = vmatprep.subr.bf16.mxu0 0
        %1025 = vmatpush1.bf16.msra.mxu0 0
        %1026 = vmatprep.subr.bf16.mxu0 0
        %1027 = vmatpush1.bf16.msra.mxu0 0
        %1028 = vmatprep.mubr.bf16.mxu0 0
        %1029 = vmatmul.mubr.bf16.gmra.mrb[0].mxu0 %v969
        %v1030 = vpop.f32.mrb[0].mxu0
        %v1031 = vadd.f32 0.0, %v1030
        %v1032 = vpop.f32.mrb[0].mxu0
        %v1033 = vpop.f32.mrb[0].mxu0
        %v1034 = vadd.f32 0.0, %v1033
        %v1035 = vpop.f32.mrb[0].mxu0
        %1036 = vmatprep.mubr.bf16.mxu0 0
        %1037 = vmatmul.mubr.bf16.gmra.mrb[0].mxu0 %v972
        %v1038 = vpop.f32.mrb[0].mxu0
        %v1039 = vadd.f32 0.0, %v1038
        %v1040 = vpop.f32.mrb[0].mxu0
        %v1041 = vpop.f32.mrb[0].mxu0
        %v1042 = vadd.f32 0.0, %v1041
        %v1043 = vpop.f32.mrb[0].mxu0
        %1044 = vmatprep.mubr.bf16.mxu0 0
        %1045 = vmatmul.mubr.bf16.gmra.mrb[0].mxu0 %v975
        %v1046 = vpop.f32.mrb[0].mxu0
        %v1047 = vadd.f32 0.0, %v1046
        %v1048 = vpop.f32.mrb[0].mxu0
        %v1049 = vpop.f32.mrb[0].mxu0
        %v1050 = vadd.f32 0.0, %v1049
        %v1051 = vpop.f32.mrb[0].mxu0
        %1052 = vmatprep.mubr.bf16.mxu0 0
        %1053 = vmatmul.mubr.bf16.gmra.mrb[0].mxu0 %v978
        %v1054 = vpop.f32.mrb[0].mxu0
        %v1055 = vadd.f32 0.0, %v1054
        %v1056 = vpop.f32.mrb[0].mxu0
        %v1057 = vpop.f32.mrb[0].mxu0
        %v1058 = vadd.f32 0.0, %v1057
        %v1059 = vpop.f32.mrb[0].mxu0
        %1060 = vmatprep.mubr.bf16.mxu0 0
        %1061 = vmatmul.mubr.bf16.gmra.mrb[0].mxu0 %v981
        %v1062 = vpop.f32.mrb[0].mxu0
        %v1063 = vadd.f32 0.0, %v1062
        %v1064 = vpop.f32.mrb[0].mxu0
        %v1065 = vpop.f32.mrb[0].mxu0
        %v1066 = vadd.f32 0.0, %v1065
        %v1067 = vpop.f32.mrb[0].mxu0
        %1068 = vmatprep.mubr.bf16.mxu0 0
        %1069 = vmatmul.mubr.bf16.gmra.mrb[0].mxu0 %v984
        %v1070 = vpop.f32.mrb[0].mxu0
        %v1071 = vadd.f32 0.0, %v1070
        %v1072 = vpop.f32.mrb[0].mxu0
        %v1073 = vpop.f32.mrb[0].mxu0
        %v1074 = vadd.f32 0.0, %v1073
        %v1075 = vpop.f32.mrb[0].mxu0
        %1076 = vmatprep.mubr.bf16.mxu0 0
        %1077 = vmatmul.mubr.bf16.gmra.mrb[0].mxu0 %v987
        %v1078 = vpop.f32.mrb[0].mxu0
        %v1079 = vadd.f32 0.0, %v1078
        %v1080 = vpop.f32.mrb[0].mxu0
        %v1081 = vpop.f32.mrb[0].mxu0
        %v1082 = vadd.f32 0.0, %v1081
        %v1083 = vpop.f32.mrb[0].mxu0
        %1084 = vmatprep.mubr.bf16.mxu0 0
        %1085 = vmatmul.mubr.bf16.gmra.mrb[0].mxu0 %v990
        %v1086 = vpop.f32.mrb[0].mxu0
        %v1087 = vadd.f32 0.0, %v1086
        %v1088 = vpop.f32.mrb[0].mxu0
        %v1089 = vpop.f32.mrb[0].mxu0
        %v1090 = vadd.f32 0.0, %v1089
        %v1091 = vpop.f32.mrb[0].mxu0
        %1092 = vdwg.mxu0
        %v1109 = vunpack.c.l.b16 %v721
        %v1110 = vunpack.c.l.b16 %v722
        %v1111 = vunpack.c.l.b16 %v723
        %v1112 = vunpack.c.l.b16 %v724
        %v1113 = vunpack.c.l.b16 %v725
        %v1114 = vunpack.c.l.b16 %v726
        %v1115 = vunpack.c.l.b16 %v727
        %v1116 = vunpack.c.l.b16 %v728
        %v1117 = vunpack.c.l.b16 %v729
        %v1118 = vunpack.c.l.b16 %v730
        %v1119 = vunpack.c.l.b16 %v731
        %v1120 = vunpack.c.l.b16 %v732
        %v1121 = vunpack.c.l.b16 %v733
        %v1122 = vunpack.c.l.b16 %v734
        %v1123 = vunpack.c.l.b16 %v735
        %v1124 = vunpack.c.l.b16 %v736
        %v1125 = vpack.c.b16 %v1110, %v1109
        %v1126 = vpack.c.b16 %v1112, %v1111
        %v1127 = vpack.c.b16 %v1114, %v1113
        %v1128 = vpack.c.b16 %v1116, %v1115
        %v1129 = vpack.c.b16 %v1118, %v1117
        %v1130 = vpack.c.b16 %v1120, %v1119
        %v1131 = vpack.c.b16 %v1122, %v1121
        %v1132 = vpack.c.b16 %v1124, %v1123
        %v1134 = vsel %vm967, %v1125, 0
        %v1137 = vsel %vm967, %v1126, 0
        %v1140 = vsel %vm967, %v1127, 0
        %v1143 = vsel %vm967, %v1128, 0
        %v1146 = vsel %vm967, %v1129, 0
        %v1149 = vsel %vm967, %v1130, 0
        %v1152 = vsel %vm967, %v1131, 0
        %v1155 = vsel %vm967, %v1132, 0
        %v1158 = vsel %vm992, %v737, 0
        %1160 = vmatprep.subr.bf16.mxu0 0
        %1161 = vmatpush1.bf16.msra.mxu0 %v1158
        %1162 = vmatprep.subr.bf16.mxu0 0
        %1163 = vmatpush1.bf16.msra.mxu0 0
        %1164 = vmatprep.subr.bf16.mxu0 0
        %1165 = vmatpush1.bf16.msra.mxu0 0
        %1166 = vmatprep.subr.bf16.mxu0 0
        %1167 = vmatpush1.bf16.msra.mxu0 0
        %1168 = vmatprep.subr.bf16.mxu0 0
        %1169 = vmatpush1.bf16.msra.mxu0 0
        %1170 = vmatprep.subr.bf16.mxu0 0
        %1171 = vmatpush1.bf16.msra.mxu0 0
        %1172 = vmatprep.subr.bf16.mxu0 0
        %1173 = vmatpush1.bf16.msra.mxu0 0
        %1174 = vmatprep.subr.bf16.mxu0 0
        %1175 = vmatpush1.bf16.msra.mxu0 0
        %1176 = vmatprep.subr.bf16.mxu0 0
        %1177 = vmatpush1.bf16.msra.mxu0 0
        %1178 = vmatprep.subr.bf16.mxu0 0
        %1179 = vmatpush1.bf16.msra.mxu0 0
        %1180 = vmatprep.subr.bf16.mxu0 0
        %1181 = vmatpush1.bf16.msra.mxu0 0
        %1182 = vmatprep.subr.bf16.mxu0 0
        %1183 = vmatpush1.bf16.msra.mxu0 0
        %1184 = vmatprep.subr.bf16.mxu0 0
        %1185 = vmatpush1.bf16.msra.mxu0 0
        %1186 = vmatprep.subr.bf16.mxu0 0
        %1187 = vmatpush1.bf16.msra.mxu0 0
        %1188 = vmatprep.subr.bf16.mxu0 0
        %1189 = vmatpush1.bf16.msra.mxu0 0
        %1190 = vmatprep.subr.bf16.mxu0 0
        %1191 = vmatpush1.bf16.msra.mxu0 0
        %1192 = vmatprep.mubr.bf16.mxu0 0
        %1193 = vmatmul.mubr.bf16.gmra.mrb[0].mxu0 %v1134
        %v1194 = vpop.f32.mrb[0].mxu0
        %v1195 = vadd.f32 %v1031, %v1194
        %v1196 = vpop.f32.mrb[0].mxu0
        %v1197 = vpop.f32.mrb[0].mxu0
        %v1198 = vadd.f32 %v1034, %v1197
        %v1199 = vpop.f32.mrb[0].mxu0
        %1200 = vmatprep.mubr.bf16.mxu0 0
        %1201 = vmatmul.mubr.bf16.gmra.mrb[0].mxu0 %v1137
        %v1202 = vpop.f32.mrb[0].mxu0
        %v1203 = vadd.f32 %v1039, %v1202
        %v1204 = vpop.f32.mrb[0].mxu0
        %v1205 = vpop.f32.mrb[0].mxu0
        %v1206 = vadd.f32 %v1042, %v1205
        %v1207 = vpop.f32.mrb[0].mxu0
        %1208 = vmatprep.mubr.bf16.mxu0 0
        %1209 = vmatmul.mubr.bf16.gmra.mrb[0].mxu0 %v1140
        %v1210 = vpop.f32.mrb[0].mxu0
        %v1211 = vadd.f32 %v1047, %v1210
        %v1212 = vpop.f32.mrb[0].mxu0
        %v1213 = vpop.f32.mrb[0].mxu0
        %v1214 = vadd.f32 %v1050, %v1213
        %v1215 = vpop.f32.mrb[0].mxu0
        %1216 = vmatprep.mubr.bf16.mxu0 0
        %1217 = vmatmul.mubr.bf16.gmra.mrb[0].mxu0 %v1143
        %v1218 = vpop.f32.mrb[0].mxu0
        %v1219 = vadd.f32 %v1055, %v1218
        %v1220 = vpop.f32.mrb[0].mxu0
        %v1221 = vpop.f32.mrb[0].mxu0
        %v1222 = vadd.f32 %v1058, %v1221
        %v1223 = vpop.f32.mrb[0].mxu0
        %1224 = vmatprep.mubr.bf16.mxu0 0
        %1225 = vmatmul.mubr.bf16.gmra.mrb[0].mxu0 %v1146
        %v1226 = vpop.f32.mrb[0].mxu0
        %v1227 = vadd.f32 %v1063, %v1226
        %v1228 = vpop.f32.mrb[0].mxu0
        %v1229 = vpop.f32.mrb[0].mxu0
        %v1230 = vadd.f32 %v1066, %v1229
        %v1231 = vpop.f32.mrb[0].mxu0
        %1232 = vmatprep.mubr.bf16.mxu0 0
        %1233 = vmatmul.mubr.bf16.gmra.mrb[0].mxu0 %v1149
        %v1234 = vpop.f32.mrb[0].mxu0
        %v1235 = vadd.f32 %v1071, %v1234
        %v1236 = vpop.f32.mrb[0].mxu0
        %v1237 = vpop.f32.mrb[0].mxu0
        %v1238 = vadd.f32 %v1074, %v1237
        %v1239 = vpop.f32.mrb[0].mxu0
        %1240 = vmatprep.mubr.bf16.mxu0 0
        %1241 = vmatmul.mubr.bf16.gmra.mrb[0].mxu0 %v1152
        %v1242 = vpop.f32.mrb[0].mxu0
        %v1243 = vadd.f32 %v1079, %v1242
        %v1244 = vpop.f32.mrb[0].mxu0
        %v1245 = vpop.f32.mrb[0].mxu0
        %v1246 = vadd.f32 %v1082, %v1245
        %v1247 = vpop.f32.mrb[0].mxu0
        %1248 = vmatprep.mubr.bf16.mxu0 0
        %1249 = vmatmul.mubr.bf16.gmra.mrb[0].mxu0 %v1155
        %v1250 = vpop.f32.mrb[0].mxu0
        %v1251 = vadd.f32 %v1087, %v1250
        %v1252 = vpop.f32.mrb[0].mxu0
        %v1253 = vpop.f32.mrb[0].mxu0
        %v1254 = vadd.f32 %v1090, %v1253
        %v1255 = vpop.f32.mrb[0].mxu0
        %1256 = vdwg.mxu0
        %v1257 = vld [vmem:[#allocation2] sm:$0xe]
        %v1258 = vld [vmem:[#allocation2 + $0xc] sm:$0xe]
        %v1259 = vld [vmem:[#allocation2 + $0x18] sm:$0xe]
        %v1260 = vld [vmem:[#allocation2 + $0x24] sm:$0xe]
        %v1261 = vld [vmem:[#allocation2 + $0x30] sm:$0xe]
        %v1262 = vld [vmem:[#allocation2 + $0x3c] sm:$0xe]
        %v1263 = vld [vmem:[#allocation2 + $0x48] sm:$0xe]
        %v1264 = vld [vmem:[#allocation2 + $0x54] sm:$0xe]
        %vm1281 = vcmask 1042432
        %vm1282 = vcmask 1046532
        %vm1283 = vmor %vm1281, %vm1282
        %v1284 = vrot.slane %v1257, 5
        %v1285 = vrot.slane %v1284, 4
        %v1286 = vrot.slane %v722, 5
        %v1287 = vsel %vm1283, %v1285, %v1286
        %v1288 = vrot.slane %v1286, 4
        %v1289 = vrot.slane %v738, 5
        %v1290 = vsel %vm1283, %v1288, %v1289
        %v1291 = vrot.slane %v1258, 5
        %v1292 = vrot.slane %v1291, 4
        %v1293 = vrot.slane %v724, 5
        %v1294 = vsel %vm1283, %v1292, %v1293
        %v1295 = vrot.slane %v1293, 4
        %v1296 = vrot.slane %v739, 5
        %v1297 = vsel %vm1283, %v1295, %v1296
        %v1298 = vrot.slane %v1259, 5
        %v1299 = vrot.slane %v1298, 4
        %v1300 = vrot.slane %v726, 5
        %v1301 = vsel %vm1283, %v1299, %v1300
        %v1302 = vrot.slane %v1300, 4
        %v1303 = vrot.slane %v740, 5
        %v1304 = vsel %vm1283, %v1302, %v1303
        %v1305 = vrot.slane %v1260, 5
        %v1306 = vrot.slane %v1305, 4
        %v1307 = vrot.slane %v728, 5
        %v1308 = vsel %vm1283, %v1306, %v1307
        %v1309 = vrot.slane %v1307, 4
        %v1310 = vrot.slane %v741, 5
        %v1311 = vsel %vm1283, %v1309, %v1310
        %v1312 = vrot.slane %v1261, 5
        %v1313 = vrot.slane %v1312, 4
        %v1314 = vrot.slane %v730, 5
        %v1315 = vsel %vm1283, %v1313, %v1314
        %v1316 = vrot.slane %v1314, 4
        %v1317 = vrot.slane %v742, 5
        %v1318 = vsel %vm1283, %v1316, %v1317
        %v1319 = vrot.slane %v1262, 5
        %v1320 = vrot.slane %v1319, 4
        %v1321 = vrot.slane %v732, 5
        %v1322 = vsel %vm1283, %v1320, %v1321
        %v1323 = vrot.slane %v1321, 4
        %v1324 = vrot.slane %v743, 5
        %v1325 = vsel %vm1283, %v1323, %v1324
        %v1326 = vrot.slane %v1263, 5
        %v1327 = vrot.slane %v1326, 4
        %v1328 = vrot.slane %v734, 5
        %v1329 = vsel %vm1283, %v1327, %v1328
        %v1330 = vrot.slane %v1328, 4
        %v1331 = vrot.slane %v744, 5
        %v1332 = vsel %vm1283, %v1330, %v1331
        %v1333 = vrot.slane %v1264, 5
        %v1334 = vrot.slane %v1333, 4
        %v1335 = vrot.slane %v736, 5
        %v1336 = vsel %vm1283, %v1334, %v1335
        %v1337 = vrot.slane %v1335, 4
        %v1338 = vrot.slane %v745, 5
        %v1339 = vsel %vm1283, %v1337, %v1338
        %s1340 = scalar_lea.vmem %s1, 4
        %v1341 = vld [vmem:[%s1340] sm:$0x3]
        %v1342 = vunpack.c.l.b16 %v1287
        %v1343 = vunpack.c.l.b16 %v1290
        %v1344 = vunpack.c.l.b16 %v1294
        %v1345 = vunpack.c.l.b16 %v1297
        %v1346 = vunpack.c.l.b16 %v1301
        %v1347 = vunpack.c.l.b16 %v1304
        %v1348 = vunpack.c.l.b16 %v1308
        %v1349 = vunpack.c.l.b16 %v1311
        %v1350 = vunpack.c.l.b16 %v1315
        %v1351 = vunpack.c.l.b16 %v1318
        %v1352 = vunpack.c.l.b16 %v1322
        %v1353 = vunpack.c.l.b16 %v1325
        %v1354 = vunpack.c.l.b16 %v1329
        %v1355 = vunpack.c.l.b16 %v1332
        %v1356 = vunpack.c.l.b16 %v1336
        %v1357 = vunpack.c.l.b16 %v1339
        %v1358 = vpack.c.b16 %v1343, %v1342
        %v1359 = vpack.c.b16 %v1345, %v1344
        %v1360 = vpack.c.b16 %v1347, %v1346
        %v1361 = vpack.c.b16 %v1349, %v1348
        %v1362 = vpack.c.b16 %v1351, %v1350
        %v1363 = vpack.c.b16 %v1353, %v1352
        %v1364 = vpack.c.b16 %v1355, %v1354
        %v1365 = vpack.c.b16 %v1357, %v1356
        %v1367 = vsel %vm967, %v1358, 0
        %v1370 = vsel %vm967, %v1359, 0
        %v1373 = vsel %vm967, %v1360, 0
        %v1376 = vsel %vm967, %v1361, 0
        %v1379 = vsel %vm967, %v1362, 0
        %v1382 = vsel %vm967, %v1363, 0
        %v1385 = vsel %vm967, %v1364, 0
        %v1388 = vsel %vm967, %v1365, 0
        %v1391 = vsel %vm992, %v1341, 0
        %1393 = vmatprep.subr.bf16.mxu0 0
        %1394 = vmatpush1.bf16.msra.mxu0 %v1391
        %1395 = vmatprep.subr.bf16.mxu0 0
        %1396 = vmatpush1.bf16.msra.mxu0 0
        %1397 = vmatprep.subr.bf16.mxu0 0
        %1398 = vmatpush1.bf16.msra.mxu0 0
        %1399 = vmatprep.subr.bf16.mxu0 0
        %1400 = vmatpush1.bf16.msra.mxu0 0
        %1401 = vmatprep.subr.bf16.mxu0 0
        %1402 = vmatpush1.bf16.msra.mxu0 0
        %1403 = vmatprep.subr.bf16.mxu0 0
        %1404 = vmatpush1.bf16.msra.mxu0 0
        %1405 = vmatprep.subr.bf16.mxu0 0
        %1406 = vmatpush1.bf16.msra.mxu0 0
        %1407 = vmatprep.subr.bf16.mxu0 0
        %1408 = vmatpush1.bf16.msra.mxu0 0
        %1409 = vmatprep.subr.bf16.mxu0 0
        %1410 = vmatpush1.bf16.msra.mxu0 0
        %1411 = vmatprep.subr.bf16.mxu0 0
        %1412 = vmatpush1.bf16.msra.mxu0 0
        %1413 = vmatprep.subr.bf16.mxu0 0
        %1414 = vmatpush1.bf16.msra.mxu0 0
        %1415 = vmatprep.subr.bf16.mxu0 0
        %1416 = vmatpush1.bf16.msra.mxu0 0
        %1417 = vmatprep.subr.bf16.mxu0 0
        %1418 = vmatpush1.bf16.msra.mxu0 0
        %1419 = vmatprep.subr.bf16.mxu0 0
        %1420 = vmatpush1.bf16.msra.mxu0 0
        %1421 = vmatprep.subr.bf16.mxu0 0
        %1422 = vmatpush1.bf16.msra.mxu0 0
        %1423 = vmatprep.subr.bf16.mxu0 0
        %1424 = vmatpush1.bf16.msra.mxu0 0
        %1425 = vmatprep.mubr.bf16.mxu0 0
        %1426 = vmatmul.mubr.bf16.gmra.mrb[0].mxu0 %v1367
        %v1427 = vpop.f32.mrb[0].mxu0
        %v1428 = vadd.f32 0.0, %v1427
        %v1429 = vpop.f32.mrb[0].mxu0
        %v1430 = vpop.f32.mrb[0].mxu0
        %v1431 = vadd.f32 0.0, %v1430
        %v1432 = vpop.f32.mrb[0].mxu0
        %1433 = vmatprep.mubr.bf16.mxu0 0
        %1434 = vmatmul.mubr.bf16.gmra.mrb[0].mxu0 %v1370
        %v1435 = vpop.f32.mrb[0].mxu0
        %v1436 = vadd.f32 0.0, %v1435
        %v1437 = vpop.f32.mrb[0].mxu0
        %v1438 = vpop.f32.mrb[0].mxu0
        %v1439 = vadd.f32 0.0, %v1438
        %v1440 = vpop.f32.mrb[0].mxu0
        %1441 = vmatprep.mubr.bf16.mxu0 0
        %1442 = vmatmul.mubr.bf16.gmra.mrb[0].mxu0 %v1373
        %v1443 = vpop.f32.mrb[0].mxu0
        %v1444 = vadd.f32 0.0, %v1443
        %v1445 = vpop.f32.mrb[0].mxu0
        %v1446 = vpop.f32.mrb[0].mxu0
        %v1447 = vadd.f32 0.0, %v1446
        %v1448 = vpop.f32.mrb[0].mxu0
        %1449 = vmatprep.mubr.bf16.mxu0 0
        %1450 = vmatmul.mubr.bf16.gmra.mrb[0].mxu0 %v1376
        %v1451 = vpop.f32.mrb[0].mxu0
        %v1452 = vadd.f32 0.0, %v1451
        %v1453 = vpop.f32.mrb[0].mxu0
        %v1454 = vpop.f32.mrb[0].mxu0
        %v1455 = vadd.f32 0.0, %v1454
        %v1456 = vpop.f32.mrb[0].mxu0
        %1457 = vmatprep.mubr.bf16.mxu0 0
        %1458 = vmatmul.mubr.bf16.gmra.mrb[0].mxu0 %v1379
        %v1459 = vpop.f32.mrb[0].mxu0
        %v1460 = vadd.f32 0.0, %v1459
        %v1461 = vpop.f32.mrb[0].mxu0
        %v1462 = vpop.f32.mrb[0].mxu0
        %v1463 = vadd.f32 0.0, %v1462
        %v1464 = vpop.f32.mrb[0].mxu0
        %1465 = vmatprep.mubr.bf16.mxu0 0
        %1466 = vmatmul.mubr.bf16.gmra.mrb[0].mxu0 %v1382
        %v1467 = vpop.f32.mrb[0].mxu0
        %v1468 = vadd.f32 0.0, %v1467
        %v1469 = vpop.f32.mrb[0].mxu0
        %v1470 = vpop.f32.mrb[0].mxu0
        %v1471 = vadd.f32 0.0, %v1470
        %v1472 = vpop.f32.mrb[0].mxu0
        %1473 = vmatprep.mubr.bf16.mxu0 0
        %1474 = vmatmul.mubr.bf16.gmra.mrb[0].mxu0 %v1385
        %v1475 = vpop.f32.mrb[0].mxu0
        %v1476 = vadd.f32 0.0, %v1475
        %v1477 = vpop.f32.mrb[0].mxu0
        %v1478 = vpop.f32.mrb[0].mxu0
        %v1479 = vadd.f32 0.0, %v1478
        %v1480 = vpop.f32.mrb[0].mxu0
        %1481 = vmatprep.mubr.bf16.mxu0 0
        %1482 = vmatmul.mubr.bf16.gmra.mrb[0].mxu0 %v1388
        %v1483 = vpop.f32.mrb[0].mxu0
        %v1484 = vadd.f32 0.0, %v1483
        %v1485 = vpop.f32.mrb[0].mxu0
        %v1486 = vpop.f32.mrb[0].mxu0
        %v1487 = vadd.f32 0.0, %v1486
        %v1488 = vpop.f32.mrb[0].mxu0
        %1489 = vdwg.mxu0
        %v1490 = vadd.f32 %v1195, %v1428
        %v1491 = vadd.f32 %v1198, %v1431
        %v1492 = vadd.f32 %v1203, %v1436
        %v1493 = vadd.f32 %v1206, %v1439
        %v1494 = vadd.f32 %v1211, %v1444
        %v1495 = vadd.f32 %v1214, %v1447
        %v1496 = vadd.f32 %v1219, %v1452
        %v1497 = vadd.f32 %v1222, %v1455
        %v1498 = vadd.f32 %v1227, %v1460
        %v1499 = vadd.f32 %v1230, %v1463
        %v1500 = vadd.f32 %v1235, %v1468
        %v1501 = vadd.f32 %v1238, %v1471
        %v1502 = vadd.f32 %v1243, %v1476
        %v1503 = vadd.f32 %v1246, %v1479
        %v1504 = vadd.f32 %v1251, %v1484
        %v1505 = vadd.f32 %v1254, %v1487
        %v1507 = vlaneseq
        %v1508 = vshrl.u32 %v1507, 7
        %v1509 = vsub.s32 0, %v1508
        %v1510 = vrot.slane %v720, %v1509
        %v1512 = vadd.f32 %v1490, %v1510
        %v1513 = vadd.f32 %v1491, %v1510
        %v1514 = vadd.f32 %v1492, %v1510
        %v1515 = vadd.f32 %v1493, %v1510
        %v1516 = vadd.f32 %v1494, %v1510
        %v1517 = vadd.f32 %v1495, %v1510
        %v1518 = vadd.f32 %v1496, %v1510
        %v1519 = vadd.f32 %v1497, %v1510
        %v1520 = vadd.f32 %v1498, %v1510
        %v1521 = vadd.f32 %v1499, %v1510
        %v1522 = vadd.f32 %v1500, %v1510
        %v1523 = vadd.f32 %v1501, %v1510
        %v1524 = vadd.f32 %v1502, %v1510
        %v1525 = vadd.f32 %v1503, %v1510
        %v1526 = vadd.f32 %v1504, %v1510
        %v1527 = vadd.f32 %v1505, %v1510
        %v1528 = vmax.f32 %v1512, 0.0
        %v1529 = vmax.f32 %v1513, 0.0
        %v1530 = vmax.f32 %v1514, 0.0
        %v1531 = vmax.f32 %v1515, 0.0
        %v1532 = vmax.f32 %v1516, 0.0
        %v1533 = vmax.f32 %v1517, 0.0
        %v1534 = vmax.f32 %v1518, 0.0
        %v1535 = vmax.f32 %v1519, 0.0
        %v1536 = vmax.f32 %v1520, 0.0
        %v1537 = vmax.f32 %v1521, 0.0
        %v1538 = vmax.f32 %v1522, 0.0
        %v1539 = vmax.f32 %v1523, 0.0
        %v1540 = vmax.f32 %v1524, 0.0
        %v1541 = vmax.f32 %v1525, 0.0
        %v1542 = vmax.f32 %v1526, 0.0
        %v1543 = vmax.f32 %v1527, 0.0
        %v1544 = vpack.c.bf16 %v1529, %v1528
        %v1545 = vpack.c.bf16 %v1531, %v1530
        %v1546 = vpack.c.bf16 %v1533, %v1532
        %v1547 = vpack.c.bf16 %v1535, %v1534
        %v1548 = vpack.c.bf16 %v1537, %v1536
        %v1549 = vpack.c.bf16 %v1539, %v1538
        %v1550 = vpack.c.bf16 %v1541, %v1540
        %v1551 = vpack.c.bf16 %v1543, %v1542
        %v1560 = vunpack.c.l.b16 %v1544
        %v1561 = vunpack.c.h.b16 %v1544
        %v1562 = vunpack.c.l.b16 %v1545
        %v1563 = vunpack.c.h.b16 %v1545
        %v1564 = vunpack.c.l.b16 %v1546
        %v1565 = vunpack.c.h.b16 %v1546
        %v1566 = vunpack.c.l.b16 %v1547
        %v1567 = vunpack.c.h.b16 %v1547
        %v1568 = vunpack.c.l.b16 %v1548
        %v1569 = vunpack.c.h.b16 %v1548
        %v1570 = vunpack.c.l.b16 %v1549
        %v1571 = vunpack.c.h.b16 %v1549
        %v1572 = vunpack.c.l.b16 %v1550
        %v1573 = vunpack.c.h.b16 %v1550
        %v1574 = vunpack.c.l.b16 %v1551
        %v1575 = vunpack.c.h.b16 %v1551
        %v1576 = vpack.c.b16 %v1560, %v1560
        %v1577 = vpack.c.b16 %v1561, %v1561
        %v1578 = vpack.c.b16 %v1562, %v1562
        %v1579 = vpack.c.b16 %v1563, %v1563
        %v1580 = vpack.c.b16 %v1564, %v1564
        %v1581 = vpack.c.b16 %v1565, %v1565
        %v1582 = vpack.c.b16 %v1566, %v1566
        %v1583 = vpack.c.b16 %v1567, %v1567
        %v1584 = vpack.c.b16 %v1568, %v1568
        %v1585 = vpack.c.b16 %v1569, %v1569
        %v1586 = vpack.c.b16 %v1570, %v1570
        %v1587 = vpack.c.b16 %v1571, %v1571
        %v1588 = vpack.c.b16 %v1572, %v1572
        %v1589 = vpack.c.b16 %v1573, %v1573
        %v1590 = vpack.c.b16 %v1574, %v1574
        %v1591 = vpack.c.b16 %v1575, %v1575
        %v1593 = vshrl.u32 %v1576, 16
        %v1595 = vrot.slane %v1593, 7
        %v1596 = vshll.u32 %v1576, 16
        %v1598 = vor.u32 %v1595, %v1596
        %v1599 = vrot.slane %v1595, 4
        %v1601 = vshrl.u32 %v1577, 16
        %v1603 = vrot.slane %v1601, 7
        %v1604 = vshll.u32 %v1577, 16
        %v1606 = vor.u32 %v1603, %v1604
        %v1607 = vsel %vm500, %v1599, %v1606
        %v1608 = vrot.slane %v1603, 4
        %v1610 = vshrl.u32 %v1578, 16
        %v1612 = vrot.slane %v1610, 7
        %v1613 = vshll.u32 %v1578, 16
        %v1615 = vor.u32 %v1612, %v1613
        %v1616 = vrot.slane %v1612, 4
        %v1618 = vshrl.u32 %v1579, 16
        %v1620 = vrot.slane %v1618, 7
        %v1621 = vshll.u32 %v1579, 16
        %v1623 = vor.u32 %v1620, %v1621
        %v1624 = vsel %vm500, %v1616, %v1623
        %v1625 = vrot.slane %v1620, 4
        %v1627 = vshrl.u32 %v1580, 16
        %v1629 = vrot.slane %v1627, 7
        %v1630 = vshll.u32 %v1580, 16
        %v1632 = vor.u32 %v1629, %v1630
        %v1633 = vrot.slane %v1629, 4
        %v1635 = vshrl.u32 %v1581, 16
        %v1637 = vrot.slane %v1635, 7
        %v1638 = vshll.u32 %v1581, 16
        %v1640 = vor.u32 %v1637, %v1638
        %v1641 = vsel %vm500, %v1633, %v1640
        %v1642 = vrot.slane %v1637, 4
        %v1644 = vshrl.u32 %v1582, 16
        %v1646 = vrot.slane %v1644, 7
        %v1647 = vshll.u32 %v1582, 16
        %v1649 = vor.u32 %v1646, %v1647
        %v1650 = vrot.slane %v1646, 4
        %v1652 = vshrl.u32 %v1583, 16
        %v1654 = vrot.slane %v1652, 7
        %v1655 = vshll.u32 %v1583, 16
        %v1657 = vor.u32 %v1654, %v1655
        %v1658 = vsel %vm500, %v1650, %v1657
        %v1659 = vrot.slane %v1654, 4
        %v1661 = vshrl.u32 %v1584, 16
        %v1663 = vrot.slane %v1661, 7
        %v1664 = vshll.u32 %v1584, 16
        %v1666 = vor.u32 %v1663, %v1664
        %v1667 = vrot.slane %v1663, 4
        %v1669 = vshrl.u32 %v1585, 16
        %v1671 = vrot.slane %v1669, 7
        %v1672 = vshll.u32 %v1585, 16
        %v1674 = vor.u32 %v1671, %v1672
        %v1675 = vsel %vm500, %v1667, %v1674
        %v1676 = vrot.slane %v1671, 4
        %v1678 = vshrl.u32 %v1586, 16
        %v1680 = vrot.slane %v1678, 7
        %v1681 = vshll.u32 %v1586, 16
        %v1683 = vor.u32 %v1680, %v1681
        %v1684 = vrot.slane %v1680, 4
        %v1686 = vshrl.u32 %v1587, 16
        %v1688 = vrot.slane %v1686, 7
        %v1689 = vshll.u32 %v1587, 16
        %v1691 = vor.u32 %v1688, %v1689
        %v1692 = vsel %vm500, %v1684, %v1691
        %v1693 = vrot.slane %v1688, 4
        %v1695 = vshrl.u32 %v1588, 16
        %v1697 = vrot.slane %v1695, 7
        %v1698 = vshll.u32 %v1588, 16
        %v1700 = vor.u32 %v1697, %v1698
        %v1701 = vrot.slane %v1697, 4
        %v1703 = vshrl.u32 %v1589, 16
        %v1705 = vrot.slane %v1703, 7
        %v1706 = vshll.u32 %v1589, 16
        %v1708 = vor.u32 %v1705, %v1706
        %v1709 = vsel %vm500, %v1701, %v1708
        %v1710 = vrot.slane %v1705, 4
        %v1712 = vshrl.u32 %v1590, 16
        %v1714 = vrot.slane %v1712, 7
        %v1715 = vshll.u32 %v1590, 16
        %v1717 = vor.u32 %v1714, %v1715
        %v1718 = vrot.slane %v1714, 4
        %v1720 = vshrl.u32 %v1591, 16
        %v1722 = vrot.slane %v1720, 7
        %v1723 = vshll.u32 %v1591, 16
        %v1725 = vor.u32 %v1722, %v1723
        %v1726 = vsel %vm500, %v1718, %v1725
        %v1727 = vrot.slane %v1722, 4
        %vm1752 = vcmask 257024
        %vm1753 = vmand %vm1752, %vm310
        %v1754 = vld [vmem:[#allocation3] sm:$0xf]
        %v1755 = vsel %vm1753, %v1598, %v1754
        %1756 = vst [vmem:[#allocation3] sm:$0xf] %v1755
        %vm1757 = vcmask 257024
        %1758 = vst.msk [vmem:[#allocation3 + $0x4] sm:$0xf] %vm1757, %v1607
        %v1759 = vld [vmem:[#allocation3 + $0x8] sm:$0x1]
        %v1760 = vsel %vm337, %v1608, %v1759
        %1761 = vst [vmem:[#allocation3 + $0x8] sm:$0x1] %v1760
        %v1762 = vld [vmem:[#allocation3 + $0xc] sm:$0xf]
        %v1763 = vsel %vm1753, %v1615, %v1762
        %1764 = vst [vmem:[#allocation3 + $0xc] sm:$0xf] %v1763
        %1765 = vst.msk [vmem:[#allocation3 + $0x10] sm:$0xf] %vm1757, %v1624
        %v1766 = vld [vmem:[#allocation3 + $0x14] sm:$0x1]
        %v1767 = vsel %vm337, %v1625, %v1766
        %1768 = vst [vmem:[#allocation3 + $0x14] sm:$0x1] %v1767
        %v1769 = vld [vmem:[#allocation3 + $0x18] sm:$0xf]
        %v1770 = vsel %vm1753, %v1632, %v1769
        %1771 = vst [vmem:[#allocation3 + $0x18] sm:$0xf] %v1770
        %1772 = vst.msk [vmem:[#allocation3 + $0x1c] sm:$0xf] %vm1757, %v1641
        %v1773 = vld [vmem:[#allocation3 + $0x20] sm:$0x1]
        %v1774 = vsel %vm337, %v1642, %v1773
        %1775 = vst [vmem:[#allocation3 + $0x20] sm:$0x1] %v1774
        %v1776 = vld [vmem:[#allocation3 + $0x24] sm:$0xf]
        %v1777 = vsel %vm1753, %v1649, %v1776
        %1778 = vst [vmem:[#allocation3 + $0x24] sm:$0xf] %v1777
        %1779 = vst.msk [vmem:[#allocation3 + $0x28] sm:$0xf] %vm1757, %v1658
        %v1780 = vld [vmem:[#allocation3 + $0x2c] sm:$0x1]
        %v1781 = vsel %vm337, %v1659, %v1780
        %1782 = vst [vmem:[#allocation3 + $0x2c] sm:$0x1] %v1781
        %v1783 = vld [vmem:[#allocation3 + $0x30] sm:$0xf]
        %v1784 = vsel %vm1753, %v1666, %v1783
        %1785 = vst [vmem:[#allocation3 + $0x30] sm:$0xf] %v1784
        %1786 = vst.msk [vmem:[#allocation3 + $0x34] sm:$0xf] %vm1757, %v1675
        %v1787 = vld [vmem:[#allocation3 + $0x38] sm:$0x1]
        %v1788 = vsel %vm337, %v1676, %v1787
        %1789 = vst [vmem:[#allocation3 + $0x38] sm:$0x1] %v1788
        %v1790 = vld [vmem:[#allocation3 + $0x3c] sm:$0xf]
        %v1791 = vsel %vm1753, %v1683, %v1790
        %1792 = vst [vmem:[#allocation3 + $0x3c] sm:$0xf] %v1791
        %1793 = vst.msk [vmem:[#allocation3 + $0x40] sm:$0xf] %vm1757, %v1692
        %v1794 = vld [vmem:[#allocation3 + $0x44] sm:$0x1]
        %v1795 = vsel %vm337, %v1693, %v1794
        %1796 = vst [vmem:[#allocation3 + $0x44] sm:$0x1] %v1795
        %v1797 = vld [vmem:[#allocation3 + $0x48] sm:$0xf]
        %v1798 = vsel %vm1753, %v1700, %v1797
        %1799 = vst [vmem:[#allocation3 + $0x48] sm:$0xf] %v1798
        %1800 = vst.msk [vmem:[#allocation3 + $0x4c] sm:$0xf] %vm1757, %v1709
        %v1801 = vld [vmem:[#allocation3 + $0x50] sm:$0x1]
        %v1802 = vsel %vm337, %v1710, %v1801
        %1803 = vst [vmem:[#allocation3 + $0x50] sm:$0x1] %v1802
        %v1804 = vld [vmem:[#allocation3 + $0x54] sm:$0xf]
        %v1805 = vsel %vm1753, %v1717, %v1804
        %1806 = vst [vmem:[#allocation3 + $0x54] sm:$0xf] %v1805
        %1807 = vst.msk [vmem:[#allocation3 + $0x58] sm:$0xf] %vm1757, %v1726
        %v1808 = vld [vmem:[#allocation3 + $0x5c] sm:$0x1]
        %v1809 = vsel %vm337, %v1727, %v1808
        %1810 = vst [vmem:[#allocation3 + $0x5c] sm:$0x1] %v1809
        %v1811 = vld [vmem:[%s5] sm:$0x1]
        %v1812 = vld [vmem:[#allocation3] sm:$0xf]
        %v1813 = vld [vmem:[#allocation3 + $0x4] sm:$0xf]
        %v1814 = vld [vmem:[#allocation3 + $0xc] sm:$0xf]
        %v1815 = vld [vmem:[#allocation3 + $0x10] sm:$0xf]
        %v1816 = vld [vmem:[#allocation3 + $0x18] sm:$0xf]
        %v1817 = vld [vmem:[#allocation3 + $0x1c] sm:$0xf]
        %v1818 = vld [vmem:[#allocation3 + $0x24] sm:$0xf]
        %v1819 = vld [vmem:[#allocation3 + $0x28] sm:$0xf]
        %v1820 = vld [vmem:[#allocation3 + $0x30] sm:$0xf]
        %v1821 = vld [vmem:[#allocation3 + $0x34] sm:$0xf]
        %v1822 = vld [vmem:[#allocation3 + $0x3c] sm:$0xf]
        %v1823 = vld [vmem:[#allocation3 + $0x40] sm:$0xf]
        %v1824 = vld [vmem:[#allocation3 + $0x48] sm:$0xf]
        %v1825 = vld [vmem:[#allocation3 + $0x4c] sm:$0xf]
        %v1826 = vld [vmem:[#allocation3 + $0x54] sm:$0xf]
        %v1827 = vld [vmem:[#allocation3 + $0x58] sm:$0xf]
        %v1828 = vld [vmem:[%s2] sm:$0xf]
        %v1829 = vld [vmem:[%s2 + $0x4] sm:$0xf]
        %v1830 = vld [vmem:[%s2 + $0x8] sm:$0xf]
        %v1831 = vld [vmem:[%s2 + $0xc] sm:$0xf]
        %v1832 = vld [vmem:[#allocation3 + $0x8] sm:$0x1]
        %v1833 = vld [vmem:[#allocation3 + $0x14] sm:$0x1]
        %v1834 = vld [vmem:[#allocation3 + $0x20] sm:$0x1]
        %v1835 = vld [vmem:[#allocation3 + $0x2c] sm:$0x1]
        %v1836 = vld [vmem:[#allocation3 + $0x38] sm:$0x1]
        %v1837 = vld [vmem:[#allocation3 + $0x44] sm:$0x1]
        %v1838 = vld [vmem:[#allocation3 + $0x50] sm:$0x1]
        %v1839 = vld [vmem:[#allocation3 + $0x5c] sm:$0x1]
        %v1841 = vshrl.u32 %v1812, 16
        %v1843 = vrot.slane %v1841, 4
        %v1844 = vshll.u32 %v1812, 16
        %v1846 = vrot.slane %v1844, 5
        %v1847 = vor.u32 %v1843, %v1846
        %v1848 = vrot.slane %v1847, 4
        %v1850 = vshll.u32 %v1813, 16
        %v1852 = vrot.slane %v1850, 5
        %v1853 = vsel %vm748, %v1848, %v1852
        %v1854 = vshrl.u32 %v1813, 16
        %v1856 = vrot.slane %v1854, 4
        %v1857 = vor.u32 %v1856, %v1852
        %v1858 = vrot.slane %v1857, 4
        %v1860 = vshll.u32 %v1832, 16
        %v1862 = vrot.slane %v1860, 5
        %v1863 = vsel %vm748, %v1858, %v1862
        %v1865 = vshrl.u32 %v1814, 16
        %v1867 = vrot.slane %v1865, 4
        %v1868 = vshll.u32 %v1814, 16
        %v1870 = vrot.slane %v1868, 5
        %v1871 = vor.u32 %v1867, %v1870
        %v1872 = vrot.slane %v1871, 4
        %v1874 = vshll.u32 %v1815, 16
        %v1876 = vrot.slane %v1874, 5
        %v1877 = vsel %vm748, %v1872, %v1876
        %v1878 = vshrl.u32 %v1815, 16
        %v1880 = vrot.slane %v1878, 4
        %v1881 = vor.u32 %v1880, %v1876
        %v1882 = vrot.slane %v1881, 4
        %v1884 = vshll.u32 %v1833, 16
        %v1886 = vrot.slane %v1884, 5
        %v1887 = vsel %vm748, %v1882, %v1886
        %v1889 = vshrl.u32 %v1816, 16
        %v1891 = vrot.slane %v1889, 4
        %v1892 = vshll.u32 %v1816, 16
        %v1894 = vrot.slane %v1892, 5
        %v1895 = vor.u32 %v1891, %v1894
        %v1896 = vrot.slane %v1895, 4
        %v1898 = vshll.u32 %v1817, 16
        %v1900 = vrot.slane %v1898, 5
        %v1901 = vsel %vm748, %v1896, %v1900
        %v1902 = vshrl.u32 %v1817, 16
        %v1904 = vrot.slane %v1902, 4
        %v1905 = vor.u32 %v1904, %v1900
        %v1906 = vrot.slane %v1905, 4
        %v1908 = vshll.u32 %v1834, 16
        %v1910 = vrot.slane %v1908, 5
        %v1911 = vsel %vm748, %v1906, %v1910
        %v1913 = vshrl.u32 %v1818, 16
        %v1915 = vrot.slane %v1913, 4
        %v1916 = vshll.u32 %v1818, 16
        %v1918 = vrot.slane %v1916, 5
        %v1919 = vor.u32 %v1915, %v1918
        %v1920 = vrot.slane %v1919, 4
        %v1922 = vshll.u32 %v1819, 16
        %v1924 = vrot.slane %v1922, 5
        %v1925 = vsel %vm748, %v1920, %v1924
        %v1926 = vshrl.u32 %v1819, 16
        %v1928 = vrot.slane %v1926, 4
        %v1929 = vor.u32 %v1928, %v1924
        %v1930 = vrot.slane %v1929, 4
        %v1932 = vshll.u32 %v1835, 16
        %v1934 = vrot.slane %v1932, 5
        %v1935 = vsel %vm748, %v1930, %v1934
        %v1937 = vshrl.u32 %v1820, 16
        %v1939 = vrot.slane %v1937, 4
        %v1940 = vshll.u32 %v1820, 16
        %v1942 = vrot.slane %v1940, 5
        %v1943 = vor.u32 %v1939, %v1942
        %v1944 = vrot.slane %v1943, 4
        %v1946 = vshll.u32 %v1821, 16
        %v1948 = vrot.slane %v1946, 5
        %v1949 = vsel %vm748, %v1944, %v1948
        %v1950 = vshrl.u32 %v1821, 16
        %v1952 = vrot.slane %v1950, 4
        %v1953 = vor.u32 %v1952, %v1948
        %v1954 = vrot.slane %v1953, 4
        %v1956 = vshll.u32 %v1836, 16
        %v1958 = vrot.slane %v1956, 5
        %v1959 = vsel %vm748, %v1954, %v1958
        %v1961 = vshrl.u32 %v1822, 16
        %v1963 = vrot.slane %v1961, 4
        %v1964 = vshll.u32 %v1822, 16
        %v1966 = vrot.slane %v1964, 5
        %v1967 = vor.u32 %v1963, %v1966
        %v1968 = vrot.slane %v1967, 4
        %v1970 = vshll.u32 %v1823, 16
        %v1972 = vrot.slane %v1970, 5
        %v1973 = vsel %vm748, %v1968, %v1972
        %v1974 = vshrl.u32 %v1823, 16
        %v1976 = vrot.slane %v1974, 4
        %v1977 = vor.u32 %v1976, %v1972
        %v1978 = vrot.slane %v1977, 4
        %v1980 = vshll.u32 %v1837, 16
        %v1982 = vrot.slane %v1980, 5
        %v1983 = vsel %vm748, %v1978, %v1982
        %v1985 = vshrl.u32 %v1824, 16
        %v1987 = vrot.slane %v1985, 4
        %v1988 = vshll.u32 %v1824, 16
        %v1990 = vrot.slane %v1988, 5
        %v1991 = vor.u32 %v1987, %v1990
        %v1992 = vrot.slane %v1991, 4
        %v1994 = vshll.u32 %v1825, 16
        %v1996 = vrot.slane %v1994, 5
        %v1997 = vsel %vm748, %v1992, %v1996
        %v1998 = vshrl.u32 %v1825, 16
        %v2000 = vrot.slane %v1998, 4
        %v2001 = vor.u32 %v2000, %v1996
        %v2002 = vrot.slane %v2001, 4
        %v2004 = vshll.u32 %v1838, 16
        %v2006 = vrot.slane %v2004, 5
        %v2007 = vsel %vm748, %v2002, %v2006
        %v2009 = vshrl.u32 %v1826, 16
        %v2011 = vrot.slane %v2009, 4
        %v2012 = vshll.u32 %v1826, 16
        %v2014 = vrot.slane %v2012, 5
        %v2015 = vor.u32 %v2011, %v2014
        %v2016 = vrot.slane %v2015, 4
        %v2018 = vshll.u32 %v1827, 16
        %v2020 = vrot.slane %v2018, 5
        %v2021 = vsel %vm748, %v2016, %v2020
        %v2022 = vshrl.u32 %v1827, 16
        %v2024 = vrot.slane %v2022, 4
        %v2025 = vor.u32 %v2024, %v2020
        %v2026 = vrot.slane %v2025, 4
        %v2028 = vshll.u32 %v1839, 16
        %v2030 = vrot.slane %v2028, 5
        %v2031 = vsel %vm748, %v2026, %v2030
        %s2032 = scalar_lea.vmem %s2, 16
        %v2033 = vld [vmem:[%s2032] sm:$0xf]
        %v2034 = vld [vmem:[%s2032 + $0x4] sm:$0xf]
        %v2035 = vld [vmem:[%s2032 + $0x8] sm:$0xf]
        %v2036 = vld [vmem:[%s2032 + $0xc] sm:$0xf]
        %v2037 = vunpack.c.l.b16 %v1853
        %v2038 = vunpack.c.l.b16 %v1863
        %v2039 = vunpack.c.l.b16 %v1877
        %v2040 = vunpack.c.l.b16 %v1887
        %v2041 = vunpack.c.l.b16 %v1901
        %v2042 = vunpack.c.l.b16 %v1911
        %v2043 = vunpack.c.l.b16 %v1925
        %v2044 = vunpack.c.l.b16 %v1935
        %v2045 = vunpack.c.l.b16 %v1949
        %v2046 = vunpack.c.l.b16 %v1959
        %v2047 = vunpack.c.l.b16 %v1973
        %v2048 = vunpack.c.l.b16 %v1983
        %v2049 = vunpack.c.l.b16 %v1997
        %v2050 = vunpack.c.l.b16 %v2007
        %v2051 = vunpack.c.l.b16 %v2021
        %v2052 = vunpack.c.l.b16 %v2031
        %v2053 = vpack.c.b16 %v2038, %v2037
        %v2054 = vpack.c.b16 %v2040, %v2039
        %v2055 = vpack.c.b16 %v2042, %v2041
        %v2056 = vpack.c.b16 %v2044, %v2043
        %v2057 = vpack.c.b16 %v2046, %v2045
        %v2058 = vpack.c.b16 %v2048, %v2047
        %v2059 = vpack.c.b16 %v2050, %v2049
        %v2060 = vpack.c.b16 %v2052, %v2051
        %v2065 = vunpack.c.l.b16 %v2033
        %v2066 = vunpack.c.l.b16 %v2034
        %v2067 = vunpack.c.l.b16 %v2035
        %v2068 = vunpack.c.l.b16 %v2036
        %v2069 = vpack.c.b16 %v2066, %v2065
        %v2070 = vpack.c.b16 %v2068, %v2067
        %vm2073 = vcmask 261120
        %v2075 = vsel %vm2073, %v2053, 0
        %v2078 = vsel %vm2073, %v2054, 0
        %v2081 = vsel %vm2073, %v2055, 0
        %v2084 = vsel %vm2073, %v2056, 0
        %v2087 = vsel %vm2073, %v2057, 0
        %v2090 = vsel %vm2073, %v2058, 0
        %v2093 = vsel %vm2073, %v2059, 0
        %v2096 = vsel %vm2073, %v2060, 0
        %2098 = vmatprep.subr.bf16.mxu0 0
        %2099 = vmatpush1.bf16.msra.mxu0 %v2069
        %2100 = vmatprep.subr.bf16.mxu0 0
        %2101 = vmatpush1.bf16.msra.mxu0 %v2070
        %2102 = vmatprep.subr.bf16.mxu0 0
        %2103 = vmatpush1.bf16.msra.mxu0 0
        %2104 = vmatprep.subr.bf16.mxu0 0
        %2105 = vmatpush1.bf16.msra.mxu0 0
        %2106 = vmatprep.subr.bf16.mxu0 0
        %2107 = vmatpush1.bf16.msra.mxu0 0
        %2108 = vmatprep.subr.bf16.mxu0 0
        %2109 = vmatpush1.bf16.msra.mxu0 0
        %2110 = vmatprep.subr.bf16.mxu0 0
        %2111 = vmatpush1.bf16.msra.mxu0 0
        %2112 = vmatprep.subr.bf16.mxu0 0
        %2113 = vmatpush1.bf16.msra.mxu0 0
        %2114 = vmatprep.subr.bf16.mxu0 0
        %2115 = vmatpush1.bf16.msra.mxu0 0
        %2116 = vmatprep.subr.bf16.mxu0 0
        %2117 = vmatpush1.bf16.msra.mxu0 0
        %2118 = vmatprep.subr.bf16.mxu0 0
        %2119 = vmatpush1.bf16.msra.mxu0 0
        %2120 = vmatprep.subr.bf16.mxu0 0
        %2121 = vmatpush1.bf16.msra.mxu0 0
        %2122 = vmatprep.subr.bf16.mxu0 0
        %2123 = vmatpush1.bf16.msra.mxu0 0
        %2124 = vmatprep.subr.bf16.mxu0 0
        %2125 = vmatpush1.bf16.msra.mxu0 0
        %2126 = vmatprep.subr.bf16.mxu0 0
        %2127 = vmatpush1.bf16.msra.mxu0 0
        %2128 = vmatprep.subr.bf16.mxu0 0
        %2129 = vmatpush1.bf16.msra.mxu0 0
        %2130 = vmatprep.mubr.bf16.mxu0 0
        %2131 = vmatmul.mubr.bf16.gmra.mrb[0].mxu0 %v2075
        %v2132 = vpop.f32.mrb[0].mxu0
        %v2133 = vadd.f32 0.0, %v2132
        %v2134 = vpop.f32.mrb[0].mxu0
        %v2135 = vpop.f32.mrb[0].mxu0
        %v2136 = vadd.f32 0.0, %v2135
        %v2137 = vpop.f32.mrb[0].mxu0
        %2138 = vmatprep.mubr.bf16.mxu0 0
        %2139 = vmatmul.mubr.bf16.gmra.mrb[0].mxu0 %v2078
        %v2140 = vpop.f32.mrb[0].mxu0
        %v2141 = vadd.f32 0.0, %v2140
        %v2142 = vpop.f32.mrb[0].mxu0
        %v2143 = vpop.f32.mrb[0].mxu0
        %v2144 = vadd.f32 0.0, %v2143
        %v2145 = vpop.f32.mrb[0].mxu0
        %2146 = vmatprep.mubr.bf16.mxu0 0
        %2147 = vmatmul.mubr.bf16.gmra.mrb[0].mxu0 %v2081
        %v2148 = vpop.f32.mrb[0].mxu0
        %v2149 = vadd.f32 0.0, %v2148
        %v2150 = vpop.f32.mrb[0].mxu0
        %v2151 = vpop.f32.mrb[0].mxu0
        %v2152 = vadd.f32 0.0, %v2151
        %v2153 = vpop.f32.mrb[0].mxu0
        %2154 = vmatprep.mubr.bf16.mxu0 0
        %2155 = vmatmul.mubr.bf16.gmra.mrb[0].mxu0 %v2084
        %v2156 = vpop.f32.mrb[0].mxu0
        %v2157 = vadd.f32 0.0, %v2156
        %v2158 = vpop.f32.mrb[0].mxu0
        %v2159 = vpop.f32.mrb[0].mxu0
        %v2160 = vadd.f32 0.0, %v2159
        %v2161 = vpop.f32.mrb[0].mxu0
        %2162 = vmatprep.mubr.bf16.mxu0 0
        %2163 = vmatmul.mubr.bf16.gmra.mrb[0].mxu0 %v2087
        %v2164 = vpop.f32.mrb[0].mxu0
        %v2165 = vadd.f32 0.0, %v2164
        %v2166 = vpop.f32.mrb[0].mxu0
        %v2167 = vpop.f32.mrb[0].mxu0
        %v2168 = vadd.f32 0.0, %v2167
        %v2169 = vpop.f32.mrb[0].mxu0
        %2170 = vmatprep.mubr.bf16.mxu0 0
        %2171 = vmatmul.mubr.bf16.gmra.mrb[0].mxu0 %v2090
        %v2172 = vpop.f32.mrb[0].mxu0
        %v2173 = vadd.f32 0.0, %v2172
        %v2174 = vpop.f32.mrb[0].mxu0
        %v2175 = vpop.f32.mrb[0].mxu0
        %v2176 = vadd.f32 0.0, %v2175
        %v2177 = vpop.f32.mrb[0].mxu0
        %2178 = vmatprep.mubr.bf16.mxu0 0
        %2179 = vmatmul.mubr.bf16.gmra.mrb[0].mxu0 %v2093
        %v2180 = vpop.f32.mrb[0].mxu0
        %v2181 = vadd.f32 0.0, %v2180
        %v2182 = vpop.f32.mrb[0].mxu0
        %v2183 = vpop.f32.mrb[0].mxu0
        %v2184 = vadd.f32 0.0, %v2183
        %v2185 = vpop.f32.mrb[0].mxu0
        %2186 = vmatprep.mubr.bf16.mxu0 0
        %2187 = vmatmul.mubr.bf16.gmra.mrb[0].mxu0 %v2096
        %v2188 = vpop.f32.mrb[0].mxu0
        %v2189 = vadd.f32 0.0, %v2188
        %v2190 = vpop.f32.mrb[0].mxu0
        %v2191 = vpop.f32.mrb[0].mxu0
        %v2192 = vadd.f32 0.0, %v2191
        %v2193 = vpop.f32.mrb[0].mxu0
        %2194 = vdwg.mxu0
        %v2211 = vunpack.c.l.b16 %v1812
        %v2212 = vunpack.c.l.b16 %v1813
        %v2213 = vunpack.c.l.b16 %v1814
        %v2214 = vunpack.c.l.b16 %v1815
        %v2215 = vunpack.c.l.b16 %v1816
        %v2216 = vunpack.c.l.b16 %v1817
        %v2217 = vunpack.c.l.b16 %v1818
        %v2218 = vunpack.c.l.b16 %v1819
        %v2219 = vunpack.c.l.b16 %v1820
        %v2220 = vunpack.c.l.b16 %v1821
        %v2221 = vunpack.c.l.b16 %v1822
        %v2222 = vunpack.c.l.b16 %v1823
        %v2223 = vunpack.c.l.b16 %v1824
        %v2224 = vunpack.c.l.b16 %v1825
        %v2225 = vunpack.c.l.b16 %v1826
        %v2226 = vunpack.c.l.b16 %v1827
        %v2227 = vpack.c.b16 %v2212, %v2211
        %v2228 = vpack.c.b16 %v2214, %v2213
        %v2229 = vpack.c.b16 %v2216, %v2215
        %v2230 = vpack.c.b16 %v2218, %v2217
        %v2231 = vpack.c.b16 %v2220, %v2219
        %v2232 = vpack.c.b16 %v2222, %v2221
        %v2233 = vpack.c.b16 %v2224, %v2223
        %v2234 = vpack.c.b16 %v2226, %v2225
        %v2239 = vunpack.c.l.b16 %v1828
        %v2240 = vunpack.c.l.b16 %v1829
        %v2241 = vunpack.c.l.b16 %v1830
        %v2242 = vunpack.c.l.b16 %v1831
        %v2243 = vpack.c.b16 %v2240, %v2239
        %v2244 = vpack.c.b16 %v2242, %v2241
        %v2248 = vsel %vm2073, %v2227, 0
        %v2251 = vsel %vm2073, %v2228, 0
        %v2254 = vsel %vm2073, %v2229, 0
        %v2257 = vsel %vm2073, %v2230, 0
        %v2260 = vsel %vm2073, %v2231, 0
        %v2263 = vsel %vm2073, %v2232, 0
        %v2266 = vsel %vm2073, %v2233, 0
        %v2269 = vsel %vm2073, %v2234, 0
        %2271 = vmatprep.subr.bf16.mxu0 0
        %2272 = vmatpush1.bf16.msra.mxu0 %v2243
        %2273 = vmatprep.subr.bf16.mxu0 0
        %2274 = vmatpush1.bf16.msra.mxu0 %v2244
        %2275 = vmatprep.subr.bf16.mxu0 0
        %2276 = vmatpush1.bf16.msra.mxu0 0
        %2277 = vmatprep.subr.bf16.mxu0 0
        %2278 = vmatpush1.bf16.msra.mxu0 0
        %2279 = vmatprep.subr.bf16.mxu0 0
        %2280 = vmatpush1.bf16.msra.mxu0 0
        %2281 = vmatprep.subr.bf16.mxu0 0
        %2282 = vmatpush1.bf16.msra.mxu0 0
        %2283 = vmatprep.subr.bf16.mxu0 0
        %2284 = vmatpush1.bf16.msra.mxu0 0
        %2285 = vmatprep.subr.bf16.mxu0 0
        %2286 = vmatpush1.bf16.msra.mxu0 0
        %2287 = vmatprep.subr.bf16.mxu0 0
        %2288 = vmatpush1.bf16.msra.mxu0 0
        %2289 = vmatprep.subr.bf16.mxu0 0
        %2290 = vmatpush1.bf16.msra.mxu0 0
        %2291 = vmatprep.subr.bf16.mxu0 0
        %2292 = vmatpush1.bf16.msra.mxu0 0
        %2293 = vmatprep.subr.bf16.mxu0 0
        %2294 = vmatpush1.bf16.msra.mxu0 0
        %2295 = vmatprep.subr.bf16.mxu0 0
        %2296 = vmatpush1.bf16.msra.mxu0 0
        %2297 = vmatprep.subr.bf16.mxu0 0
        %2298 = vmatpush1.bf16.msra.mxu0 0
        %2299 = vmatprep.subr.bf16.mxu0 0
        %2300 = vmatpush1.bf16.msra.mxu0 0
        %2301 = vmatprep.subr.bf16.mxu0 0
        %2302 = vmatpush1.bf16.msra.mxu0 0
        %2303 = vmatprep.mubr.bf16.mxu0 0
        %2304 = vmatmul.mubr.bf16.gmra.mrb[0].mxu0 %v2248
        %v2305 = vpop.f32.mrb[0].mxu0
        %v2306 = vadd.f32 %v2133, %v2305
        %v2307 = vpop.f32.mrb[0].mxu0
        %v2308 = vpop.f32.mrb[0].mxu0
        %v2309 = vadd.f32 %v2136, %v2308
        %v2310 = vpop.f32.mrb[0].mxu0
        %2311 = vmatprep.mubr.bf16.mxu0 0
        %2312 = vmatmul.mubr.bf16.gmra.mrb[0].mxu0 %v2251
        %v2313 = vpop.f32.mrb[0].mxu0
        %v2314 = vadd.f32 %v2141, %v2313
        %v2315 = vpop.f32.mrb[0].mxu0
        %v2316 = vpop.f32.mrb[0].mxu0
        %v2317 = vadd.f32 %v2144, %v2316
        %v2318 = vpop.f32.mrb[0].mxu0
        %2319 = vmatprep.mubr.bf16.mxu0 0
        %2320 = vmatmul.mubr.bf16.gmra.mrb[0].mxu0 %v2254
        %v2321 = vpop.f32.mrb[0].mxu0
        %v2322 = vadd.f32 %v2149, %v2321
        %v2323 = vpop.f32.mrb[0].mxu0
        %v2324 = vpop.f32.mrb[0].mxu0
        %v2325 = vadd.f32 %v2152, %v2324
        %v2326 = vpop.f32.mrb[0].mxu0
        %2327 = vmatprep.mubr.bf16.mxu0 0
        %2328 = vmatmul.mubr.bf16.gmra.mrb[0].mxu0 %v2257
        %v2329 = vpop.f32.mrb[0].mxu0
        %v2330 = vadd.f32 %v2157, %v2329
        %v2331 = vpop.f32.mrb[0].mxu0
        %v2332 = vpop.f32.mrb[0].mxu0
        %v2333 = vadd.f32 %v2160, %v2332
        %v2334 = vpop.f32.mrb[0].mxu0
        %2335 = vmatprep.mubr.bf16.mxu0 0
        %2336 = vmatmul.mubr.bf16.gmra.mrb[0].mxu0 %v2260
        %v2337 = vpop.f32.mrb[0].mxu0
        %v2338 = vadd.f32 %v2165, %v2337
        %v2339 = vpop.f32.mrb[0].mxu0
        %v2340 = vpop.f32.mrb[0].mxu0
        %v2341 = vadd.f32 %v2168, %v2340
        %v2342 = vpop.f32.mrb[0].mxu0
        %2343 = vmatprep.mubr.bf16.mxu0 0
        %2344 = vmatmul.mubr.bf16.gmra.mrb[0].mxu0 %v2263
        %v2345 = vpop.f32.mrb[0].mxu0
        %v2346 = vadd.f32 %v2173, %v2345
        %v2347 = vpop.f32.mrb[0].mxu0
        %v2348 = vpop.f32.mrb[0].mxu0
        %v2349 = vadd.f32 %v2176, %v2348
        %v2350 = vpop.f32.mrb[0].mxu0
        %2351 = vmatprep.mubr.bf16.mxu0 0
        %2352 = vmatmul.mubr.bf16.gmra.mrb[0].mxu0 %v2266
        %v2353 = vpop.f32.mrb[0].mxu0
        %v2354 = vadd.f32 %v2181, %v2353
        %v2355 = vpop.f32.mrb[0].mxu0
        %v2356 = vpop.f32.mrb[0].mxu0
        %v2357 = vadd.f32 %v2184, %v2356
        %v2358 = vpop.f32.mrb[0].mxu0
        %2359 = vmatprep.mubr.bf16.mxu0 0
        %2360 = vmatmul.mubr.bf16.gmra.mrb[0].mxu0 %v2269
        %v2361 = vpop.f32.mrb[0].mxu0
        %v2362 = vadd.f32 %v2189, %v2361
        %v2363 = vpop.f32.mrb[0].mxu0
        %v2364 = vpop.f32.mrb[0].mxu0
        %v2365 = vadd.f32 %v2192, %v2364
        %v2366 = vpop.f32.mrb[0].mxu0
        %2367 = vdwg.mxu0
        %v2368 = vld [vmem:[#allocation3] sm:$0xe]
        %v2369 = vld [vmem:[#allocation3 + $0xc] sm:$0xe]
        %v2370 = vld [vmem:[#allocation3 + $0x18] sm:$0xe]
        %v2371 = vld [vmem:[#allocation3 + $0x24] sm:$0xe]
        %v2372 = vld [vmem:[#allocation3 + $0x30] sm:$0xe]
        %v2373 = vld [vmem:[#allocation3 + $0x3c] sm:$0xe]
        %v2374 = vld [vmem:[#allocation3 + $0x48] sm:$0xe]
        %v2375 = vld [vmem:[#allocation3 + $0x54] sm:$0xe]
        %v2392 = vrot.slane %v2368, 5
        %v2393 = vrot.slane %v2392, 4
        %v2394 = vrot.slane %v1813, 5
        %v2395 = vsel %vm1283, %v2393, %v2394
        %v2396 = vrot.slane %v2394, 4
        %v2397 = vrot.slane %v1832, 5
        %v2398 = vsel %vm1283, %v2396, %v2397
        %v2399 = vrot.slane %v2369, 5
        %v2400 = vrot.slane %v2399, 4
        %v2401 = vrot.slane %v1815, 5
        %v2402 = vsel %vm1283, %v2400, %v2401
        %v2403 = vrot.slane %v2401, 4
        %v2404 = vrot.slane %v1833, 5
        %v2405 = vsel %vm1283, %v2403, %v2404
        %v2406 = vrot.slane %v2370, 5
        %v2407 = vrot.slane %v2406, 4
        %v2408 = vrot.slane %v1817, 5
        %v2409 = vsel %vm1283, %v2407, %v2408
        %v2410 = vrot.slane %v2408, 4
        %v2411 = vrot.slane %v1834, 5
        %v2412 = vsel %vm1283, %v2410, %v2411
        %v2413 = vrot.slane %v2371, 5
        %v2414 = vrot.slane %v2413, 4
        %v2415 = vrot.slane %v1819, 5
        %v2416 = vsel %vm1283, %v2414, %v2415
        %v2417 = vrot.slane %v2415, 4
        %v2418 = vrot.slane %v1835, 5
        %v2419 = vsel %vm1283, %v2417, %v2418
        %v2420 = vrot.slane %v2372, 5
        %v2421 = vrot.slane %v2420, 4
        %v2422 = vrot.slane %v1821, 5
        %v2423 = vsel %vm1283, %v2421, %v2422
        %v2424 = vrot.slane %v2422, 4
        %v2425 = vrot.slane %v1836, 5
        %v2426 = vsel %vm1283, %v2424, %v2425
        %v2427 = vrot.slane %v2373, 5
        %v2428 = vrot.slane %v2427, 4
        %v2429 = vrot.slane %v1823, 5
        %v2430 = vsel %vm1283, %v2428, %v2429
        %v2431 = vrot.slane %v2429, 4
        %v2432 = vrot.slane %v1837, 5
        %v2433 = vsel %vm1283, %v2431, %v2432
        %v2434 = vrot.slane %v2374, 5
        %v2435 = vrot.slane %v2434, 4
        %v2436 = vrot.slane %v1825, 5
        %v2437 = vsel %vm1283, %v2435, %v2436
        %v2438 = vrot.slane %v2436, 4
        %v2439 = vrot.slane %v1838, 5
        %v2440 = vsel %vm1283, %v2438, %v2439
        %v2441 = vrot.slane %v2375, 5
        %v2442 = vrot.slane %v2441, 4
        %v2443 = vrot.slane %v1827, 5
        %v2444 = vsel %vm1283, %v2442, %v2443
        %v2445 = vrot.slane %v2443, 4
        %v2446 = vrot.slane %v1839, 5
        %v2447 = vsel %vm1283, %v2445, %v2446
        %s2448 = scalar_lea.vmem %s2, 32
        %v2449 = vld [vmem:[%s2448] sm:$0xf]
        %v2450 = vld [vmem:[%s2448 + $0x4] sm:$0xf]
        %v2451 = vld [vmem:[%s2448 + $0x8] sm:$0xf]
        %v2452 = vld [vmem:[%s2448 + $0xc] sm:$0xf]
        %v2453 = vunpack.c.l.b16 %v2395
        %v2454 = vunpack.c.l.b16 %v2398
        %v2455 = vunpack.c.l.b16 %v2402
        %v2456 = vunpack.c.l.b16 %v2405
        %v2457 = vunpack.c.l.b16 %v2409
        %v2458 = vunpack.c.l.b16 %v2412
        %v2459 = vunpack.c.l.b16 %v2416
        %v2460 = vunpack.c.l.b16 %v2419
        %v2461 = vunpack.c.l.b16 %v2423
        %v2462 = vunpack.c.l.b16 %v2426
        %v2463 = vunpack.c.l.b16 %v2430
        %v2464 = vunpack.c.l.b16 %v2433
        %v2465 = vunpack.c.l.b16 %v2437
        %v2466 = vunpack.c.l.b16 %v2440
        %v2467 = vunpack.c.l.b16 %v2444
        %v2468 = vunpack.c.l.b16 %v2447
        %v2469 = vpack.c.b16 %v2454, %v2453
        %v2470 = vpack.c.b16 %v2456, %v2455
        %v2471 = vpack.c.b16 %v2458, %v2457
        %v2472 = vpack.c.b16 %v2460, %v2459
        %v2473 = vpack.c.b16 %v2462, %v2461
        %v2474 = vpack.c.b16 %v2464, %v2463
        %v2475 = vpack.c.b16 %v2466, %v2465
        %v2476 = vpack.c.b16 %v2468, %v2467
        %v2481 = vunpack.c.l.b16 %v2449
        %v2482 = vunpack.c.l.b16 %v2450
        %v2483 = vunpack.c.l.b16 %v2451
        %v2484 = vunpack.c.l.b16 %v2452
        %v2485 = vpack.c.b16 %v2482, %v2481
        %v2486 = vpack.c.b16 %v2484, %v2483
        %v2490 = vsel %vm2073, %v2469, 0
        %v2493 = vsel %vm2073, %v2470, 0
        %v2496 = vsel %vm2073, %v2471, 0
        %v2499 = vsel %vm2073, %v2472, 0
        %v2502 = vsel %vm2073, %v2473, 0
        %v2505 = vsel %vm2073, %v2474, 0
        %v2508 = vsel %vm2073, %v2475, 0
        %v2511 = vsel %vm2073, %v2476, 0
        %2513 = vmatprep.subr.bf16.mxu0 0
        %2514 = vmatpush1.bf16.msra.mxu0 %v2485
        %2515 = vmatprep.subr.bf16.mxu0 0
        %2516 = vmatpush1.bf16.msra.mxu0 %v2486
        %2517 = vmatprep.subr.bf16.mxu0 0
        %2518 = vmatpush1.bf16.msra.mxu0 0
        %2519 = vmatprep.subr.bf16.mxu0 0
        %2520 = vmatpush1.bf16.msra.mxu0 0
        %2521 = vmatprep.subr.bf16.mxu0 0
        %2522 = vmatpush1.bf16.msra.mxu0 0
        %2523 = vmatprep.subr.bf16.mxu0 0
        %2524 = vmatpush1.bf16.msra.mxu0 0
        %2525 = vmatprep.subr.bf16.mxu0 0
        %2526 = vmatpush1.bf16.msra.mxu0 0
        %2527 = vmatprep.subr.bf16.mxu0 0
        %2528 = vmatpush1.bf16.msra.mxu0 0
        %2529 = vmatprep.subr.bf16.mxu0 0
        %2530 = vmatpush1.bf16.msra.mxu0 0
        %2531 = vmatprep.subr.bf16.mxu0 0
        %2532 = vmatpush1.bf16.msra.mxu0 0
        %2533 = vmatprep.subr.bf16.mxu0 0
        %2534 = vmatpush1.bf16.msra.mxu0 0
        %2535 = vmatprep.subr.bf16.mxu0 0
        %2536 = vmatpush1.bf16.msra.mxu0 0
        %2537 = vmatprep.subr.bf16.mxu0 0
        %2538 = vmatpush1.bf16.msra.mxu0 0
        %2539 = vmatprep.subr.bf16.mxu0 0
        %2540 = vmatpush1.bf16.msra.mxu0 0
        %2541 = vmatprep.subr.bf16.mxu0 0
        %2542 = vmatpush1.bf16.msra.mxu0 0
        %2543 = vmatprep.subr.bf16.mxu0 0
        %2544 = vmatpush1.bf16.msra.mxu0 0
        %2545 = vmatprep.mubr.bf16.mxu0 0
        %2546 = vmatmul.mubr.bf16.gmra.mrb[0].mxu0 %v2490
        %v2547 = vpop.f32.mrb[0].mxu0
        %v2548 = vadd.f32 0.0, %v2547
        %v2549 = vpop.f32.mrb[0].mxu0
        %v2550 = vpop.f32.mrb[0].mxu0
        %v2551 = vadd.f32 0.0, %v2550
        %v2552 = vpop.f32.mrb[0].mxu0
        %2553 = vmatprep.mubr.bf16.mxu0 0
        %2554 = vmatmul.mubr.bf16.gmra.mrb[0].mxu0 %v2493
        %v2555 = vpop.f32.mrb[0].mxu0
        %v2556 = vadd.f32 0.0, %v2555
        %v2557 = vpop.f32.mrb[0].mxu0
        %v2558 = vpop.f32.mrb[0].mxu0
        %v2559 = vadd.f32 0.0, %v2558
        %v2560 = vpop.f32.mrb[0].mxu0
        %2561 = vmatprep.mubr.bf16.mxu0 0
        %2562 = vmatmul.mubr.bf16.gmra.mrb[0].mxu0 %v2496
        %v2563 = vpop.f32.mrb[0].mxu0
        %v2564 = vadd.f32 0.0, %v2563
        %v2565 = vpop.f32.mrb[0].mxu0
        %v2566 = vpop.f32.mrb[0].mxu0
        %v2567 = vadd.f32 0.0, %v2566
        %v2568 = vpop.f32.mrb[0].mxu0
        %2569 = vmatprep.mubr.bf16.mxu0 0
        %2570 = vmatmul.mubr.bf16.gmra.mrb[0].mxu0 %v2499
        %v2571 = vpop.f32.mrb[0].mxu0
        %v2572 = vadd.f32 0.0, %v2571
        %v2573 = vpop.f32.mrb[0].mxu0
        %v2574 = vpop.f32.mrb[0].mxu0
        %v2575 = vadd.f32 0.0, %v2574
        %v2576 = vpop.f32.mrb[0].mxu0
        %2577 = vmatprep.mubr.bf16.mxu0 0
        %2578 = vmatmul.mubr.bf16.gmra.mrb[0].mxu0 %v2502
        %v2579 = vpop.f32.mrb[0].mxu0
        %v2580 = vadd.f32 0.0, %v2579
        %v2581 = vpop.f32.mrb[0].mxu0
        %v2582 = vpop.f32.mrb[0].mxu0
        %v2583 = vadd.f32 0.0, %v2582
        %v2584 = vpop.f32.mrb[0].mxu0
        %2585 = vmatprep.mubr.bf16.mxu0 0
        %2586 = vmatmul.mubr.bf16.gmra.mrb[0].mxu0 %v2505
        %v2587 = vpop.f32.mrb[0].mxu0
        %v2588 = vadd.f32 0.0, %v2587
        %v2589 = vpop.f32.mrb[0].mxu0
        %v2590 = vpop.f32.mrb[0].mxu0
        %v2591 = vadd.f32 0.0, %v2590
        %v2592 = vpop.f32.mrb[0].mxu0
        %2593 = vmatprep.mubr.bf16.mxu0 0
        %2594 = vmatmul.mubr.bf16.gmra.mrb[0].mxu0 %v2508
        %v2595 = vpop.f32.mrb[0].mxu0
        %v2596 = vadd.f32 0.0, %v2595
        %v2597 = vpop.f32.mrb[0].mxu0
        %v2598 = vpop.f32.mrb[0].mxu0
        %v2599 = vadd.f32 0.0, %v2598
        %v2600 = vpop.f32.mrb[0].mxu0
        %2601 = vmatprep.mubr.bf16.mxu0 0
        %2602 = vmatmul.mubr.bf16.gmra.mrb[0].mxu0 %v2511
        %v2603 = vpop.f32.mrb[0].mxu0
        %v2604 = vadd.f32 0.0, %v2603
        %v2605 = vpop.f32.mrb[0].mxu0
        %v2606 = vpop.f32.mrb[0].mxu0
        %v2607 = vadd.f32 0.0, %v2606
        %v2608 = vpop.f32.mrb[0].mxu0
        %2609 = vdwg.mxu0
        %v2610 = vadd.f32 %v2306, %v2548
        %v2611 = vadd.f32 %v2309, %v2551
        %v2612 = vadd.f32 %v2314, %v2556
        %v2613 = vadd.f32 %v2317, %v2559
        %v2614 = vadd.f32 %v2322, %v2564
        %v2615 = vadd.f32 %v2325, %v2567
        %v2616 = vadd.f32 %v2330, %v2572
        %v2617 = vadd.f32 %v2333, %v2575
        %v2618 = vadd.f32 %v2338, %v2580
        %v2619 = vadd.f32 %v2341, %v2583
        %v2620 = vadd.f32 %v2346, %v2588
        %v2621 = vadd.f32 %v2349, %v2591
        %v2622 = vadd.f32 %v2354, %v2596
        %v2623 = vadd.f32 %v2357, %v2599
        %v2624 = vadd.f32 %v2362, %v2604
        %v2625 = vadd.f32 %v2365, %v2607
        %v2627 = vlaneseq
        %v2628 = vshrl.u32 %v2627, 7
        %v2629 = vsub.s32 0, %v2628
        %v2630 = vrot.slane %v1811, %v2629
        %v2632 = vadd.f32 %v2610, %v2630
        %v2633 = vadd.f32 %v2611, %v2630
        %v2634 = vadd.f32 %v2612, %v2630
        %v2635 = vadd.f32 %v2613, %v2630
        %v2636 = vadd.f32 %v2614, %v2630
        %v2637 = vadd.f32 %v2615, %v2630
        %v2638 = vadd.f32 %v2616, %v2630
        %v2639 = vadd.f32 %v2617, %v2630
        %v2640 = vadd.f32 %v2618, %v2630
        %v2641 = vadd.f32 %v2619, %v2630
        %v2642 = vadd.f32 %v2620, %v2630
        %v2643 = vadd.f32 %v2621, %v2630
        %v2644 = vadd.f32 %v2622, %v2630
        %v2645 = vadd.f32 %v2623, %v2630
        %v2646 = vadd.f32 %v2624, %v2630
        %v2647 = vadd.f32 %v2625, %v2630
        %v2648 = vmax.f32 %v2632, 0.0
        %v2649 = vmax.f32 %v2633, 0.0
        %v2650 = vmax.f32 %v2634, 0.0
        %v2651 = vmax.f32 %v2635, 0.0
        %v2652 = vmax.f32 %v2636, 0.0
        %v2653 = vmax.f32 %v2637, 0.0
        %v2654 = vmax.f32 %v2638, 0.0
        %v2655 = vmax.f32 %v2639, 0.0
        %v2656 = vmax.f32 %v2640, 0.0
        %v2657 = vmax.f32 %v2641, 0.0
        %v2658 = vmax.f32 %v2642, 0.0
        %v2659 = vmax.f32 %v2643, 0.0
        %v2660 = vmax.f32 %v2644, 0.0
        %v2661 = vmax.f32 %v2645, 0.0
        %v2662 = vmax.f32 %v2646, 0.0
        %v2663 = vmax.f32 %v2647, 0.0
        %v2664 = vpack.c.bf16 %v2649, %v2648
        %v2665 = vpack.c.bf16 %v2651, %v2650
        %v2666 = vpack.c.bf16 %v2653, %v2652
        %v2667 = vpack.c.bf16 %v2655, %v2654
        %v2668 = vpack.c.bf16 %v2657, %v2656
        %v2669 = vpack.c.bf16 %v2659, %v2658
        %v2670 = vpack.c.bf16 %v2661, %v2660
        %v2671 = vpack.c.bf16 %v2663, %v2662
        %v2680 = vunpack.c.l.b16 %v2664
        %v2681 = vunpack.c.h.b16 %v2664
        %v2682 = vunpack.c.l.b16 %v2665
        %v2683 = vunpack.c.h.b16 %v2665
        %v2684 = vunpack.c.l.b16 %v2666
        %v2685 = vunpack.c.h.b16 %v2666
        %v2686 = vunpack.c.l.b16 %v2667
        %v2687 = vunpack.c.h.b16 %v2667
        %v2688 = vunpack.c.l.b16 %v2668
        %v2689 = vunpack.c.h.b16 %v2668
        %v2690 = vunpack.c.l.b16 %v2669
        %v2691 = vunpack.c.h.b16 %v2669
        %v2692 = vunpack.c.l.b16 %v2670
        %v2693 = vunpack.c.h.b16 %v2670
        %v2694 = vunpack.c.l.b16 %v2671
        %v2695 = vunpack.c.h.b16 %v2671
        %v2696 = vpack.c.b16 %v2680, %v2680
        %v2697 = vpack.c.b16 %v2681, %v2681
        %v2698 = vpack.c.b16 %v2682, %v2682
        %v2699 = vpack.c.b16 %v2683, %v2683
        %v2700 = vpack.c.b16 %v2684, %v2684
        %v2701 = vpack.c.b16 %v2685, %v2685
        %v2702 = vpack.c.b16 %v2686, %v2686
        %v2703 = vpack.c.b16 %v2687, %v2687
        %v2704 = vpack.c.b16 %v2688, %v2688
        %v2705 = vpack.c.b16 %v2689, %v2689
        %v2706 = vpack.c.b16 %v2690, %v2690
        %v2707 = vpack.c.b16 %v2691, %v2691
        %v2708 = vpack.c.b16 %v2692, %v2692
        %v2709 = vpack.c.b16 %v2693, %v2693
        %v2710 = vpack.c.b16 %v2694, %v2694
        %v2711 = vpack.c.b16 %v2695, %v2695
        %v2713 = vshrl.u32 %v2696, 16
        %v2715 = vrot.slane %v2713, 7
        %v2716 = vshll.u32 %v2696, 16
        %v2718 = vor.u32 %v2715, %v2716
        %v2719 = vrot.slane %v2715, 4
        %v2721 = vshrl.u32 %v2697, 16
        %v2723 = vrot.slane %v2721, 7
        %v2724 = vshll.u32 %v2697, 16
        %v2726 = vor.u32 %v2723, %v2724
        %v2727 = vsel %vm500, %v2719, %v2726
        %v2728 = vrot.slane %v2723, 4
        %v2730 = vshrl.u32 %v2698, 16
        %v2732 = vrot.slane %v2730, 7
        %v2733 = vshll.u32 %v2698, 16
        %v2735 = vor.u32 %v2732, %v2733
        %v2736 = vrot.slane %v2732, 4
        %v2738 = vshrl.u32 %v2699, 16
        %v2740 = vrot.slane %v2738, 7
        %v2741 = vshll.u32 %v2699, 16
        %v2743 = vor.u32 %v2740, %v2741
        %v2744 = vsel %vm500, %v2736, %v2743
        %v2745 = vrot.slane %v2740, 4
        %v2747 = vshrl.u32 %v2700, 16
        %v2749 = vrot.slane %v2747, 7
        %v2750 = vshll.u32 %v2700, 16
        %v2752 = vor.u32 %v2749, %v2750
        %v2753 = vrot.slane %v2749, 4
        %v2755 = vshrl.u32 %v2701, 16
        %v2757 = vrot.slane %v2755, 7
        %v2758 = vshll.u32 %v2701, 16
        %v2760 = vor.u32 %v2757, %v2758
        %v2761 = vsel %vm500, %v2753, %v2760
        %v2762 = vrot.slane %v2757, 4
        %v2764 = vshrl.u32 %v2702, 16
        %v2766 = vrot.slane %v2764, 7
        %v2767 = vshll.u32 %v2702, 16
        %v2769 = vor.u32 %v2766, %v2767
        %v2770 = vrot.slane %v2766, 4
        %v2772 = vshrl.u32 %v2703, 16
        %v2774 = vrot.slane %v2772, 7
        %v2775 = vshll.u32 %v2703, 16
        %v2777 = vor.u32 %v2774, %v2775
        %v2778 = vsel %vm500, %v2770, %v2777
        %v2779 = vrot.slane %v2774, 4
        %v2781 = vshrl.u32 %v2704, 16
        %v2783 = vrot.slane %v2781, 7
        %v2784 = vshll.u32 %v2704, 16
        %v2786 = vor.u32 %v2783, %v2784
        %v2787 = vrot.slane %v2783, 4
        %v2789 = vshrl.u32 %v2705, 16
        %v2791 = vrot.slane %v2789, 7
        %v2792 = vshll.u32 %v2705, 16
        %v2794 = vor.u32 %v2791, %v2792
        %v2795 = vsel %vm500, %v2787, %v2794
        %v2796 = vrot.slane %v2791, 4
        %v2798 = vshrl.u32 %v2706, 16
        %v2800 = vrot.slane %v2798, 7
        %v2801 = vshll.u32 %v2706, 16
        %v2803 = vor.u32 %v2800, %v2801
        %v2804 = vrot.slane %v2800, 4
        %v2806 = vshrl.u32 %v2707, 16
        %v2808 = vrot.slane %v2806, 7
        %v2809 = vshll.u32 %v2707, 16
        %v2811 = vor.u32 %v2808, %v2809
        %v2812 = vsel %vm500, %v2804, %v2811
        %v2813 = vrot.slane %v2808, 4
        %v2815 = vshrl.u32 %v2708, 16
        %v2817 = vrot.slane %v2815, 7
        %v2818 = vshll.u32 %v2708, 16
        %v2820 = vor.u32 %v2817, %v2818
        %v2821 = vrot.slane %v2817, 4
        %v2823 = vshrl.u32 %v2709, 16
        %v2825 = vrot.slane %v2823, 7
        %v2826 = vshll.u32 %v2709, 16
        %v2828 = vor.u32 %v2825, %v2826
        %v2829 = vsel %vm500, %v2821, %v2828
        %v2830 = vrot.slane %v2825, 4
        %v2832 = vshrl.u32 %v2710, 16
        %v2834 = vrot.slane %v2832, 7
        %v2835 = vshll.u32 %v2710, 16
        %v2837 = vor.u32 %v2834, %v2835
        %v2838 = vrot.slane %v2834, 4
        %v2840 = vshrl.u32 %v2711, 16
        %v2842 = vrot.slane %v2840, 7
        %v2843 = vshll.u32 %v2711, 16
        %v2845 = vor.u32 %v2842, %v2843
        %v2846 = vsel %vm500, %v2838, %v2845
        %v2847 = vrot.slane %v2842, 4
        %v2872 = vld [vmem:[#allocation4] sm:$0xf]
        %v2873 = vsel %vm1753, %v2718, %v2872
        %2874 = vst [vmem:[#allocation4] sm:$0xf] %v2873
        %2875 = vst.msk [vmem:[#allocation4 + $0x4] sm:$0xf] %vm1757, %v2727
        %v2876 = vld [vmem:[#allocation4 + $0x8] sm:$0x1]
        %v2877 = vsel %vm337, %v2728, %v2876
        %2878 = vst [vmem:[#allocation4 + $0x8] sm:$0x1] %v2877
        %v2879 = vld [vmem:[#allocation4 + $0xc] sm:$0xf]
        %v2880 = vsel %vm1753, %v2735, %v2879
        %2881 = vst [vmem:[#allocation4 + $0xc] sm:$0xf] %v2880
        %2882 = vst.msk [vmem:[#allocation4 + $0x10] sm:$0xf] %vm1757, %v2744
        %v2883 = vld [vmem:[#allocation4 + $0x14] sm:$0x1]
        %v2884 = vsel %vm337, %v2745, %v2883
        %2885 = vst [vmem:[#allocation4 + $0x14] sm:$0x1] %v2884
        %v2886 = vld [vmem:[#allocation4 + $0x18] sm:$0xf]
        %v2887 = vsel %vm1753, %v2752, %v2886
        %2888 = vst [vmem:[#allocation4 + $0x18] sm:$0xf] %v2887
        %2889 = vst.msk [vmem:[#allocation4 + $0x1c] sm:$0xf] %vm1757, %v2761
        %v2890 = vld [vmem:[#allocation4 + $0x20] sm:$0x1]
        %v2891 = vsel %vm337, %v2762, %v2890
        %2892 = vst [vmem:[#allocation4 + $0x20] sm:$0x1] %v2891
        %v2893 = vld [vmem:[#allocation4 + $0x24] sm:$0xf]
        %v2894 = vsel %vm1753, %v2769, %v2893
        %2895 = vst [vmem:[#allocation4 + $0x24] sm:$0xf] %v2894
        %2896 = vst.msk [vmem:[#allocation4 + $0x28] sm:$0xf] %vm1757, %v2778
        %v2897 = vld [vmem:[#allocation4 + $0x2c] sm:$0x1]
        %v2898 = vsel %vm337, %v2779, %v2897
        %2899 = vst [vmem:[#allocation4 + $0x2c] sm:$0x1] %v2898
        %v2900 = vld [vmem:[#allocation4 + $0x30] sm:$0xf]
        %v2901 = vsel %vm1753, %v2786, %v2900
        %2902 = vst [vmem:[#allocation4 + $0x30] sm:$0xf] %v2901
        %2903 = vst.msk [vmem:[#allocation4 + $0x34] sm:$0xf] %vm1757, %v2795
        %v2904 = vld [vmem:[#allocation4 + $0x38] sm:$0x1]
        %v2905 = vsel %vm337, %v2796, %v2904
        %2906 = vst [vmem:[#allocation4 + $0x38] sm:$0x1] %v2905
        %v2907 = vld [vmem:[#allocation4 + $0x3c] sm:$0xf]
        %v2908 = vsel %vm1753, %v2803, %v2907
        %2909 = vst [vmem:[#allocation4 + $0x3c] sm:$0xf] %v2908
        %2910 = vst.msk [vmem:[#allocation4 + $0x40] sm:$0xf] %vm1757, %v2812
        %v2911 = vld [vmem:[#allocation4 + $0x44] sm:$0x1]
        %v2912 = vsel %vm337, %v2813, %v2911
        %2913 = vst [vmem:[#allocation4 + $0x44] sm:$0x1] %v2912
        %v2914 = vld [vmem:[#allocation4 + $0x48] sm:$0xf]
        %v2915 = vsel %vm1753, %v2820, %v2914
        %2916 = vst [vmem:[#allocation4 + $0x48] sm:$0xf] %v2915
        %2917 = vst.msk [vmem:[#allocation4 + $0x4c] sm:$0xf] %vm1757, %v2829
        %v2918 = vld [vmem:[#allocation4 + $0x50] sm:$0x1]
        %v2919 = vsel %vm337, %v2830, %v2918
        %2920 = vst [vmem:[#allocation4 + $0x50] sm:$0x1] %v2919
        %v2921 = vld [vmem:[#allocation4 + $0x54] sm:$0xf]
        %v2922 = vsel %vm1753, %v2837, %v2921
        %2923 = vst [vmem:[#allocation4 + $0x54] sm:$0xf] %v2922
        %2924 = vst.msk [vmem:[#allocation4 + $0x58] sm:$0xf] %vm1757, %v2846
        %v2925 = vld [vmem:[#allocation4 + $0x5c] sm:$0x1]
        %v2926 = vsel %vm337, %v2847, %v2925
        %2927 = vst [vmem:[#allocation4 + $0x5c] sm:$0x1] %v2926
        %v2928 = vld [vmem:[%s6] sm:$0x1]
        %v2929 = vld [vmem:[#allocation4] sm:$0xf]
        %v2930 = vld [vmem:[#allocation4 + $0x4] sm:$0xf]
        %v2931 = vld [vmem:[#allocation4 + $0xc] sm:$0xf]
        %v2932 = vld [vmem:[#allocation4 + $0x10] sm:$0xf]
        %v2933 = vld [vmem:[#allocation4 + $0x18] sm:$0xf]
        %v2934 = vld [vmem:[#allocation4 + $0x1c] sm:$0xf]
        %v2935 = vld [vmem:[#allocation4 + $0x24] sm:$0xf]
        %v2936 = vld [vmem:[#allocation4 + $0x28] sm:$0xf]
        %v2937 = vld [vmem:[#allocation4 + $0x30] sm:$0xf]
        %v2938 = vld [vmem:[#allocation4 + $0x34] sm:$0xf]
        %v2939 = vld [vmem:[#allocation4 + $0x3c] sm:$0xf]
        %v2940 = vld [vmem:[#allocation4 + $0x40] sm:$0xf]
        %v2941 = vld [vmem:[#allocation4 + $0x48] sm:$0xf]
        %v2942 = vld [vmem:[#allocation4 + $0x4c] sm:$0xf]
        %v2943 = vld [vmem:[#allocation4 + $0x54] sm:$0xf]
        %v2944 = vld [vmem:[#allocation4 + $0x58] sm:$0xf]
        %v2945 = vld [vmem:[%s3] sm:$0xf]
        %v2946 = vld [vmem:[%s3 + $0x4] sm:$0xf]
        %v2947 = vld [vmem:[%s3 + $0x8] sm:$0xf]
        %v2948 = vld [vmem:[%s3 + $0xc] sm:$0xf]
        %v2949 = vld [vmem:[#allocation4 + $0x8] sm:$0x1]
        %v2950 = vld [vmem:[#allocation4 + $0x14] sm:$0x1]
        %v2951 = vld [vmem:[#allocation4 + $0x20] sm:$0x1]
        %v2952 = vld [vmem:[#allocation4 + $0x2c] sm:$0x1]
        %v2953 = vld [vmem:[#allocation4 + $0x38] sm:$0x1]
        %v2954 = vld [vmem:[#allocation4 + $0x44] sm:$0x1]
        %v2955 = vld [vmem:[#allocation4 + $0x50] sm:$0x1]
        %v2956 = vld [vmem:[#allocation4 + $0x5c] sm:$0x1]
        %v2958 = vshrl.u32 %v2929, 16
        %v2960 = vrot.slane %v2958, 4
        %v2961 = vshll.u32 %v2929, 16
        %v2963 = vrot.slane %v2961, 5
        %v2964 = vor.u32 %v2960, %v2963
        %v2965 = vrot.slane %v2964, 4
        %v2967 = vshll.u32 %v2930, 16
        %v2969 = vrot.slane %v2967, 5
        %v2970 = vsel %vm748, %v2965, %v2969
        %v2971 = vshrl.u32 %v2930, 16
        %v2973 = vrot.slane %v2971, 4
        %v2974 = vor.u32 %v2973, %v2969
        %v2975 = vrot.slane %v2974, 4
        %v2977 = vshll.u32 %v2949, 16
        %v2979 = vrot.slane %v2977, 5
        %v2980 = vsel %vm748, %v2975, %v2979
        %v2982 = vshrl.u32 %v2931, 16
        %v2984 = vrot.slane %v2982, 4
        %v2985 = vshll.u32 %v2931, 16
        %v2987 = vrot.slane %v2985, 5
        %v2988 = vor.u32 %v2984, %v2987
        %v2989 = vrot.slane %v2988, 4
        %v2991 = vshll.u32 %v2932, 16
        %v2993 = vrot.slane %v2991, 5
        %v2994 = vsel %vm748, %v2989, %v2993
        %v2995 = vshrl.u32 %v2932, 16
        %v2997 = vrot.slane %v2995, 4
        %v2998 = vor.u32 %v2997, %v2993
        %v2999 = vrot.slane %v2998, 4
        %v3001 = vshll.u32 %v2950, 16
        %v3003 = vrot.slane %v3001, 5
        %v3004 = vsel %vm748, %v2999, %v3003
        %v3006 = vshrl.u32 %v2933, 16
        %v3008 = vrot.slane %v3006, 4
        %v3009 = vshll.u32 %v2933, 16
        %v3011 = vrot.slane %v3009, 5
        %v3012 = vor.u32 %v3008, %v3011
        %v3013 = vrot.slane %v3012, 4
        %v3015 = vshll.u32 %v2934, 16
        %v3017 = vrot.slane %v3015, 5
        %v3018 = vsel %vm748, %v3013, %v3017
        %v3019 = vshrl.u32 %v2934, 16
        %v3021 = vrot.slane %v3019, 4
        %v3022 = vor.u32 %v3021, %v3017
        %v3023 = vrot.slane %v3022, 4
        %v3025 = vshll.u32 %v2951, 16
        %v3027 = vrot.slane %v3025, 5
        %v3028 = vsel %vm748, %v3023, %v3027
        %v3030 = vshrl.u32 %v2935, 16
        %v3032 = vrot.slane %v3030, 4
        %v3033 = vshll.u32 %v2935, 16
        %v3035 = vrot.slane %v3033, 5
        %v3036 = vor.u32 %v3032, %v3035
        %v3037 = vrot.slane %v3036, 4
        %v3039 = vshll.u32 %v2936, 16
        %v3041 = vrot.slane %v3039, 5
        %v3042 = vsel %vm748, %v3037, %v3041
        %v3043 = vshrl.u32 %v2936, 16
        %v3045 = vrot.slane %v3043, 4
        %v3046 = vor.u32 %v3045, %v3041
        %v3047 = vrot.slane %v3046, 4
        %v3049 = vshll.u32 %v2952, 16
        %v3051 = vrot.slane %v3049, 5
        %v3052 = vsel %vm748, %v3047, %v3051
        %v3054 = vshrl.u32 %v2937, 16
        %v3056 = vrot.slane %v3054, 4
        %v3057 = vshll.u32 %v2937, 16
        %v3059 = vrot.slane %v3057, 5
        %v3060 = vor.u32 %v3056, %v3059
        %v3061 = vrot.slane %v3060, 4
        %v3063 = vshll.u32 %v2938, 16
        %v3065 = vrot.slane %v3063, 5
        %v3066 = vsel %vm748, %v3061, %v3065
        %v3067 = vshrl.u32 %v2938, 16
        %v3069 = vrot.slane %v3067, 4
        %v3070 = vor.u32 %v3069, %v3065
        %v3071 = vrot.slane %v3070, 4
        %v3073 = vshll.u32 %v2953, 16
        %v3075 = vrot.slane %v3073, 5
        %v3076 = vsel %vm748, %v3071, %v3075
        %v3078 = vshrl.u32 %v2939, 16
        %v3080 = vrot.slane %v3078, 4
        %v3081 = vshll.u32 %v2939, 16
        %v3083 = vrot.slane %v3081, 5
        %v3084 = vor.u32 %v3080, %v3083
        %v3085 = vrot.slane %v3084, 4
        %v3087 = vshll.u32 %v2940, 16
        %v3089 = vrot.slane %v3087, 5
        %v3090 = vsel %vm748, %v3085, %v3089
        %v3091 = vshrl.u32 %v2940, 16
        %v3093 = vrot.slane %v3091, 4
        %v3094 = vor.u32 %v3093, %v3089
        %v3095 = vrot.slane %v3094, 4
        %v3097 = vshll.u32 %v2954, 16
        %v3099 = vrot.slane %v3097, 5
        %v3100 = vsel %vm748, %v3095, %v3099
        %v3102 = vshrl.u32 %v2941, 16
        %v3104 = vrot.slane %v3102, 4
        %v3105 = vshll.u32 %v2941, 16
        %v3107 = vrot.slane %v3105, 5
        %v3108 = vor.u32 %v3104, %v3107
        %v3109 = vrot.slane %v3108, 4
        %v3111 = vshll.u32 %v2942, 16
        %v3113 = vrot.slane %v3111, 5
        %v3114 = vsel %vm748, %v3109, %v3113
        %v3115 = vshrl.u32 %v2942, 16
        %v3117 = vrot.slane %v3115, 4
        %v3118 = vor.u32 %v3117, %v3113
        %v3119 = vrot.slane %v3118, 4
        %v3121 = vshll.u32 %v2955, 16
        %v3123 = vrot.slane %v3121, 5
        %v3124 = vsel %vm748, %v3119, %v3123
        %v3126 = vshrl.u32 %v2943, 16
        %v3128 = vrot.slane %v3126, 4
        %v3129 = vshll.u32 %v2943, 16
        %v3131 = vrot.slane %v3129, 5
        %v3132 = vor.u32 %v3128, %v3131
        %v3133 = vrot.slane %v3132, 4
        %v3135 = vshll.u32 %v2944, 16
        %v3137 = vrot.slane %v3135, 5
        %v3138 = vsel %vm748, %v3133, %v3137
        %v3139 = vshrl.u32 %v2944, 16
        %v3141 = vrot.slane %v3139, 4
        %v3142 = vor.u32 %v3141, %v3137
        %v3143 = vrot.slane %v3142, 4
        %v3145 = vshll.u32 %v2956, 16
        %v3147 = vrot.slane %v3145, 5
        %v3148 = vsel %vm748, %v3143, %v3147
        %s3149 = scalar_lea.vmem %s3, 16
        %v3150 = vld [vmem:[%s3149] sm:$0xf]
        %v3151 = vld [vmem:[%s3149 + $0x4] sm:$0xf]
        %v3152 = vld [vmem:[%s3149 + $0x8] sm:$0xf]
        %v3153 = vld [vmem:[%s3149 + $0xc] sm:$0xf]
        %v3154 = vunpack.c.l.b16 %v2970
        %v3155 = vunpack.c.l.b16 %v2980
        %v3156 = vunpack.c.l.b16 %v2994
        %v3157 = vunpack.c.l.b16 %v3004
        %v3158 = vunpack.c.l.b16 %v3018
        %v3159 = vunpack.c.l.b16 %v3028
        %v3160 = vunpack.c.l.b16 %v3042
        %v3161 = vunpack.c.l.b16 %v3052
        %v3162 = vunpack.c.l.b16 %v3066
        %v3163 = vunpack.c.l.b16 %v3076
        %v3164 = vunpack.c.l.b16 %v3090
        %v3165 = vunpack.c.l.b16 %v3100
        %v3166 = vunpack.c.l.b16 %v3114
        %v3167 = vunpack.c.l.b16 %v3124
        %v3168 = vunpack.c.l.b16 %v3138
        %v3169 = vunpack.c.l.b16 %v3148
        %v3170 = vpack.c.b16 %v3155, %v3154
        %v3171 = vpack.c.b16 %v3157, %v3156
        %v3172 = vpack.c.b16 %v3159, %v3158
        %v3173 = vpack.c.b16 %v3161, %v3160
        %v3174 = vpack.c.b16 %v3163, %v3162
        %v3175 = vpack.c.b16 %v3165, %v3164
        %v3176 = vpack.c.b16 %v3167, %v3166
        %v3177 = vpack.c.b16 %v3169, %v3168
        %v3182 = vunpack.c.l.b16 %v3150
        %v3183 = vunpack.c.l.b16 %v3151
        %v3184 = vunpack.c.l.b16 %v3152
        %v3185 = vunpack.c.l.b16 %v3153
        %v3186 = vpack.c.b16 %v3183, %v3182
        %v3187 = vpack.c.b16 %v3185, %v3184
        %v3191 = vsel %vm2073, %v3170, 0
        %v3194 = vsel %vm2073, %v3171, 0
        %v3197 = vsel %vm2073, %v3172, 0
        %v3200 = vsel %vm2073, %v3173, 0
        %v3203 = vsel %vm2073, %v3174, 0
        %v3206 = vsel %vm2073, %v3175, 0
        %v3209 = vsel %vm2073, %v3176, 0
        %v3212 = vsel %vm2073, %v3177, 0
        %3214 = vmatprep.subr.bf16.mxu0 0
        %3215 = vmatpush1.bf16.msra.mxu0 %v3186
        %3216 = vmatprep.subr.bf16.mxu0 0
        %3217 = vmatpush1.bf16.msra.mxu0 %v3187
        %3218 = vmatprep.subr.bf16.mxu0 0
        %3219 = vmatpush1.bf16.msra.mxu0 0
        %3220 = vmatprep.subr.bf16.mxu0 0
        %3221 = vmatpush1.bf16.msra.mxu0 0
        %3222 = vmatprep.subr.bf16.mxu0 0
        %3223 = vmatpush1.bf16.msra.mxu0 0
        %3224 = vmatprep.subr.bf16.mxu0 0
        %3225 = vmatpush1.bf16.msra.mxu0 0
        %3226 = vmatprep.subr.bf16.mxu0 0
        %3227 = vmatpush1.bf16.msra.mxu0 0
        %3228 = vmatprep.subr.bf16.mxu0 0
        %3229 = vmatpush1.bf16.msra.mxu0 0
        %3230 = vmatprep.subr.bf16.mxu0 0
        %3231 = vmatpush1.bf16.msra.mxu0 0
        %3232 = vmatprep.subr.bf16.mxu0 0
        %3233 = vmatpush1.bf16.msra.mxu0 0
        %3234 = vmatprep.subr.bf16.mxu0 0
        %3235 = vmatpush1.bf16.msra.mxu0 0
        %3236 = vmatprep.subr.bf16.mxu0 0
        %3237 = vmatpush1.bf16.msra.mxu0 0
        %3238 = vmatprep.subr.bf16.mxu0 0
        %3239 = vmatpush1.bf16.msra.mxu0 0
        %3240 = vmatprep.subr.bf16.mxu0 0
        %3241 = vmatpush1.bf16.msra.mxu0 0
        %3242 = vmatprep.subr.bf16.mxu0 0
        %3243 = vmatpush1.bf16.msra.mxu0 0
        %3244 = vmatprep.subr.bf16.mxu0 0
        %3245 = vmatpush1.bf16.msra.mxu0 0
        %3246 = vmatprep.mubr.bf16.mxu0 0
        %3247 = vmatmul.mubr.bf16.gmra.mrb[0].mxu0 %v3191
        %v3248 = vpop.f32.mrb[0].mxu0
        %v3249 = vadd.f32 0.0, %v3248
        %v3250 = vpop.f32.mrb[0].mxu0
        %v3251 = vpop.f32.mrb[0].mxu0
        %v3252 = vadd.f32 0.0, %v3251
        %v3253 = vpop.f32.mrb[0].mxu0
        %3254 = vmatprep.mubr.bf16.mxu0 0
        %3255 = vmatmul.mubr.bf16.gmra.mrb[0].mxu0 %v3194
        %v3256 = vpop.f32.mrb[0].mxu0
        %v3257 = vadd.f32 0.0, %v3256
        %v3258 = vpop.f32.mrb[0].mxu0
        %v3259 = vpop.f32.mrb[0].mxu0
        %v3260 = vadd.f32 0.0, %v3259
        %v3261 = vpop.f32.mrb[0].mxu0
        %3262 = vmatprep.mubr.bf16.mxu0 0
        %3263 = vmatmul.mubr.bf16.gmra.mrb[0].mxu0 %v3197
        %v3264 = vpop.f32.mrb[0].mxu0
        %v3265 = vadd.f32 0.0, %v3264
        %v3266 = vpop.f32.mrb[0].mxu0
        %v3267 = vpop.f32.mrb[0].mxu0
        %v3268 = vadd.f32 0.0, %v3267
        %v3269 = vpop.f32.mrb[0].mxu0
        %3270 = vmatprep.mubr.bf16.mxu0 0
        %3271 = vmatmul.mubr.bf16.gmra.mrb[0].mxu0 %v3200
        %v3272 = vpop.f32.mrb[0].mxu0
        %v3273 = vadd.f32 0.0, %v3272
        %v3274 = vpop.f32.mrb[0].mxu0
        %v3275 = vpop.f32.mrb[0].mxu0
        %v3276 = vadd.f32 0.0, %v3275
        %v3277 = vpop.f32.mrb[0].mxu0
        %3278 = vmatprep.mubr.bf16.mxu0 0
        %3279 = vmatmul.mubr.bf16.gmra.mrb[0].mxu0 %v3203
        %v3280 = vpop.f32.mrb[0].mxu0
        %v3281 = vadd.f32 0.0, %v3280
        %v3282 = vpop.f32.mrb[0].mxu0
        %v3283 = vpop.f32.mrb[0].mxu0
        %v3284 = vadd.f32 0.0, %v3283
        %v3285 = vpop.f32.mrb[0].mxu0
        %3286 = vmatprep.mubr.bf16.mxu0 0
        %3287 = vmatmul.mubr.bf16.gmra.mrb[0].mxu0 %v3206
        %v3288 = vpop.f32.mrb[0].mxu0
        %v3289 = vadd.f32 0.0, %v3288
        %v3290 = vpop.f32.mrb[0].mxu0
        %v3291 = vpop.f32.mrb[0].mxu0
        %v3292 = vadd.f32 0.0, %v3291
        %v3293 = vpop.f32.mrb[0].mxu0
        %3294 = vmatprep.mubr.bf16.mxu0 0
        %3295 = vmatmul.mubr.bf16.gmra.mrb[0].mxu0 %v3209
        %v3296 = vpop.f32.mrb[0].mxu0
        %v3297 = vadd.f32 0.0, %v3296
        %v3298 = vpop.f32.mrb[0].mxu0
        %v3299 = vpop.f32.mrb[0].mxu0
        %v3300 = vadd.f32 0.0, %v3299
        %v3301 = vpop.f32.mrb[0].mxu0
        %3302 = vmatprep.mubr.bf16.mxu0 0
        %3303 = vmatmul.mubr.bf16.gmra.mrb[0].mxu0 %v3212
        %v3304 = vpop.f32.mrb[0].mxu0
        %v3305 = vadd.f32 0.0, %v3304
        %v3306 = vpop.f32.mrb[0].mxu0
        %v3307 = vpop.f32.mrb[0].mxu0
        %v3308 = vadd.f32 0.0, %v3307
        %v3309 = vpop.f32.mrb[0].mxu0
        %3310 = vdwg.mxu0
        %v3327 = vunpack.c.l.b16 %v2929
        %v3328 = vunpack.c.l.b16 %v2930
        %v3329 = vunpack.c.l.b16 %v2931
        %v3330 = vunpack.c.l.b16 %v2932
        %v3331 = vunpack.c.l.b16 %v2933
        %v3332 = vunpack.c.l.b16 %v2934
        %v3333 = vunpack.c.l.b16 %v2935
        %v3334 = vunpack.c.l.b16 %v2936
        %v3335 = vunpack.c.l.b16 %v2937
        %v3336 = vunpack.c.l.b16 %v2938
        %v3337 = vunpack.c.l.b16 %v2939
        %v3338 = vunpack.c.l.b16 %v2940
        %v3339 = vunpack.c.l.b16 %v2941
        %v3340 = vunpack.c.l.b16 %v2942
        %v3341 = vunpack.c.l.b16 %v2943
        %v3342 = vunpack.c.l.b16 %v2944
        %v3343 = vpack.c.b16 %v3328, %v3327
        %v3344 = vpack.c.b16 %v3330, %v3329
        %v3345 = vpack.c.b16 %v3332, %v3331
        %v3346 = vpack.c.b16 %v3334, %v3333
        %v3347 = vpack.c.b16 %v3336, %v3335
        %v3348 = vpack.c.b16 %v3338, %v3337
        %v3349 = vpack.c.b16 %v3340, %v3339
        %v3350 = vpack.c.b16 %v3342, %v3341
        %v3355 = vunpack.c.l.b16 %v2945
        %v3356 = vunpack.c.l.b16 %v2946
        %v3357 = vunpack.c.l.b16 %v2947
        %v3358 = vunpack.c.l.b16 %v2948
        %v3359 = vpack.c.b16 %v3356, %v3355
        %v3360 = vpack.c.b16 %v3358, %v3357
        %v3364 = vsel %vm2073, %v3343, 0
        %v3367 = vsel %vm2073, %v3344, 0
        %v3370 = vsel %vm2073, %v3345, 0
        %v3373 = vsel %vm2073, %v3346, 0
        %v3376 = vsel %vm2073, %v3347, 0
        %v3379 = vsel %vm2073, %v3348, 0
        %v3382 = vsel %vm2073, %v3349, 0
        %v3385 = vsel %vm2073, %v3350, 0
        %3387 = vmatprep.subr.bf16.mxu0 0
        %3388 = vmatpush1.bf16.msra.mxu0 %v3359
        %3389 = vmatprep.subr.bf16.mxu0 0
        %3390 = vmatpush1.bf16.msra.mxu0 %v3360
        %3391 = vmatprep.subr.bf16.mxu0 0
        %3392 = vmatpush1.bf16.msra.mxu0 0
        %3393 = vmatprep.subr.bf16.mxu0 0
        %3394 = vmatpush1.bf16.msra.mxu0 0
        %3395 = vmatprep.subr.bf16.mxu0 0
        %3396 = vmatpush1.bf16.msra.mxu0 0
        %3397 = vmatprep.subr.bf16.mxu0 0
        %3398 = vmatpush1.bf16.msra.mxu0 0
        %3399 = vmatprep.subr.bf16.mxu0 0
        %3400 = vmatpush1.bf16.msra.mxu0 0
        %3401 = vmatprep.subr.bf16.mxu0 0
        %3402 = vmatpush1.bf16.msra.mxu0 0
        %3403 = vmatprep.subr.bf16.mxu0 0
        %3404 = vmatpush1.bf16.msra.mxu0 0
        %3405 = vmatprep.subr.bf16.mxu0 0
        %3406 = vmatpush1.bf16.msra.mxu0 0
        %3407 = vmatprep.subr.bf16.mxu0 0
        %3408 = vmatpush1.bf16.msra.mxu0 0
        %3409 = vmatprep.subr.bf16.mxu0 0
        %3410 = vmatpush1.bf16.msra.mxu0 0
        %3411 = vmatprep.subr.bf16.mxu0 0
        %3412 = vmatpush1.bf16.msra.mxu0 0
        %3413 = vmatprep.subr.bf16.mxu0 0
        %3414 = vmatpush1.bf16.msra.mxu0 0
        %3415 = vmatprep.subr.bf16.mxu0 0
        %3416 = vmatpush1.bf16.msra.mxu0 0
        %3417 = vmatprep.subr.bf16.mxu0 0
        %3418 = vmatpush1.bf16.msra.mxu0 0
        %3419 = vmatprep.mubr.bf16.mxu0 0
        %3420 = vmatmul.mubr.bf16.gmra.mrb[0].mxu0 %v3364
        %v3421 = vpop.f32.mrb[0].mxu0
        %v3422 = vadd.f32 %v3249, %v3421
        %v3423 = vpop.f32.mrb[0].mxu0
        %v3424 = vpop.f32.mrb[0].mxu0
        %v3425 = vadd.f32 %v3252, %v3424
        %v3426 = vpop.f32.mrb[0].mxu0
        %3427 = vmatprep.mubr.bf16.mxu0 0
        %3428 = vmatmul.mubr.bf16.gmra.mrb[0].mxu0 %v3367
        %v3429 = vpop.f32.mrb[0].mxu0
        %v3430 = vadd.f32 %v3257, %v3429
        %v3431 = vpop.f32.mrb[0].mxu0
        %v3432 = vpop.f32.mrb[0].mxu0
        %v3433 = vadd.f32 %v3260, %v3432
        %v3434 = vpop.f32.mrb[0].mxu0
        %3435 = vmatprep.mubr.bf16.mxu0 0
        %3436 = vmatmul.mubr.bf16.gmra.mrb[0].mxu0 %v3370
        %v3437 = vpop.f32.mrb[0].mxu0
        %v3438 = vadd.f32 %v3265, %v3437
        %v3439 = vpop.f32.mrb[0].mxu0
        %v3440 = vpop.f32.mrb[0].mxu0
        %v3441 = vadd.f32 %v3268, %v3440
        %v3442 = vpop.f32.mrb[0].mxu0
        %3443 = vmatprep.mubr.bf16.mxu0 0
        %3444 = vmatmul.mubr.bf16.gmra.mrb[0].mxu0 %v3373
        %v3445 = vpop.f32.mrb[0].mxu0
        %v3446 = vadd.f32 %v3273, %v3445
        %v3447 = vpop.f32.mrb[0].mxu0
        %v3448 = vpop.f32.mrb[0].mxu0
        %v3449 = vadd.f32 %v3276, %v3448
        %v3450 = vpop.f32.mrb[0].mxu0
        %3451 = vmatprep.mubr.bf16.mxu0 0
        %3452 = vmatmul.mubr.bf16.gmra.mrb[0].mxu0 %v3376
        %v3453 = vpop.f32.mrb[0].mxu0
        %v3454 = vadd.f32 %v3281, %v3453
        %v3455 = vpop.f32.mrb[0].mxu0
        %v3456 = vpop.f32.mrb[0].mxu0
        %v3457 = vadd.f32 %v3284, %v3456
        %v3458 = vpop.f32.mrb[0].mxu0
        %3459 = vmatprep.mubr.bf16.mxu0 0
        %3460 = vmatmul.mubr.bf16.gmra.mrb[0].mxu0 %v3379
        %v3461 = vpop.f32.mrb[0].mxu0
        %v3462 = vadd.f32 %v3289, %v3461
        %v3463 = vpop.f32.mrb[0].mxu0
        %v3464 = vpop.f32.mrb[0].mxu0
        %v3465 = vadd.f32 %v3292, %v3464
        %v3466 = vpop.f32.mrb[0].mxu0
        %3467 = vmatprep.mubr.bf16.mxu0 0
        %3468 = vmatmul.mubr.bf16.gmra.mrb[0].mxu0 %v3382
        %v3469 = vpop.f32.mrb[0].mxu0
        %v3470 = vadd.f32 %v3297, %v3469
        %v3471 = vpop.f32.mrb[0].mxu0
        %v3472 = vpop.f32.mrb[0].mxu0
        %v3473 = vadd.f32 %v3300, %v3472
        %v3474 = vpop.f32.mrb[0].mxu0
        %3475 = vmatprep.mubr.bf16.mxu0 0
        %3476 = vmatmul.mubr.bf16.gmra.mrb[0].mxu0 %v3385
        %v3477 = vpop.f32.mrb[0].mxu0
        %v3478 = vadd.f32 %v3305, %v3477
        %v3479 = vpop.f32.mrb[0].mxu0
        %v3480 = vpop.f32.mrb[0].mxu0
        %v3481 = vadd.f32 %v3308, %v3480
        %v3482 = vpop.f32.mrb[0].mxu0
        %3483 = vdwg.mxu0
        %v3484 = vld [vmem:[#allocation4] sm:$0xe]
        %v3485 = vld [vmem:[#allocation4 + $0xc] sm:$0xe]
        %v3486 = vld [vmem:[#allocation4 + $0x18] sm:$0xe]
        %v3487 = vld [vmem:[#allocation4 + $0x24] sm:$0xe]
        %v3488 = vld [vmem:[#allocation4 + $0x30] sm:$0xe]
        %v3489 = vld [vmem:[#allocation4 + $0x3c] sm:$0xe]
        %v3490 = vld [vmem:[#allocation4 + $0x48] sm:$0xe]
        %v3491 = vld [vmem:[#allocation4 + $0x54] sm:$0xe]
        %v3508 = vrot.slane %v3484, 5
        %v3509 = vrot.slane %v3508, 4
        %v3510 = vrot.slane %v2930, 5
        %v3511 = vsel %vm1283, %v3509, %v3510
        %v3512 = vrot.slane %v3510, 4
        %v3513 = vrot.slane %v2949, 5
        %v3514 = vsel %vm1283, %v3512, %v3513
        %v3515 = vrot.slane %v3485, 5
        %v3516 = vrot.slane %v3515, 4
        %v3517 = vrot.slane %v2932, 5
        %v3518 = vsel %vm1283, %v3516, %v3517
        %v3519 = vrot.slane %v3517, 4
        %v3520 = vrot.slane %v2950, 5
        %v3521 = vsel %vm1283, %v3519, %v3520
        %v3522 = vrot.slane %v3486, 5
        %v3523 = vrot.slane %v3522, 4
        %v3524 = vrot.slane %v2934, 5
        %v3525 = vsel %vm1283, %v3523, %v3524
        %v3526 = vrot.slane %v3524, 4
        %v3527 = vrot.slane %v2951, 5
        %v3528 = vsel %vm1283, %v3526, %v3527
        %v3529 = vrot.slane %v3487, 5
        %v3530 = vrot.slane %v3529, 4
        %v3531 = vrot.slane %v2936, 5
        %v3532 = vsel %vm1283, %v3530, %v3531
        %v3533 = vrot.slane %v3531, 4
        %v3534 = vrot.slane %v2952, 5
        %v3535 = vsel %vm1283, %v3533, %v3534
        %v3536 = vrot.slane %v3488, 5
        %v3537 = vrot.slane %v3536, 4
        %v3538 = vrot.slane %v2938, 5
        %v3539 = vsel %vm1283, %v3537, %v3538
        %v3540 = vrot.slane %v3538, 4
        %v3541 = vrot.slane %v2953, 5
        %v3542 = vsel %vm1283, %v3540, %v3541
        %v3543 = vrot.slane %v3489, 5
        %v3544 = vrot.slane %v3543, 4
        %v3545 = vrot.slane %v2940, 5
        %v3546 = vsel %vm1283, %v3544, %v3545
        %v3547 = vrot.slane %v3545, 4
        %v3548 = vrot.slane %v2954, 5
        %v3549 = vsel %vm1283, %v3547, %v3548
        %v3550 = vrot.slane %v3490, 5
        %v3551 = vrot.slane %v3550, 4
        %v3552 = vrot.slane %v2942, 5
        %v3553 = vsel %vm1283, %v3551, %v3552
        %v3554 = vrot.slane %v3552, 4
        %v3555 = vrot.slane %v2955, 5
        %v3556 = vsel %vm1283, %v3554, %v3555
        %v3557 = vrot.slane %v3491, 5
        %v3558 = vrot.slane %v3557, 4
        %v3559 = vrot.slane %v2944, 5
        %v3560 = vsel %vm1283, %v3558, %v3559
        %v3561 = vrot.slane %v3559, 4
        %v3562 = vrot.slane %v2956, 5
        %v3563 = vsel %vm1283, %v3561, %v3562
        %s3564 = scalar_lea.vmem %s3, 32
        %v3565 = vld [vmem:[%s3564] sm:$0xf]
        %v3566 = vld [vmem:[%s3564 + $0x4] sm:$0xf]
        %v3567 = vld [vmem:[%s3564 + $0x8] sm:$0xf]
        %v3568 = vld [vmem:[%s3564 + $0xc] sm:$0xf]
        %v3569 = vunpack.c.l.b16 %v3511
        %v3570 = vunpack.c.l.b16 %v3514
        %v3571 = vunpack.c.l.b16 %v3518
        %v3572 = vunpack.c.l.b16 %v3521
        %v3573 = vunpack.c.l.b16 %v3525
        %v3574 = vunpack.c.l.b16 %v3528
        %v3575 = vunpack.c.l.b16 %v3532
        %v3576 = vunpack.c.l.b16 %v3535
        %v3577 = vunpack.c.l.b16 %v3539
        %v3578 = vunpack.c.l.b16 %v3542
        %v3579 = vunpack.c.l.b16 %v3546
        %v3580 = vunpack.c.l.b16 %v3549
        %v3581 = vunpack.c.l.b16 %v3553
        %v3582 = vunpack.c.l.b16 %v3556
        %v3583 = vunpack.c.l.b16 %v3560
        %v3584 = vunpack.c.l.b16 %v3563
        %v3585 = vpack.c.b16 %v3570, %v3569
        %v3586 = vpack.c.b16 %v3572, %v3571
        %v3587 = vpack.c.b16 %v3574, %v3573
        %v3588 = vpack.c.b16 %v3576, %v3575
        %v3589 = vpack.c.b16 %v3578, %v3577
        %v3590 = vpack.c.b16 %v3580, %v3579
        %v3591 = vpack.c.b16 %v3582, %v3581
        %v3592 = vpack.c.b16 %v3584, %v3583
        %v3597 = vunpack.c.l.b16 %v3565
        %v3598 = vunpack.c.l.b16 %v3566
        %v3599 = vunpack.c.l.b16 %v3567
        %v3600 = vunpack.c.l.b16 %v3568
        %v3601 = vpack.c.b16 %v3598, %v3597
        %v3602 = vpack.c.b16 %v3600, %v3599
        %v3606 = vsel %vm2073, %v3585, 0
        %v3609 = vsel %vm2073, %v3586, 0
        %v3612 = vsel %vm2073, %v3587, 0
        %v3615 = vsel %vm2073, %v3588, 0
        %v3618 = vsel %vm2073, %v3589, 0
        %v3621 = vsel %vm2073, %v3590, 0
        %v3624 = vsel %vm2073, %v3591, 0
        %v3627 = vsel %vm2073, %v3592, 0
        %3629 = vmatprep.subr.bf16.mxu0 0
        %3630 = vmatpush1.bf16.msra.mxu0 %v3601
        %3631 = vmatprep.subr.bf16.mxu0 0
        %3632 = vmatpush1.bf16.msra.mxu0 %v3602
        %3633 = vmatprep.subr.bf16.mxu0 0
        %3634 = vmatpush1.bf16.msra.mxu0 0
        %3635 = vmatprep.subr.bf16.mxu0 0
        %3636 = vmatpush1.bf16.msra.mxu0 0
        %3637 = vmatprep.subr.bf16.mxu0 0
        %3638 = vmatpush1.bf16.msra.mxu0 0
        %3639 = vmatprep.subr.bf16.mxu0 0
        %3640 = vmatpush1.bf16.msra.mxu0 0
        %3641 = vmatprep.subr.bf16.mxu0 0
        %3642 = vmatpush1.bf16.msra.mxu0 0
        %3643 = vmatprep.subr.bf16.mxu0 0
        %3644 = vmatpush1.bf16.msra.mxu0 0
        %3645 = vmatprep.subr.bf16.mxu0 0
        %3646 = vmatpush1.bf16.msra.mxu0 0
        %3647 = vmatprep.subr.bf16.mxu0 0
        %3648 = vmatpush1.bf16.msra.mxu0 0
        %3649 = vmatprep.subr.bf16.mxu0 0
        %3650 = vmatpush1.bf16.msra.mxu0 0
        %3651 = vmatprep.subr.bf16.mxu0 0
        %3652 = vmatpush1.bf16.msra.mxu0 0
        %3653 = vmatprep.subr.bf16.mxu0 0
        %3654 = vmatpush1.bf16.msra.mxu0 0
        %3655 = vmatprep.subr.bf16.mxu0 0
        %3656 = vmatpush1.bf16.msra.mxu0 0
        %3657 = vmatprep.subr.bf16.mxu0 0
        %3658 = vmatpush1.bf16.msra.mxu0 0
        %3659 = vmatprep.subr.bf16.mxu0 0
        %3660 = vmatpush1.bf16.msra.mxu0 0
        %3661 = vmatprep.mubr.bf16.mxu0 0
        %3662 = vmatmul.mubr.bf16.gmra.mrb[0].mxu0 %v3606
        %v3663 = vpop.f32.mrb[0].mxu0
        %v3664 = vadd.f32 0.0, %v3663
        %v3665 = vpop.f32.mrb[0].mxu0
        %v3666 = vpop.f32.mrb[0].mxu0
        %v3667 = vadd.f32 0.0, %v3666
        %v3668 = vpop.f32.mrb[0].mxu0
        %3669 = vmatprep.mubr.bf16.mxu0 0
        %3670 = vmatmul.mubr.bf16.gmra.mrb[0].mxu0 %v3609
        %v3671 = vpop.f32.mrb[0].mxu0
        %v3672 = vadd.f32 0.0, %v3671
        %v3673 = vpop.f32.mrb[0].mxu0
        %v3674 = vpop.f32.mrb[0].mxu0
        %v3675 = vadd.f32 0.0, %v3674
        %v3676 = vpop.f32.mrb[0].mxu0
        %3677 = vmatprep.mubr.bf16.mxu0 0
        %3678 = vmatmul.mubr.bf16.gmra.mrb[0].mxu0 %v3612
        %v3679 = vpop.f32.mrb[0].mxu0
        %v3680 = vadd.f32 0.0, %v3679
        %v3681 = vpop.f32.mrb[0].mxu0
        %v3682 = vpop.f32.mrb[0].mxu0
        %v3683 = vadd.f32 0.0, %v3682
        %v3684 = vpop.f32.mrb[0].mxu0
        %3685 = vmatprep.mubr.bf16.mxu0 0
        %3686 = vmatmul.mubr.bf16.gmra.mrb[0].mxu0 %v3615
        %v3687 = vpop.f32.mrb[0].mxu0
        %v3688 = vadd.f32 0.0, %v3687
        %v3689 = vpop.f32.mrb[0].mxu0
        %v3690 = vpop.f32.mrb[0].mxu0
        %v3691 = vadd.f32 0.0, %v3690
        %v3692 = vpop.f32.mrb[0].mxu0
        %3693 = vmatprep.mubr.bf16.mxu0 0
        %3694 = vmatmul.mubr.bf16.gmra.mrb[0].mxu0 %v3618
        %v3695 = vpop.f32.mrb[0].mxu0
        %v3696 = vadd.f32 0.0, %v3695
        %v3697 = vpop.f32.mrb[0].mxu0
        %v3698 = vpop.f32.mrb[0].mxu0
        %v3699 = vadd.f32 0.0, %v3698
        %v3700 = vpop.f32.mrb[0].mxu0
        %3701 = vmatprep.mubr.bf16.mxu0 0
        %3702 = vmatmul.mubr.bf16.gmra.mrb[0].mxu0 %v3621
        %v3703 = vpop.f32.mrb[0].mxu0
        %v3704 = vadd.f32 0.0, %v3703
        %v3705 = vpop.f32.mrb[0].mxu0
        %v3706 = vpop.f32.mrb[0].mxu0
        %v3707 = vadd.f32 0.0, %v3706
        %v3708 = vpop.f32.mrb[0].mxu0
        %3709 = vmatprep.mubr.bf16.mxu0 0
        %3710 = vmatmul.mubr.bf16.gmra.mrb[0].mxu0 %v3624
        %v3711 = vpop.f32.mrb[0].mxu0
        %v3712 = vadd.f32 0.0, %v3711
        %v3713 = vpop.f32.mrb[0].mxu0
        %v3714 = vpop.f32.mrb[0].mxu0
        %v3715 = vadd.f32 0.0, %v3714
        %v3716 = vpop.f32.mrb[0].mxu0
        %3717 = vmatprep.mubr.bf16.mxu0 0
        %3718 = vmatmul.mubr.bf16.gmra.mrb[0].mxu0 %v3627
        %v3719 = vpop.f32.mrb[0].mxu0
        %v3720 = vadd.f32 0.0, %v3719
        %v3721 = vpop.f32.mrb[0].mxu0
        %v3722 = vpop.f32.mrb[0].mxu0
        %v3723 = vadd.f32 0.0, %v3722
        %v3724 = vpop.f32.mrb[0].mxu0
        %3725 = vdwg.mxu0
        %v3726 = vadd.f32 %v3422, %v3664
        %v3727 = vadd.f32 %v3425, %v3667
        %v3728 = vadd.f32 %v3430, %v3672
        %v3729 = vadd.f32 %v3433, %v3675
        %v3730 = vadd.f32 %v3438, %v3680
        %v3731 = vadd.f32 %v3441, %v3683
        %v3732 = vadd.f32 %v3446, %v3688
        %v3733 = vadd.f32 %v3449, %v3691
        %v3734 = vadd.f32 %v3454, %v3696
        %v3735 = vadd.f32 %v3457, %v3699
        %v3736 = vadd.f32 %v3462, %v3704
        %v3737 = vadd.f32 %v3465, %v3707
        %v3738 = vadd.f32 %v3470, %v3712
        %v3739 = vadd.f32 %v3473, %v3715
        %v3740 = vadd.f32 %v3478, %v3720
        %v3741 = vadd.f32 %v3481, %v3723
        %v3743 = vlaneseq
        %v3744 = vshrl.u32 %v3743, 7
        %v3745 = vsub.s32 0, %v3744
        %v3746 = vrot.slane %v2928, %v3745
        %v3748 = vadd.f32 %v3726, %v3746
        %v3749 = vadd.f32 %v3727, %v3746
        %v3750 = vadd.f32 %v3728, %v3746
        %v3751 = vadd.f32 %v3729, %v3746
        %v3752 = vadd.f32 %v3730, %v3746
        %v3753 = vadd.f32 %v3731, %v3746
        %v3754 = vadd.f32 %v3732, %v3746
        %v3755 = vadd.f32 %v3733, %v3746
        %v3756 = vadd.f32 %v3734, %v3746
        %v3757 = vadd.f32 %v3735, %v3746
        %v3758 = vadd.f32 %v3736, %v3746
        %v3759 = vadd.f32 %v3737, %v3746
        %v3760 = vadd.f32 %v3738, %v3746
        %v3761 = vadd.f32 %v3739, %v3746
        %v3762 = vadd.f32 %v3740, %v3746
        %v3763 = vadd.f32 %v3741, %v3746
        %v3764 = vmax.f32 %v3748, 0.0
        %v3765 = vmax.f32 %v3749, 0.0
        %v3766 = vmax.f32 %v3750, 0.0
        %v3767 = vmax.f32 %v3751, 0.0
        %v3768 = vmax.f32 %v3752, 0.0
        %v3769 = vmax.f32 %v3753, 0.0
        %v3770 = vmax.f32 %v3754, 0.0
        %v3771 = vmax.f32 %v3755, 0.0
        %v3772 = vmax.f32 %v3756, 0.0
        %v3773 = vmax.f32 %v3757, 0.0
        %v3774 = vmax.f32 %v3758, 0.0
        %v3775 = vmax.f32 %v3759, 0.0
        %v3776 = vmax.f32 %v3760, 0.0
        %v3777 = vmax.f32 %v3761, 0.0
        %v3778 = vmax.f32 %v3762, 0.0
        %v3779 = vmax.f32 %v3763, 0.0
        %v3780 = vmax.f32 %v3764, %v3765
        %v3781 = vrot.slane %v3780, 4
        %v3782 = vmax.f32 %v3780, %v3781
        %v3783 = vrot.slane %v3782, 2
        %v3784 = vmax.f32 %v3782, %v3783
        %v3785 = vrot.slane %v3784, 1
        %v3786 = vmax.f32 %v3784, %v3785
        %v3787 = vmax.f32 %v3766, %v3767
        %v3788 = vrot.slane %v3787, 4
        %v3789 = vmax.f32 %v3787, %v3788
        %v3790 = vrot.slane %v3789, 2
        %v3791 = vmax.f32 %v3789, %v3790
        %v3792 = vrot.slane %v3791, 1
        %v3793 = vmax.f32 %v3791, %v3792
        %v3794 = vmax.f32 %v3768, %v3769
        %v3795 = vrot.slane %v3794, 4
        %v3796 = vmax.f32 %v3794, %v3795
        %v3797 = vrot.slane %v3796, 2
        %v3798 = vmax.f32 %v3796, %v3797
        %v3799 = vrot.slane %v3798, 1
        %v3800 = vmax.f32 %v3798, %v3799
        %v3801 = vmax.f32 %v3770, %v3771
        %v3802 = vrot.slane %v3801, 4
        %v3803 = vmax.f32 %v3801, %v3802
        %v3804 = vrot.slane %v3803, 2
        %v3805 = vmax.f32 %v3803, %v3804
        %v3806 = vrot.slane %v3805, 1
        %v3807 = vmax.f32 %v3805, %v3806
        %v3808 = vmax.f32 %v3772, %v3773
        %v3809 = vrot.slane %v3808, 4
        %v3810 = vmax.f32 %v3808, %v3809
        %v3811 = vrot.slane %v3810, 2
        %v3812 = vmax.f32 %v3810, %v3811
        %v3813 = vrot.slane %v3812, 1
        %v3814 = vmax.f32 %v3812, %v3813
        %v3815 = vmax.f32 %v3774, %v3775
        %v3816 = vrot.slane %v3815, 4
        %v3817 = vmax.f32 %v3815, %v3816
        %v3818 = vrot.slane %v3817, 2
        %v3819 = vmax.f32 %v3817, %v3818
        %v3820 = vrot.slane %v3819, 1
        %v3821 = vmax.f32 %v3819, %v3820
        %v3822 = vmax.f32 %v3776, %v3777
        %v3823 = vrot.slane %v3822, 4
        %v3824 = vmax.f32 %v3822, %v3823
        %v3825 = vrot.slane %v3824, 2
        %v3826 = vmax.f32 %v3824, %v3825
        %v3827 = vrot.slane %v3826, 1
        %v3828 = vmax.f32 %v3826, %v3827
        %v3829 = vmax.f32 %v3778, %v3779
        %v3830 = vrot.slane %v3829, 4
        %v3831 = vmax.f32 %v3829, %v3830
        %v3832 = vrot.slane %v3831, 2
        %v3833 = vmax.f32 %v3831, %v3832
        %v3834 = vrot.slane %v3833, 1
        %v3835 = vmax.f32 %v3833, %v3834
        %vm3844 = vcmask 1041409
        %v3845 = vsel %vm3844, %v3793, %v3786
        %vm3846 = vcmask 1042434
        %v3847 = vsel %vm3846, %v3800, %v3845
        %vm3848 = vcmask 1043459
        %v3849 = vsel %vm3848, %v3807, %v3847
        %vm3850 = vcmask 1044484
        %v3851 = vsel %vm3850, %v3814, %v3849
        %vm3852 = vcmask 1045509
        %v3853 = vsel %vm3852, %v3821, %v3851
        %vm3854 = vcmask 1046534
        %v3855 = vsel %vm3854, %v3828, %v3853
        %vm3856 = vcmask 1047559
        %v3857 = vsel %vm3856, %v3835, %v3855
        %3859 = vst [vmem:[%s274] sm:$0xff] %v3857
        %s3860 = sand.u32 %s181, 1
        %s3861 = scalar_lea.sflag [#allocation6], %s3860
        %s3862 = sand.u32 %s181, 1
        %s3863 = smul.addr %s3862, 8
        %s3864 = scalar_lea.vmem [#allocation5], %s3863
        // Predicated region
        $region49: #{tpu_custom_call.1} parent=47 // pred_check
          %p3865 = pneg %p191
        $region50: #{tpu_custom_call.1} parent=47 // pred_check_branch
          %3867 = sbr.rel (%p3865) target = $region52
        $region51: #{tpu_custom_call.1} parent=47 // pred_region
          %s3869 = ssub.s32 128, 128
          %3870 = vsyncadd %s3861, %s3869
          %s3871 = smul.addr %s21, 128
          %s3872 = scalar_lea.hbm %s7, %s3871
          %s3874 = sshll.u32 %s3864, 4
          %s3875 = int_to_ptr.vmem [resolvable:$true] %s3874
          %3877 = dma.vmem_to_hbm [thread:$0]  %s3875, 128, %s3872, %s3861
        $region52: #{tpu_custom_call.1} parent=47 // pred_fallthru
          _
      $region48: #{tpu_custom_call.1} parent=5 // pred_fallthru
        _
      %p3878 = scmp.le.s32.totalorder 2, %s16
      // Predicated region
      $region53: #{tpu_custom_call.1} parent=5 // pred_check
        %p3879 = pneg %p3878
      $region54: #{tpu_custom_call.1} parent=5 // pred_check_branch
        %3881 = sbr.rel (%p3879) target = $region56
      $region55: #{tpu_custom_call.1} parent=5 // pred_region
        %s3882 = ssub.s32 %s16, 2
        // Predicated region
        $region57: #{tpu_custom_call.1} parent=55 // pred_check
          %p3883 = pneg %p197
        $region58: #{tpu_custom_call.1} parent=55 // pred_check_branch
          %3885 = sbr.rel (%p3883) target = $region60
        $region59: #{tpu_custom_call.1} parent=55 // pred_region
          %s3886 = sand.u32 %s182, 1
          %s3887 = scalar_lea.sflag [#allocation6], %s3886
          %s3888 = sand.u32 %s182, 1
          %s3889 = smul.addr %s3888, 8
          %s3890 = scalar_lea.vmem [#allocation5], %s3889
          %3891 = dma.done %s3887, 128
        $region60: #{tpu_custom_call.1} parent=55 // pred_fallthru
          _
      $region56: #{tpu_custom_call.1} parent=5 // pred_fallthru
        _
    $region6: #{tpu_custom_call.1} parent=1 // loop_footer
      %s20 = sadd.s32 1, %s16
    $region7: #{tpu_custom_call.1} parent=1 // loop_footer_branch
      %15 = sbr.rel target = $region3
    $region8: #{tpu_custom_call.1} parent=1 // loop_exit
      _
    %3892 = vsyncpa [#allocation6], 1
    %s3893 = scalar_lea.sflag [#allocation6], 1
    %3894 = vsyncpa %s3893, 1

</llo_original>
